<compile_context>
chip_gen: v6e
topology: v6e:2x2x1
jax: 0.10.0
libtpu: 0.0.40
codegen_flags: <defaults>
</compile_context>

<pallas_src>
import functools

import jax
import jax.numpy as jnp
from jax import lax
from jax.experimental import pallas as pl
from jax.experimental.pallas import tpu as pltpu


def _stage_col_kx(col_ref, act, rows, W, C):
    """col[i, w, kx*C + c] = act[i, w + kx - 1, c]  (zero where w+kx-1 is outside [0, W)).

    One lane-aligned copy (kx=1) plus two sublane-shifted copies with a thin
    zero-column fix (kx=0, kx=2). The ky taps are NOT staged -- `_conv3x3`
    reads them back as row-shifted windows of this strip.
    """
    zcol = jnp.zeros((rows, 1, C), col_ref.dtype)
    # kx = 1 (centre tap): aligned full-width copy.
    col_ref[0:rows, :, C:2 * C] = act
    # kx = 0 (w-1): shift right by one column, zero column 0.
    col_ref[0:rows, 1:W, 0:C] = act[:, 0:W - 1, :]
    col_ref[0:rows, 0:1, 0:C] = zcol
    # kx = 2 (w+1): shift left by one column, zero column W-1.
    col_ref[0:rows, 0:W - 1, 2 * C:3 * C] = act[:, 1:W, :]
    col_ref[0:rows, W - 1:W, 2 * C:3 * C] = zcol


def _conv3x3(col_ref, w_ref, rows_out, W, C):
    """3x3 conv as three accumulated MXU matmuls (K = 3*C); ky via row windows.

    col_ref rows [ky, ky + rows_out) hold the kx-staged input rows for tap ky;
    the weight slab w_ref[ky] is indexed (kx*C + ci, co). f32 accumulation.
    """
    q = jnp.zeros((rows_out * W, C), jnp.float32)
    for ky in range(3):
        a = col_ref[ky:ky + rows_out].reshape(rows_out * W, 3 * C)
        q = q + jnp.dot(a, w_ref[ky], preferred_element_type=jnp.float32)
    return q


def basic_block_kernel(x_ref, w1_ref, w2_ref, s1_ref, b1_ref, s2_ref, b2_ref,
                       o_ref, act1_ref, act2_ref, col_ref):
    """Fused BasicBlock for one `strip_h`-row strip of one batch element (NHWC).

    x_ref:    (1, H, W, C)   full input image, resident across the strip axis
                             (also provides the residual)                       f32
    w*_ref:   (3, 3*C, C)    conv weights, [ky, kx*C + ci, co]                  bf16
    s*_ref:   (1, C)         folded BN scale  gamma / sqrt(var + eps)           f32
    b*_ref:   (1, C)         folded BN bias   beta - mean * scale               f32
    o_ref:    (1, SH, W, C)  output strip                                       f32
    act1_ref: (SH+4, W, C)   bf16 conv1 input strip incl. 2-row halo
    act2_ref: (SH+2, W, C)   bf16 conv2 input strip (y1) incl. 1-row halo
    col_ref:  (SH+4, W, 3*C) bf16 kx-staged im2col strip (shared by both convs)
    """
    _, SH, W, C = o_ref.shape
    H = x_ref.shape[1]
    s = pl.program_id(1)
    n_strips = pl.num_programs(1)
    r0 = pl.multiple_of(s * SH, SH)          # first output row of this strip

    # ---- stage conv1 input rows [r0-2, r0+SH+2) with zero padding at the image edge ----
    act1_ref[2:SH + 2] = x_ref[0, pl.ds(r0, SH)].astype(jnp.bfloat16)

    @pl.when(s > 0)
    def _():
        act1_ref[0:2] = x_ref[0, pl.ds(r0 - 2, 2)].astype(jnp.bfloat16)

    @pl.when(s == 0)
    def _():
        act1_ref[0:2] = jnp.zeros((2, W, C), jnp.bfloat16)

    @pl.when(s < n_strips - 1)
    def _():
        act1_ref[SH + 2:SH + 4] = x_ref[0, pl.ds(r0 + SH, 2)].astype(jnp.bfloat16)

    @pl.when(s == n_strips - 1)
    def _():
        act1_ref[SH + 2:SH + 4] = jnp.zeros((2, W, C), jnp.bfloat16)

    # ---- conv1 (3x3, pad=1, stride=1, no bias) + bn1 + relu -> act2 (SH+2 rows) ----
    rows1 = SH + 2
    _stage_col_kx(col_ref, act1_ref[...], SH + 4, W, C)
    q1 = _conv3x3(col_ref, w1_ref, rows1, W, C)                 # (rows1*W, C) f32
    y1 = jnp.maximum(q1 * s1_ref[...] + b1_ref[...], 0.0)       # folded BN + ReLU (f32)
    act2_ref[...] = y1.reshape(rows1, W, C).astype(jnp.bfloat16)

    # conv2's zero-padding rows at the image top / bottom. Overwrite explicitly:
    # conv1 evaluated over x's padding rows is nonzero after BN bias + ReLU.
    @pl.when(s == 0)
    def _():
        act2_ref[0:1] = jnp.zeros((1, W, C), jnp.bfloat16)

    @pl.when(s == n_strips - 1)
    def _():
        act2_ref[rows1 - 1:rows1] = jnp.zeros((1, W, C), jnp.bfloat16)

    # ---- conv2 (3x3, pad=1, stride=1, no bias) + bn2 + residual + relu ----
    _stage_col_kx(col_ref, act2_ref[...], rows1, W, C)
    q2 = _conv3x3(col_ref, w2_ref, SH, W, C)                    # (SH*W, C) f32
    res = x_ref[0, pl.ds(r0, SH)].reshape(SH * W, C)            # residual, f32
    out = jnp.maximum(q2 * s2_ref[...] + b2_ref[...] + res, 0.0)
    o_ref[0] = out.reshape(SH, W, C).astype(o_ref.dtype)


@functools.partial(jax.jit, static_argnames=("strip_h",))
def basic_block_forward(x_nchw, w1, w2, s1, b1, s2, b2, *, strip_h=8):
    """x_nchw: (B, C, H, W); w1, w2: (C, C, 3, 3); s*, b*: (C,) folded BN scale/bias."""
    B, Cin, H, W = x_nchw.shape
    C = w1.shape[0]
    assert Cin == C, "no-downsample BasicBlock requires inplanes == planes"
    assert W % 16 == 0, "W must be a multiple of 16 (bf16 (16,128) sublane tile)"
    assert C % 64 == 0, "channels ride the 128-lane axis"
    assert strip_h >= 2 and H % strip_h == 0, "H must be a multiple of strip_h (>= 2)"
    n_strips = H // strip_h
    # strip_h tuning: pick the largest strip whose x block + out strip + col/act
    # scratch fit VMEM with headroom -- larger on v6e (128 MiB) than v7x (64 MiB);
    # keep B * n_strips >= 2 grid steps per TensorCore for DMA/compute overlap.

    x = jnp.transpose(x_nchw, (0, 2, 3, 1))                    # NHWC

    # PyTorch conv weight (Cout, Cin, ky, kx) -> (ky, kx*Cin + ci, Cout); bf16 MXU
    # operands (f32 accumulation in-kernel). Keep bf16 on v7x -- its MXU has no int8.
    w1_t = jnp.transpose(w1, (2, 3, 1, 0)).reshape(3, 3 * C, C).astype(jnp.bfloat16)
    w2_t = jnp.transpose(w2, (2, 3, 1, 0)).reshape(3, 3 * C, C).astype(jnp.bfloat16)
    s1r = s1.reshape(1, C).astype(jnp.float32)
    b1r = b1.reshape(1, C).astype(jnp.float32)
    s2r = s2.reshape(1, C).astype(jnp.float32)
    b2r = b2.reshape(1, C).astype(jnp.float32)

    out_nhwc = pl.pallas_call(
        basic_block_kernel,
        out_shape=jax.ShapeDtypeStruct((B, H, W, C), x.dtype),
        grid_spec=pltpu.PrefetchScalarGridSpec(
            num_scalar_prefetch=0,
            grid=(B, n_strips),
            in_specs=[
                # Full image, resident across the strip axis: one HBM fetch per
                # batch element; the residual is read from the same block.
                pl.BlockSpec((1, H, W, C), lambda b, s: (b, 0, 0, 0)),
                pl.BlockSpec((3, 3 * C, C), lambda b, s: (0, 0, 0)),   # w1
                pl.BlockSpec((3, 3 * C, C), lambda b, s: (0, 0, 0)),   # w2
                pl.BlockSpec((1, C), lambda b, s: (0, 0)),             # bn1 scale
                pl.BlockSpec((1, C), lambda b, s: (0, 0)),             # bn1 bias
                pl.BlockSpec((1, C), lambda b, s: (0, 0)),             # bn2 scale
                pl.BlockSpec((1, C), lambda b, s: (0, 0)),             # bn2 bias
            ],
            out_specs=pl.BlockSpec((1, strip_h, W, C), lambda b, s: (b, s, 0, 0)),
            scratch_shapes=[
                pltpu.VMEM((strip_h + 4, W, C), jnp.bfloat16),        # act1 (+2-row halo)
                pltpu.VMEM((strip_h + 2, W, C), jnp.bfloat16),        # act2 / y1 (+1-row halo)
                pltpu.VMEM((strip_h + 4, W, 3 * C), jnp.bfloat16),    # kx-staged col strip
            ],
        ),
        compiler_params=pltpu.CompilerParams(
            dimension_semantics=("parallel", "parallel"),   # B and strips shard on v7x
            vmem_limit_bytes=32 * 1024 * 1024,
        ),
    )(x, w1_t, w2_t, s1r, b1r, s2r, b2r)

    return jnp.transpose(out_nhwc, (0, 3, 1, 2))               # back to NCHW


# ---------- pure-JAX references ----------
def _conv_ref(x, w):
    return lax.conv_general_dilated(
        x, w, window_strides=(1, 1), padding=((1, 1), (1, 1)),
        dimension_numbers=('NCHW', 'OIHW', 'NCHW'),
        precision=lax.Precision.HIGHEST)


def _bn(x, gamma, beta, mean, var, eps=1e-5):
    inv = gamma / jnp.sqrt(var + eps)
    return x * inv[None, :, None, None] + (beta - mean * inv)[None, :, None, None]


def basic_block_ref(x, w1, w2, g1, be1, m1, v1, g2, be2, m2, v2, eps=1e-5):
    """Full-f32 reference (matches the PyTorch module in eval mode)."""
    y = jnp.maximum(_bn(_conv_ref(x, w1), g1, be1, m1, v1, eps), 0.0)
    y = _bn(_conv_ref(y, w2), g2, be2, m2, v2, eps)
    return jnp.maximum(y + x, 0.0)


def basic_block_ref_bf16(x, w1, w2, s1, b1, s2, b2):
    """Precision-matched reference: bf16 conv operands, f32 accumulation/BN/residual."""
    def conv(x_, w_):
        return _conv_ref(x_.astype(jnp.bfloat16).astype(jnp.float32),
                         w_.astype(jnp.bfloat16).astype(jnp.float32))
    sc = lambda v: v[None, :, None, None]
    y = jnp.maximum(conv(x, w1) * sc(s1) + sc(b1), 0.0)
    y = conv(y, w2) * sc(s2) + sc(b2)
    return jnp.maximum(y + x, 0.0)


if __name__ == "__main__":
    B, C, H, W = 2, 128, 16, 16      # inplanes = planes = 128, stride = 1
    eps = 1e-5

    key = jax.random.PRNGKey(0)
    ks = jax.random.split(key, 12)

    x = jax.random.normal(ks[0], (B, C, H, W), jnp.float32)

    # Deterministic synthetic parameters (shapes match nn.Conv2d / nn.BatchNorm2d).
    w1 = jax.random.normal(ks[1], (C, C, 3, 3), jnp.float32) * 0.05
    w2 = jax.random.normal(ks[2], (C, C, 3, 3), jnp.float32) * 0.05
    g1 = jax.random.uniform(ks[3], (C,), jnp.float32, 0.8, 1.2)
    be1 = jax.random.normal(ks[4], (C,), jnp.float32) * 0.1
    m1 = jax.random.normal(ks[5], (C,), jnp.float32) * 0.1
    v1 = jax.random.uniform(ks[6], (C,), jnp.float32, 0.5, 1.5)
    g2 = jax.random.uniform(ks[7], (C,), jnp.float32, 0.8, 1.2)
    be2 = jax.random.normal(ks[8], (C,), jnp.float32) * 0.1
    m2 = jax.random.normal(ks[9], (C,), jnp.float32) * 0.1
    v2 = jax.random.uniform(ks[10], (C,), jnp.float32, 0.5, 1.5)

    # Fold eval-mode BatchNorm into per-channel scale / bias.
    s1 = g1 / jnp.sqrt(v1 + eps)
    b1 = be1 - m1 * s1
    s2 = g2 / jnp.sqrt(v2 + eps)
    b2 = be2 - m2 * s2

    out = basic_block_forward(x, w1, w2, s1, b1, s2, b2, strip_h=8)
    out = jax.block_until_ready(out)
    assert out.shape == (B, C, H, W)

    # Tight check against a precision-matched (bf16-operand / f32-accum) reference.
    ref_bf16 = basic_block_ref_bf16(x, w1, w2, s1, b1, s2, b2)
    err_bf16 = jnp.max(jnp.abs(out - ref_bf16))
    assert jnp.allclose(out, ref_bf16, atol=1e-2, rtol=1e-2), \
        f"bf16-matched max abs err {err_bf16}"

    # Sanity check against the full-f32 reference (tolerance covers bf16 operand rounding).
    ref = basic_block_ref(x, w1, w2, g1, be1, m1, v1, g2, be2, m2, v2, eps)
    err = jnp.max(jnp.abs(out - ref))
    assert jnp.allclose(out, ref, atol=1.5e-1, rtol=5e-2), f"f32 max abs err {err}"

    print("KERNEL_OK")
</pallas_src>

<mosaic_0001>
module attributes {stable_mosaic.version = 11 : i64} {
  func.func @basic_block_kernel(%arg0: i32, %arg1: i32, %arg2: memref<1x16x16x128xf32, #tpu.memory_space<vmem>>, %arg3: memref<3x384x128xbf16, #tpu.memory_space<vmem>>, %arg4: memref<3x384x128xbf16, #tpu.memory_space<vmem>>, %arg5: memref<1x128xf32, #tpu.memory_space<vmem>>, %arg6: memref<1x128xf32, #tpu.memory_space<vmem>>, %arg7: memref<1x128xf32, #tpu.memory_space<vmem>>, %arg8: memref<1x128xf32, #tpu.memory_space<vmem>>, %arg9: memref<1x8x16x128xf32, #tpu.memory_space<vmem>>, %arg10: memref<12x16x128xbf16, #tpu.memory_space<vmem>>, %arg11: memref<10x16x128xbf16, #tpu.memory_space<vmem>>, %arg12: memref<12x16x384xbf16, #tpu.memory_space<vmem>>) attributes {dimension_semantics = [#tpu.dimension_semantics<parallel>, #tpu.dimension_semantics<parallel>], iteration_bounds = array<i64: 2, 2>, scalar_prefetch = 0 : i64, scratch_operands = 3 : i64, tpu.core_type = #tpu.core_type<tc>, window_params = [{transform_indices = @transform_0, window_bounds = array<i64: 1, 16, 16, 128>}, {pipeline_mode = #tpu.pipeline_mode<synchronous>, transform_indices = @transform_1, window_bounds = array<i64: 3, 384, 128>}, {pipeline_mode = #tpu.pipeline_mode<synchronous>, transform_indices = @transform_2, window_bounds = array<i64: 3, 384, 128>}, {pipeline_mode = #tpu.pipeline_mode<synchronous>, transform_indices = @transform_3, window_bounds = array<i64: 1, 128>}, {pipeline_mode = #tpu.pipeline_mode<synchronous>, transform_indices = @transform_4, window_bounds = array<i64: 1, 128>}, {pipeline_mode = #tpu.pipeline_mode<synchronous>, transform_indices = @transform_5, window_bounds = array<i64: 1, 128>}, {pipeline_mode = #tpu.pipeline_mode<synchronous>, transform_indices = @transform_6, window_bounds = array<i64: 1, 128>}, {transform_indices = @transform_7, window_bounds = array<i64: 1, 8, 16, 128>}]} {
    %c8_i32 = arith.constant 8 : i32
    %0 = arith.muli %arg1, %c8_i32 : i32
    %1 = tpu.assume_multiple %0, 8 : i32
    %c0 = arith.constant 0 : index
    %2 = arith.index_cast %1 : i32 to index
    %c0_0 = arith.constant 0 : index
    %c0_1 = arith.constant 0 : index
    %3 = vector.load %arg2[%c0, %2, %c0_0, %c0_1] : memref<1x16x16x128xf32, #tpu.memory_space<vmem>>, vector<1x8x16x128xf32>
    %4 = vector.shape_cast %3 : vector<1x8x16x128xf32> to vector<8x16x128xf32>
    %5 = arith.truncf %4 : vector<8x16x128xf32> to vector<8x16x128xbf16>
    %c2 = arith.constant 2 : index
    %c0_2 = arith.constant 0 : index
    %c0_3 = arith.constant 0 : index
    %6 = vector.load %arg10[%c2, %c0_2, %c0_3] : memref<12x16x128xbf16, #tpu.memory_space<vmem>>, vector<8x16x128xbf16>
    tpu.vector_store %arg10[%c2, %c0_2, %c0_3], %5 {strides = array<i32>} : memref<12x16x128xbf16, #tpu.memory_space<vmem>>, vector<8x16x128xbf16>,
    %c0_i32 = arith.constant 0 : i32
    %7 = arith.cmpi sgt, %arg1, %c0_i32 : i32
    %8 = arith.extui %7 : i1 to i32
    %c0_i32_4 = arith.constant 0 : i32
    %9 = arith.cmpi ne, %8, %c0_i32_4 : i32
    scf.if %9 {
      %c2_i32 = arith.constant 2 : i32
      %109 = arith.subi %1, %c2_i32 : i32
      %c0_111 = arith.constant 0 : index
      %110 = arith.index_cast %109 : i32 to index
      %c0_112 = arith.constant 0 : index
      %c0_113 = arith.constant 0 : index
      %111 = vector.load %arg2[%c0_111, %110, %c0_112, %c0_113] : memref<1x16x16x128xf32, #tpu.memory_space<vmem>>, vector<1x2x16x128xf32>
      %112 = vector.shape_cast %111 : vector<1x2x16x128xf32> to vector<2x16x128xf32>
      %113 = arith.truncf %112 : vector<2x16x128xf32> to vector<2x16x128xbf16>
      %c0_114 = arith.constant 0 : index
      %c0_115 = arith.constant 0 : index
      %c0_116 = arith.constant 0 : index
      %114 = vector.load %arg10[%c0_114, %c0_115, %c0_116] : memref<12x16x128xbf16, #tpu.memory_space<vmem>>, vector<2x16x128xbf16>
      tpu.vector_store %arg10[%c0_114, %c0_115, %c0_116], %113 {strides = array<i32>} : memref<12x16x128xbf16, #tpu.memory_space<vmem>>, vector<2x16x128xbf16>,
    } else {
    }
    %c0_i32_5 = arith.constant 0 : i32
    %10 = arith.cmpi eq, %arg1, %c0_i32_5 : i32
    %11 = arith.extui %10 : i1 to i32
    %c0_i32_6 = arith.constant 0 : i32
    %12 = arith.cmpi ne, %11, %c0_i32_6 : i32
    scf.if %12 {
      %cst_111 = arith.constant 0.000000e+00 : bf16
      %109 = vector.broadcast %cst_111 : bf16 to vector<2x16x128xbf16>
      %c0_112 = arith.constant 0 : index
      %c0_113 = arith.constant 0 : index
      %c0_114 = arith.constant 0 : index
      %110 = vector.load %arg10[%c0_112, %c0_113, %c0_114] : memref<12x16x128xbf16, #tpu.memory_space<vmem>>, vector<2x16x128xbf16>
      tpu.vector_store %arg10[%c0_112, %c0_113, %c0_114], %109 {strides = array<i32>} : memref<12x16x128xbf16, #tpu.memory_space<vmem>>, vector<2x16x128xbf16>,
    } else {
    }
    %c1_i32 = arith.constant 1 : i32
    %13 = arith.cmpi slt, %arg1, %c1_i32 : i32
    %14 = arith.extui %13 : i1 to i32
    %c0_i32_7 = arith.constant 0 : i32
    %15 = arith.cmpi ne, %14, %c0_i32_7 : i32
    scf.if %15 {
      %c8_i32_111 = arith.constant 8 : i32
      %109 = arith.addi %1, %c8_i32_111 : i32
      %c0_112 = arith.constant 0 : index
      %110 = arith.index_cast %109 : i32 to index
      %c0_113 = arith.constant 0 : index
      %c0_114 = arith.constant 0 : index
      %111 = vector.load %arg2[%c0_112, %110, %c0_113, %c0_114] : memref<1x16x16x128xf32, #tpu.memory_space<vmem>>, vector<1x2x16x128xf32>
      %112 = vector.shape_cast %111 : vector<1x2x16x128xf32> to vector<2x16x128xf32>
      %113 = arith.truncf %112 : vector<2x16x128xf32> to vector<2x16x128xbf16>
      %c10 = arith.constant 10 : index
      %c0_115 = arith.constant 0 : index
      %c0_116 = arith.constant 0 : index
      %114 = vector.load %arg10[%c10, %c0_115, %c0_116] : memref<12x16x128xbf16, #tpu.memory_space<vmem>>, vector<2x16x128xbf16>
      tpu.vector_store %arg10[%c10, %c0_115, %c0_116], %113 {strides = array<i32>} : memref<12x16x128xbf16, #tpu.memory_space<vmem>>, vector<2x16x128xbf16>,
    } else {
    }
    %c1_i32_8 = arith.constant 1 : i32
    %16 = arith.cmpi eq, %arg1, %c1_i32_8 : i32
    %17 = arith.extui %16 : i1 to i32
    %c0_i32_9 = arith.constant 0 : i32
    %18 = arith.cmpi ne, %17, %c0_i32_9 : i32
    scf.if %18 {
      %cst_111 = arith.constant 0.000000e+00 : bf16
      %109 = vector.broadcast %cst_111 : bf16 to vector<2x16x128xbf16>
      %c10 = arith.constant 10 : index
      %c0_112 = arith.constant 0 : index
      %c0_113 = arith.constant 0 : index
      %110 = vector.load %arg10[%c10, %c0_112, %c0_113] : memref<12x16x128xbf16, #tpu.memory_space<vmem>>, vector<2x16x128xbf16>
      tpu.vector_store %arg10[%c10, %c0_112, %c0_113], %109 {strides = array<i32>} : memref<12x16x128xbf16, #tpu.memory_space<vmem>>, vector<2x16x128xbf16>,
    } else {
    }
    %c0_10 = arith.constant 0 : index
    %c0_11 = arith.constant 0 : index
    %c0_12 = arith.constant 0 : index
    %19 = vector.load %arg10[%c0_10, %c0_11, %c0_12] : memref<12x16x128xbf16, #tpu.memory_space<vmem>>, vector<12x16x128xbf16>
    %cst = arith.constant 0.000000e+00 : bf16
    %20 = vector.broadcast %cst : bf16 to vector<12x1x128xbf16>
    %c0_13 = arith.constant 0 : index
    %c0_14 = arith.constant 0 : index
    %c128 = arith.constant 128 : index
    %21 = vector.load %arg12[%c0_13, %c0_14, %c128] : memref<12x16x384xbf16, #tpu.memory_space<vmem>>, vector<12x16x128xbf16>
    tpu.vector_store %arg12[%c0_13, %c0_14, %c128], %19 {strides = array<i32>} : memref<12x16x384xbf16, #tpu.memory_space<vmem>>, vector<12x16x128xbf16>,
    %22 = vector.extract_strided_slice %19 {offsets = [0, 0, 0], sizes = [12, 15, 128], strides = [1, 1, 1]} : vector<12x16x128xbf16> to vector<12x15x128xbf16>
    %c0_15 = arith.constant 0 : index
    %c1 = arith.constant 1 : index
    %c0_16 = arith.constant 0 : index
    %23 = vector.load %arg12[%c0_15, %c1, %c0_16] : memref<12x16x384xbf16, #tpu.memory_space<vmem>>, vector<12x15x128xbf16>
    tpu.vector_store %arg12[%c0_15, %c1, %c0_16], %22 {strides = array<i32>} : memref<12x16x384xbf16, #tpu.memory_space<vmem>>, vector<12x15x128xbf16>,
    %c0_17 = arith.constant 0 : index
    %c0_18 = arith.constant 0 : index
    %c0_19 = arith.constant 0 : index
    %24 = vector.load %arg12[%c0_17, %c0_18, %c0_19] : memref<12x16x384xbf16, #tpu.memory_space<vmem>>, vector<12x1x128xbf16>
    tpu.vector_store %arg12[%c0_17, %c0_18, %c0_19], %20 {strides = array<i32>} : memref<12x16x384xbf16, #tpu.memory_space<vmem>>, vector<12x1x128xbf16>,
    %25 = vector.extract_strided_slice %19 {offsets = [0, 1, 0], sizes = [12, 15, 128], strides = [1, 1, 1]} : vector<12x16x128xbf16> to vector<12x15x128xbf16>
    %c0_20 = arith.constant 0 : index
    %c0_21 = arith.constant 0 : index
    %c256 = arith.constant 256 : index
    %26 = vector.load %arg12[%c0_20, %c0_21, %c256] : memref<12x16x384xbf16, #tpu.memory_space<vmem>>, vector<12x15x128xbf16>
    tpu.vector_store %arg12[%c0_20, %c0_21, %c256], %25 {strides = array<i32>} : memref<12x16x384xbf16, #tpu.memory_space<vmem>>, vector<12x15x128xbf16>,
    %c0_22 = arith.constant 0 : index
    %c15 = arith.constant 15 : index
    %c256_23 = arith.constant 256 : index
    %27 = vector.load %arg12[%c0_22, %c15, %c256_23] : memref<12x16x384xbf16, #tpu.memory_space<vmem>>, vector<12x1x128xbf16>
    tpu.vector_store %arg12[%c0_22, %c15, %c256_23], %20 {strides = array<i32>} : memref<12x16x384xbf16, #tpu.memory_space<vmem>>, vector<12x1x128xbf16>,
    %cst_24 = arith.constant 0.000000e+00 : f32
    %28 = vector.broadcast %cst_24 : f32 to vector<160x128xf32>
    %c0_25 = arith.constant 0 : index
    %c0_26 = arith.constant 0 : index
    %c0_27 = arith.constant 0 : index
    %29 = vector.load %arg12[%c0_25, %c0_26, %c0_27] : memref<12x16x384xbf16, #tpu.memory_space<vmem>>, vector<10x16x384xbf16>
    %30 = vector.shape_cast %29 : vector<10x16x384xbf16> to vector<160x384xbf16>
    %c0_28 = arith.constant 0 : index
    %c0_29 = arith.constant 0 : index
    %c0_30 = arith.constant 0 : index
    %31 = vector.load %arg3[%c0_28, %c0_29, %c0_30] : memref<3x384x128xbf16, #tpu.memory_space<vmem>>, vector<1x384x128xbf16>
    %32 = vector.shape_cast %31 : vector<1x384x128xbf16> to vector<384x128xbf16>
    %cst_31 = arith.constant dense<0.000000e+00> : vector<160x128xf32>
    %33 = tpu.matmul %30, %32, %cst_31 {dimension_numbers = #tpu.dot_dimension_numbers<[1], [0], [0], [1], [0, 0, 1, 1], [], []>} : vector<160x384xbf16>, vector<384x128xbf16>, vector<160x128xf32> -> vector<160x128xf32>
    %34 = arith.addf %28, %33 : vector<160x128xf32>
    %c1_32 = arith.constant 1 : index
    %c0_33 = arith.constant 0 : index
    %c0_34 = arith.constant 0 : index
    %35 = vector.load %arg12[%c1_32, %c0_33, %c0_34] : memref<12x16x384xbf16, #tpu.memory_space<vmem>>, vector<10x16x384xbf16>
    %36 = vector.shape_cast %35 : vector<10x16x384xbf16> to vector<160x384xbf16>
    %c1_35 = arith.constant 1 : index
    %c0_36 = arith.constant 0 : index
    %c0_37 = arith.constant 0 : index
    %37 = vector.load %arg3[%c1_35, %c0_36, %c0_37] : memref<3x384x128xbf16, #tpu.memory_space<vmem>>, vector<1x384x128xbf16>
    %38 = vector.shape_cast %37 : vector<1x384x128xbf16> to vector<384x128xbf16>
    %cst_38 = arith.constant dense<0.000000e+00> : vector<160x128xf32>
    %39 = tpu.matmul %36, %38, %cst_38 {dimension_numbers = #tpu.dot_dimension_numbers<[1], [0], [0], [1], [0, 0, 1, 1], [], []>} : vector<160x384xbf16>, vector<384x128xbf16>, vector<160x128xf32> -> vector<160x128xf32>
    %40 = arith.addf %34, %39 : vector<160x128xf32>
    %c2_39 = arith.constant 2 : index
    %c0_40 = arith.constant 0 : index
    %c0_41 = arith.constant 0 : index
    %41 = vector.load %arg12[%c2_39, %c0_40, %c0_41] : memref<12x16x384xbf16, #tpu.memory_space<vmem>>, vector<10x16x384xbf16>
    %42 = vector.shape_cast %41 : vector<10x16x384xbf16> to vector<160x384xbf16>
    %c2_42 = arith.constant 2 : index
    %c0_43 = arith.constant 0 : index
    %c0_44 = arith.constant 0 : index
    %43 = vector.load %arg3[%c2_42, %c0_43, %c0_44] : memref<3x384x128xbf16, #tpu.memory_space<vmem>>, vector<1x384x128xbf16>
    %44 = vector.shape_cast %43 : vector<1x384x128xbf16> to vector<384x128xbf16>
    %cst_45 = arith.constant dense<0.000000e+00> : vector<160x128xf32>
    %45 = tpu.matmul %42, %44, %cst_45 {dimension_numbers = #tpu.dot_dimension_numbers<[1], [0], [0], [1], [0, 0, 1, 1], [], []>} : vector<160x384xbf16>, vector<384x128xbf16>, vector<160x128xf32> -> vector<160x128xf32>
    %46 = arith.addf %40, %45 : vector<160x128xf32>
    %c0_46 = arith.constant 0 : index
    %c0_47 = arith.constant 0 : index
    %47 = vector.load %arg5[%c0_46, %c0_47] : memref<1x128xf32, #tpu.memory_space<vmem>>, vector<1x128xf32>
    %48 = vector.broadcast %47 : vector<1x128xf32> to vector<160x128xf32>
    %49 = arith.mulf %46, %48 : vector<160x128xf32>
    %c0_48 = arith.constant 0 : index
    %c0_49 = arith.constant 0 : index
    %50 = vector.load %arg6[%c0_48, %c0_49] : memref<1x128xf32, #tpu.memory_space<vmem>>, vector<1x128xf32>
    %51 = vector.broadcast %50 : vector<1x128xf32> to vector<160x128xf32>
    %52 = arith.addf %49, %51 : vector<160x128xf32>
    %cst_50 = arith.constant 0.000000e+00 : f32
    %53 = vector.broadcast %cst_50 : f32 to vector<160x128xf32>
    %54 = arith.maximumf %52, %53 : vector<160x128xf32>
    %55 = vector.shape_cast %54 : vector<160x128xf32> to vector<10x16x128xf32>
    %56 = arith.truncf %55 : vector<10x16x128xf32> to vector<10x16x128xbf16>
    %c0_51 = arith.constant 0 : index
    %c0_52 = arith.constant 0 : index
    %c0_53 = arith.constant 0 : index
    %57 = vector.load %arg11[%c0_51, %c0_52, %c0_53] : memref<10x16x128xbf16, #tpu.memory_space<vmem>>, vector<10x16x128xbf16>
    tpu.vector_store %arg11[%c0_51, %c0_52, %c0_53], %56 {strides = array<i32>} : memref<10x16x128xbf16, #tpu.memory_space<vmem>>, vector<10x16x128xbf16>,
    %c0_i32_54 = arith.constant 0 : i32
    %58 = arith.cmpi eq, %arg1, %c0_i32_54 : i32
    %59 = arith.extui %58 : i1 to i32
    %c0_i32_55 = arith.constant 0 : i32
    %60 = arith.cmpi ne, %59, %c0_i32_55 : i32
    scf.if %60 {
      %cst_111 = arith.constant 0.000000e+00 : bf16
      %109 = vector.broadcast %cst_111 : bf16 to vector<1x16x128xbf16>
      %c0_112 = arith.constant 0 : index
      %c0_113 = arith.constant 0 : index
      %c0_114 = arith.constant 0 : index
      %110 = vector.load %arg11[%c0_112, %c0_113, %c0_114] : memref<10x16x128xbf16, #tpu.memory_space<vmem>>, vector<1x16x128xbf16>
      tpu.vector_store %arg11[%c0_112, %c0_113, %c0_114], %109 {strides = array<i32>} : memref<10x16x128xbf16, #tpu.memory_space<vmem>>, vector<1x16x128xbf16>,
    } else {
    }
    %c1_i32_56 = arith.constant 1 : i32
    %61 = arith.cmpi eq, %arg1, %c1_i32_56 : i32
    %62 = arith.extui %61 : i1 to i32
    %c0_i32_57 = arith.constant 0 : i32
    %63 = arith.cmpi ne, %62, %c0_i32_57 : i32
    scf.if %63 {
      %cst_111 = arith.constant 0.000000e+00 : bf16
      %109 = vector.broadcast %cst_111 : bf16 to vector<1x16x128xbf16>
      %c9 = arith.constant 9 : index
      %c0_112 = arith.constant 0 : index
      %c0_113 = arith.constant 0 : index
      %110 = vector.load %arg11[%c9, %c0_112, %c0_113] : memref<10x16x128xbf16, #tpu.memory_space<vmem>>, vector<1x16x128xbf16>
      tpu.vector_store %arg11[%c9, %c0_112, %c0_113], %109 {strides = array<i32>} : memref<10x16x128xbf16, #tpu.memory_space<vmem>>, vector<1x16x128xbf16>,
    } else {
    }
    %c0_58 = arith.constant 0 : index
    %c0_59 = arith.constant 0 : index
    %c0_60 = arith.constant 0 : index
    %64 = vector.load %arg11[%c0_58, %c0_59, %c0_60] : memref<10x16x128xbf16, #tpu.memory_space<vmem>>, vector<10x16x128xbf16>
    %cst_61 = arith.constant 0.000000e+00 : bf16
    %65 = vector.broadcast %cst_61 : bf16 to vector<10x1x128xbf16>
    %c0_62 = arith.constant 0 : index
    %c0_63 = arith.constant 0 : index
    %c128_64 = arith.constant 128 : index
    %66 = vector.load %arg12[%c0_62, %c0_63, %c128_64] : memref<12x16x384xbf16, #tpu.memory_space<vmem>>, vector<10x16x128xbf16>
    tpu.vector_store %arg12[%c0_62, %c0_63, %c128_64], %64 {strides = array<i32>} : memref<12x16x384xbf16, #tpu.memory_space<vmem>>, vector<10x16x128xbf16>,
    %67 = vector.extract_strided_slice %64 {offsets = [0, 0, 0], sizes = [10, 15, 128], strides = [1, 1, 1]} : vector<10x16x128xbf16> to vector<10x15x128xbf16>
    %c0_65 = arith.constant 0 : index
    %c1_66 = arith.constant 1 : index
    %c0_67 = arith.constant 0 : index
    %68 = vector.load %arg12[%c0_65, %c1_66, %c0_67] : memref<12x16x384xbf16, #tpu.memory_space<vmem>>, vector<10x15x128xbf16>
    tpu.vector_store %arg12[%c0_65, %c1_66, %c0_67], %67 {strides = array<i32>} : memref<12x16x384xbf16, #tpu.memory_space<vmem>>, vector<10x15x128xbf16>,
    %c0_68 = arith.constant 0 : index
    %c0_69 = arith.constant 0 : index
    %c0_70 = arith.constant 0 : index
    %69 = vector.load %arg12[%c0_68, %c0_69, %c0_70] : memref<12x16x384xbf16, #tpu.memory_space<vmem>>, vector<10x1x128xbf16>
    tpu.vector_store %arg12[%c0_68, %c0_69, %c0_70], %65 {strides = array<i32>} : memref<12x16x384xbf16, #tpu.memory_space<vmem>>, vector<10x1x128xbf16>,
    %70 = vector.extract_strided_slice %64 {offsets = [0, 1, 0], sizes = [10, 15, 128], strides = [1, 1, 1]} : vector<10x16x128xbf16> to vector<10x15x128xbf16>
    %c0_71 = arith.constant 0 : index
    %c0_72 = arith.constant 0 : index
    %c256_73 = arith.constant 256 : index
    %71 = vector.load %arg12[%c0_71, %c0_72, %c256_73] : memref<12x16x384xbf16, #tpu.memory_space<vmem>>, vector<10x15x128xbf16>
    tpu.vector_store %arg12[%c0_71, %c0_72, %c256_73], %70 {strides = array<i32>} : memref<12x16x384xbf16, #tpu.memory_space<vmem>>, vector<10x15x128xbf16>,
    %c0_74 = arith.constant 0 : index
    %c15_75 = arith.constant 15 : index
    %c256_76 = arith.constant 256 : index
    %72 = vector.load %arg12[%c0_74, %c15_75, %c256_76] : memref<12x16x384xbf16, #tpu.memory_space<vmem>>, vector<10x1x128xbf16>
    tpu.vector_store %arg12[%c0_74, %c15_75, %c256_76], %65 {strides = array<i32>} : memref<12x16x384xbf16, #tpu.memory_space<vmem>>, vector<10x1x128xbf16>,
    %cst_77 = arith.constant 0.000000e+00 : f32
    %73 = vector.broadcast %cst_77 : f32 to vector<128x128xf32>
    %c0_78 = arith.constant 0 : index
    %c0_79 = arith.constant 0 : index
    %c0_80 = arith.constant 0 : index
    %74 = vector.load %arg12[%c0_78, %c0_79, %c0_80] : memref<12x16x384xbf16, #tpu.memory_space<vmem>>, vector<8x16x384xbf16>
    %75 = vector.shape_cast %74 : vector<8x16x384xbf16> to vector<128x384xbf16>
    %c0_81 = arith.constant 0 : index
    %c0_82 = arith.constant 0 : index
    %c0_83 = arith.constant 0 : index
    %76 = vector.load %arg4[%c0_81, %c0_82, %c0_83] : memref<3x384x128xbf16, #tpu.memory_space<vmem>>, vector<1x384x128xbf16>
    %77 = vector.shape_cast %76 : vector<1x384x128xbf16> to vector<384x128xbf16>
    %cst_84 = arith.constant dense<0.000000e+00> : vector<128x128xf32>
    %78 = tpu.matmul %75, %77, %cst_84 {dimension_numbers = #tpu.dot_dimension_numbers<[1], [0], [0], [1], [0, 0, 1, 1], [], []>} : vector<128x384xbf16>, vector<384x128xbf16>, vector<128x128xf32> -> vector<128x128xf32>
    %79 = arith.addf %73, %78 : vector<128x128xf32>
    %c1_85 = arith.constant 1 : index
    %c0_86 = arith.constant 0 : index
    %c0_87 = arith.constant 0 : index
    %80 = vector.load %arg12[%c1_85, %c0_86, %c0_87] : memref<12x16x384xbf16, #tpu.memory_space<vmem>>, vector<8x16x384xbf16>
    %81 = vector.shape_cast %80 : vector<8x16x384xbf16> to vector<128x384xbf16>
    %c1_88 = arith.constant 1 : index
    %c0_89 = arith.constant 0 : index
    %c0_90 = arith.constant 0 : index
    %82 = vector.load %arg4[%c1_88, %c0_89, %c0_90] : memref<3x384x128xbf16, #tpu.memory_space<vmem>>, vector<1x384x128xbf16>
    %83 = vector.shape_cast %82 : vector<1x384x128xbf16> to vector<384x128xbf16>
    %cst_91 = arith.constant dense<0.000000e+00> : vector<128x128xf32>
    %84 = tpu.matmul %81, %83, %cst_91 {dimension_numbers = #tpu.dot_dimension_numbers<[1], [0], [0], [1], [0, 0, 1, 1], [], []>} : vector<128x384xbf16>, vector<384x128xbf16>, vector<128x128xf32> -> vector<128x128xf32>
    %85 = arith.addf %79, %84 : vector<128x128xf32>
    %c2_92 = arith.constant 2 : index
    %c0_93 = arith.constant 0 : index
    %c0_94 = arith.constant 0 : index
    %86 = vector.load %arg12[%c2_92, %c0_93, %c0_94] : memref<12x16x384xbf16, #tpu.memory_space<vmem>>, vector<8x16x384xbf16>
    %87 = vector.shape_cast %86 : vector<8x16x384xbf16> to vector<128x384xbf16>
    %c2_95 = arith.constant 2 : index
    %c0_96 = arith.constant 0 : index
    %c0_97 = arith.constant 0 : index
    %88 = vector.load %arg4[%c2_95, %c0_96, %c0_97] : memref<3x384x128xbf16, #tpu.memory_space<vmem>>, vector<1x384x128xbf16>
    %89 = vector.shape_cast %88 : vector<1x384x128xbf16> to vector<384x128xbf16>
    %cst_98 = arith.constant dense<0.000000e+00> : vector<128x128xf32>
    %90 = tpu.matmul %87, %89, %cst_98 {dimension_numbers = #tpu.dot_dimension_numbers<[1], [0], [0], [1], [0, 0, 1, 1], [], []>} : vector<128x384xbf16>, vector<384x128xbf16>, vector<128x128xf32> -> vector<128x128xf32>
    %91 = arith.addf %85, %90 : vector<128x128xf32>
    %c0_99 = arith.constant 0 : index
    %92 = arith.index_cast %1 : i32 to index
    %c0_100 = arith.constant 0 : index
    %c0_101 = arith.constant 0 : index
    %93 = vector.load %arg2[%c0_99, %92, %c0_100, %c0_101] : memref<1x16x16x128xf32, #tpu.memory_space<vmem>>, vector<1x8x16x128xf32>
    %94 = vector.shape_cast %93 : vector<1x8x16x128xf32> to vector<8x16x128xf32>
    %95 = vector.shape_cast %94 : vector<8x16x128xf32> to vector<128x128xf32>
    %c0_102 = arith.constant 0 : index
    %c0_103 = arith.constant 0 : index
    %96 = vector.load %arg7[%c0_102, %c0_103] : memref<1x128xf32, #tpu.memory_space<vmem>>, vector<1x128xf32>
    %97 = vector.broadcast %96 : vector<1x128xf32> to vector<128x128xf32>
    %98 = arith.mulf %91, %97 : vector<128x128xf32>
    %c0_104 = arith.constant 0 : index
    %c0_105 = arith.constant 0 : index
    %99 = vector.load %arg8[%c0_104, %c0_105] : memref<1x128xf32, #tpu.memory_space<vmem>>, vector<1x128xf32>
    %100 = vector.broadcast %99 : vector<1x128xf32> to vector<128x128xf32>
    %101 = arith.addf %98, %100 : vector<128x128xf32>
    %102 = arith.addf %101, %95 : vector<128x128xf32>
    %cst_106 = arith.constant 0.000000e+00 : f32
    %103 = vector.broadcast %cst_106 : f32 to vector<128x128xf32>
    %104 = arith.maximumf %102, %103 : vector<128x128xf32>
    %105 = vector.shape_cast %104 : vector<128x128xf32> to vector<8x16x128xf32>
    %c0_107 = arith.constant 0 : index
    %c0_108 = arith.constant 0 : index
    %c0_109 = arith.constant 0 : index
    %c0_110 = arith.constant 0 : index
    %106 = vector.load %arg9[%c0_107, %c0_108, %c0_109, %c0_110] : memref<1x8x16x128xf32, #tpu.memory_space<vmem>>, vector<1x8x16x128xf32>
    %107 = vector.shape_cast %106 : vector<1x8x16x128xf32> to vector<8x16x128xf32>
    %108 = vector.shape_cast %105 : vector<8x16x128xf32> to vector<1x8x16x128xf32>
    tpu.vector_store %arg9[%c0_107, %c0_108, %c0_109, %c0_110], %108 {strides = array<i32>} : memref<1x8x16x128xf32, #tpu.memory_space<vmem>>, vector<1x8x16x128xf32>,
    return
  }
  func.func @transform_0(%arg0: i32, %arg1: i32) -> (i32, i32, i32, i32) {
    %c0_i32 = arith.constant 0 : i32
    %c0_i32_0 = arith.constant 0 : i32
    %c0_i32_1 = arith.constant 0 : i32
    %c0_i32_2 = arith.constant 0 : i32
    return %arg0, %c0_i32, %c0_i32_0, %c0_i32_1 : i32, i32, i32, i32
  }
  func.func @transform_1(%arg0: i32, %arg1: i32) -> (i32, i32, i32) {
    %c0_i32 = arith.constant 0 : i32
    %c0_i32_0 = arith.constant 0 : i32
    %c0_i32_1 = arith.constant 0 : i32
    %c0_i32_2 = arith.constant 0 : i32
    return %c0_i32, %c0_i32_0, %c0_i32_1 : i32, i32, i32
  }
  func.func @transform_2(%arg0: i32, %arg1: i32) -> (i32, i32, i32) {
    %c0_i32 = arith.constant 0 : i32
    %c0_i32_0 = arith.constant 0 : i32
    %c0_i32_1 = arith.constant 0 : i32
    %c0_i32_2 = arith.constant 0 : i32
    return %c0_i32, %c0_i32_0, %c0_i32_1 : i32, i32, i32
  }
  func.func @transform_3(%arg0: i32, %arg1: i32) -> (i32, i32) {
    %c0_i32 = arith.constant 0 : i32
    %c0_i32_0 = arith.constant 0 : i32
    %c0_i32_1 = arith.constant 0 : i32
    return %c0_i32, %c0_i32_0 : i32, i32
  }
  func.func @transform_4(%arg0: i32, %arg1: i32) -> (i32, i32) {
    %c0_i32 = arith.constant 0 : i32
    %c0_i32_0 = arith.constant 0 : i32
    %c0_i32_1 = arith.constant 0 : i32
    return %c0_i32, %c0_i32_0 : i32, i32
  }
  func.func @transform_5(%arg0: i32, %arg1: i32) -> (i32, i32) {
    %c0_i32 = arith.constant 0 : i32
    %c0_i32_0 = arith.constant 0 : i32
    %c0_i32_1 = arith.constant 0 : i32
    return %c0_i32, %c0_i32_0 : i32, i32
  }
  func.func @transform_6(%arg0: i32, %arg1: i32) -> (i32, i32) {
    %c0_i32 = arith.constant 0 : i32
    %c0_i32_0 = arith.constant 0 : i32
    %c0_i32_1 = arith.constant 0 : i32
    return %c0_i32, %c0_i32_0 : i32, i32
  }
  func.func @transform_7(%arg0: i32, %arg1: i32) -> (i32, i32, i32, i32) {
    %c0_i32 = arith.constant 0 : i32
    %c0_i32_0 = arith.constant 0 : i32
    %c0_i32_1 = arith.constant 0 : i32
    return %arg0, %arg1, %c0_i32, %c0_i32_0 : i32, i32, i32, i32
  }
}

</mosaic_0001>

<llo_original>
// kernel: basic_block_forward.1
$region0: #{basic_block_forward.1}
  #allocation0 [shape = 'u32[]', space=smem, size = 0x4, offset = 0x4, fixed_abs, tag = 'smem constant byte address 0x4 - core index']
  #allocation1 [shape = 'u32[144,128]{1,0:T(1,128)}', space=vmem, size = 0x12000, scoped, tag = 'internal scratch']
  #allocation2 [shape = 'bf16[12,16,128]{2,1,0:T(8,128)(2,1)}', space=vmem, size = 0xc000, scoped, tag = 'scratch operand']
  #allocation3 [shape = 'bf16[10,16,128]{2,1,0:T(8,128)(2,1)}', space=vmem, size = 0xa000, scoped, tag = 'scratch operand']
  #allocation4 [shape = 'bf16[12,16,384]{2,1,0:T(8,128)(2,1)}', space=vmem, size = 0x24000, scoped, tag = 'scratch operand']
  %s0 = inlined_call_operand.vmem [shape: f32[2,16,16,128], index: 0, kind: input, shape index: {}]
  %s1 = inlined_call_operand.vmem [shape: bf16[3,384,128], index: 1, kind: input, shape index: {}]
  %s2 = inlined_call_operand.vmem [shape: bf16[3,384,128], index: 2, kind: input, shape index: {}]
  %s3 = inlined_call_operand.vmem [shape: f32[1,128], index: 3, kind: input, shape index: {}]
  %s4 = inlined_call_operand.vmem [shape: f32[1,128], index: 4, kind: input, shape index: {}]
  %s5 = inlined_call_operand.vmem [shape: f32[1,128], index: 5, kind: input, shape index: {}]
  %s6 = inlined_call_operand.vmem [shape: f32[1,128], index: 6, kind: input, shape index: {}]
  %s7 = inlined_call_operand.hbm [shape: f32[2,16,16,128], index: 7, kind: output, shape index: {}]
  %s8 = sld [smem:[#allocation0]]
  $region85: #{basic_block_forward.1} parent=0
    _
  %s10 = ssub.s32 1, %s8
  %s11 = scalar_select 0, %s10, %s8
  $region1: #{basic_block_forward.1} parent=0
    #allocation5 [shape = 'u8[131072]{0}', space=vmem, size = 0x20000, scoped, tag = 'output window, operand 0']
    #allocation6 [shape = 's32[2]{0}', space=sflag, size = 0x8, scoped, tag = 'scoped memory for basic_block_forward.1']
    %12 = vsyncpa [#allocation6], 0
    %s13 = scalar_lea.sflag [#allocation6], 1
    %14 = vsyncpa %s13, 0
    loop: start=0, step=1, limit=6
    $region2: #{basic_block_forward.1} parent=1 // loop_pre_header
      _
    $region3: #{basic_block_forward.1} parent=1 // loop_header
      %s16 = sphi 0, %s20
      %p17 = scmp.ge.s32.totalorder %s16, 6
      %s23 = sphi 0, %s35
      %s24 = sphi 0, %s31
      %s25 = sphi 0, %s23
      %s26 = sphi 0, %s24
      %s27 = sphi 0, %s25
      %s28 = sphi 0, %s26
      %s38 = sphi 0, %s40
      %s41 = sphi 0, %s38
      %s42 = sphi 0, %s41
      %s58 = sphi 0, %s42
      %s62 = sphi 0, %s62
      %s64 = sphi 0, %s62
      %s65 = sphi 0, %s64
      %s79 = sphi 0, %s65
      %s83 = sphi 0, %s83
      %s85 = sphi 0, %s83
      %s86 = sphi 0, %s85
      %s100 = sphi 0, %s86
      %s104 = sphi 0, %s104
      %s106 = sphi 0, %s104
      %s107 = sphi 0, %s106
      %s121 = sphi 0, %s107
      %s125 = sphi 0, %s125
      %s127 = sphi 0, %s125
      %s128 = sphi 0, %s127
      %s142 = sphi 0, %s128
      %s146 = sphi 0, %s146
      %s148 = sphi 0, %s146
      %s149 = sphi 0, %s148
      %s163 = sphi 0, %s149
      %s167 = sphi 0, %s167
      %s169 = sphi 0, %s167
      %s170 = sphi 0, %s169
      %s184 = sphi 0, %s170
      %s192 = sphi 0, %s194
      %s195 = sphi 0, %s192
      %s196 = sphi 0, %s195
      %s212 = sphi 0, %s196
    $region4: #{basic_block_forward.1} parent=1 // loop_header_branch
      %19 = sbr.rel (%p17) target = $region8
    $region5: #{basic_block_forward.1} parent=1 // loop_body
      %s21 = ssub.s32 %s16, 1
      %s22 = ssub.s32 %s16, 2
      %s29 = sadd.s32 1, %s24
      %p30 = scmp.ge.s32.totalorder %s29, 2
      %s31 = scalar_select %p30, 0, %s29
      %s32 = sadd.s32 1, %s23
      %s33 = scalar_select %p30, %s32, %s23
      %p34 = scmp.ge.s32.totalorder %s33, 2
      %s35 = scalar_select %p34, 0, %s33
      %s36 = ssub.s32 %s23, %s35
      %p37 = scmp.eq.s32.totalorder %s36, 0
      %s39 = sadd.s32 %s38, 1
      %s40 = scalar_select %p37, %s38, %s39
      %p43 = pneg %p37
      %p44 = scmp.eq.s32.totalorder %s16, 3
      %p45 = por %p43, %p44
      %p46 = scmp.ne.s32.totalorder %s38, %s41
      %p47 = scmp.eq.s32.totalorder %s16, 0
      %p48 = por %p46, %p47
      %p49 = scmp.ne.s32.totalorder %s38, %s41
      %p50 = scmp.eq.s32.totalorder %s21, 3
      %p51 = por %p49, %p50
      %p52 = scmp.ne.s32.totalorder %s41, %s42
      %p53 = scmp.eq.s32.totalorder %s21, 0
      %p54 = por %p52, %p53
      %p55 = scmp.ne.s32.totalorder %s41, %s42
      %p56 = scmp.eq.s32.totalorder %s22, 3
      %p57 = por %p55, %p56
      %p59 = scmp.ne.s32.totalorder %s42, %s58
      %p60 = scmp.eq.s32.totalorder %s22, 0
      %p61 = por %p59, %p60
      %s63 = sadd.s32 %s62, 1
      %p66 = scmp.eq.s32.totalorder %s16, 3
      %p67 = scmp.ne.s32.totalorder %s62, %s64
      %p68 = scmp.eq.s32.totalorder %s16, 0
      %p69 = por %p67, %p68
      %p70 = scmp.ne.s32.totalorder %s62, %s64
      %p71 = scmp.eq.s32.totalorder %s21, 3
      %p72 = por %p70, %p71
      %p73 = scmp.ne.s32.totalorder %s64, %s65
      %p74 = scmp.eq.s32.totalorder %s21, 0
      %p75 = por %p73, %p74
      %p76 = scmp.ne.s32.totalorder %s64, %s65
      %p77 = scmp.eq.s32.totalorder %s22, 3
      %p78 = por %p76, %p77
      %p80 = scmp.ne.s32.totalorder %s65, %s79
      %p81 = scmp.eq.s32.totalorder %s22, 0
      %p82 = por %p80, %p81
      %s84 = sadd.s32 %s83, 1
      %p87 = scmp.eq.s32.totalorder %s16, 3
      %p88 = scmp.ne.s32.totalorder %s83, %s85
      %p89 = scmp.eq.s32.totalorder %s16, 0
      %p90 = por %p88, %p89
      %p91 = scmp.ne.s32.totalorder %s83, %s85
      %p92 = scmp.eq.s32.totalorder %s21, 3
      %p93 = por %p91, %p92
      %p94 = scmp.ne.s32.totalorder %s85, %s86
      %p95 = scmp.eq.s32.totalorder %s21, 0
      %p96 = por %p94, %p95
      %p97 = scmp.ne.s32.totalorder %s85, %s86
      %p98 = scmp.eq.s32.totalorder %s22, 3
      %p99 = por %p97, %p98
      %p101 = scmp.ne.s32.totalorder %s86, %s100
      %p102 = scmp.eq.s32.totalorder %s22, 0
      %p103 = por %p101, %p102
      %s105 = sadd.s32 %s104, 1
      %p108 = scmp.eq.s32.totalorder %s16, 3
      %p109 = scmp.ne.s32.totalorder %s104, %s106
      %p110 = scmp.eq.s32.totalorder %s16, 0
      %p111 = por %p109, %p110
      %p112 = scmp.ne.s32.totalorder %s104, %s106
      %p113 = scmp.eq.s32.totalorder %s21, 3
      %p114 = por %p112, %p113
      %p115 = scmp.ne.s32.totalorder %s106, %s107
      %p116 = scmp.eq.s32.totalorder %s21, 0
      %p117 = por %p115, %p116
      %p118 = scmp.ne.s32.totalorder %s106, %s107
      %p119 = scmp.eq.s32.totalorder %s22, 3
      %p120 = por %p118, %p119
      %p122 = scmp.ne.s32.totalorder %s107, %s121
      %p123 = scmp.eq.s32.totalorder %s22, 0
      %p124 = por %p122, %p123
      %s126 = sadd.s32 %s125, 1
      %p129 = scmp.eq.s32.totalorder %s16, 3
      %p130 = scmp.ne.s32.totalorder %s125, %s127
      %p131 = scmp.eq.s32.totalorder %s16, 0
      %p132 = por %p130, %p131
      %p133 = scmp.ne.s32.totalorder %s125, %s127
      %p134 = scmp.eq.s32.totalorder %s21, 3
      %p135 = por %p133, %p134
      %p136 = scmp.ne.s32.totalorder %s127, %s128
      %p137 = scmp.eq.s32.totalorder %s21, 0
      %p138 = por %p136, %p137
      %p139 = scmp.ne.s32.totalorder %s127, %s128
      %p140 = scmp.eq.s32.totalorder %s22, 3
      %p141 = por %p139, %p140
      %p143 = scmp.ne.s32.totalorder %s128, %s142
      %p144 = scmp.eq.s32.totalorder %s22, 0
      %p145 = por %p143, %p144
      %s147 = sadd.s32 %s146, 1
      %p150 = scmp.eq.s32.totalorder %s16, 3
      %p151 = scmp.ne.s32.totalorder %s146, %s148
      %p152 = scmp.eq.s32.totalorder %s16, 0
      %p153 = por %p151, %p152
      %p154 = scmp.ne.s32.totalorder %s146, %s148
      %p155 = scmp.eq.s32.totalorder %s21, 3
      %p156 = por %p154, %p155
      %p157 = scmp.ne.s32.totalorder %s148, %s149
      %p158 = scmp.eq.s32.totalorder %s21, 0
      %p159 = por %p157, %p158
      %p160 = scmp.ne.s32.totalorder %s148, %s149
      %p161 = scmp.eq.s32.totalorder %s22, 3
      %p162 = por %p160, %p161
      %p164 = scmp.ne.s32.totalorder %s149, %s163
      %p165 = scmp.eq.s32.totalorder %s22, 0
      %p166 = por %p164, %p165
      %s168 = sadd.s32 %s167, 1
      %p171 = scmp.eq.s32.totalorder %s16, 3
      %p172 = scmp.ne.s32.totalorder %s167, %s169
      %p173 = scmp.eq.s32.totalorder %s16, 0
      %p174 = por %p172, %p173
      %p175 = scmp.ne.s32.totalorder %s167, %s169
      %p176 = scmp.eq.s32.totalorder %s21, 3
      %p177 = por %p175, %p176
      %p178 = scmp.ne.s32.totalorder %s169, %s170
      %p179 = scmp.eq.s32.totalorder %s21, 0
      %p180 = por %p178, %p179
      %p181 = scmp.ne.s32.totalorder %s169, %s170
      %p182 = scmp.eq.s32.totalorder %s22, 3
      %p183 = por %p181, %p182
      %p185 = scmp.ne.s32.totalorder %s170, %s184
      %p186 = scmp.eq.s32.totalorder %s22, 0
      %p187 = por %p185, %p186
      %s188 = ssub.s32 %s23, %s35
      %s189 = ssub.s32 %s24, %s31
      %s190 = sor.u32 %s188, %s189
      %p191 = scmp.eq.s32.totalorder %s190, 0
      %s193 = sadd.s32 %s192, 1
      %s194 = scalar_select %p191, %s192, %s193
      %p197 = pneg %p191
      %p198 = scmp.eq.s32.totalorder %s16, 3
      %p199 = por %p197, %p198
      %p200 = scmp.ne.s32.totalorder %s192, %s195
      %p201 = scmp.eq.s32.totalorder %s16, 0
      %p202 = por %p200, %p201
      %p203 = scmp.ne.s32.totalorder %s192, %s195
      %p204 = scmp.eq.s32.totalorder %s21, 3
      %p205 = por %p203, %p204
      %p206 = scmp.ne.s32.totalorder %s195, %s196
      %p207 = scmp.eq.s32.totalorder %s21, 0
      %p208 = por %p206, %p207
      %p209 = scmp.ne.s32.totalorder %s195, %s196
      %p210 = scmp.eq.s32.totalorder %s22, 3
      %p211 = por %p209, %p210
      %p213 = scmp.ne.s32.totalorder %s196, %s212
      %p214 = scmp.eq.s32.totalorder %s22, 0
      %p215 = por %p213, %p214
      %p216 = scmp.le.s32.totalorder 1, %s16
      %p217 = scmp.lt.s32.totalorder %s16, 5
      %p218 = pnand %p216, %p217
      %p219 = pneg %p218
      // Predicated region
      $region9: #{basic_block_forward.1} parent=5 // pred_check
        _
      $region10: #{basic_block_forward.1} parent=5 // pred_check_branch
        %221 = sbr.rel (%p218) target = $region12
      $region11: #{basic_block_forward.1} parent=5 // pred_region
        %s222 = ssub.s32 %s16, 1
        // Predicated region
        $region13: #{basic_block_forward.1} parent=11 // pred_check
          %p223 = pneg %p75
        $region14: #{basic_block_forward.1} parent=11 // pred_check_branch
          %225 = sbr.rel (%p223) target = $region16
        $region15: #{basic_block_forward.1} parent=11 // pred_region
          _
        $region16: #{basic_block_forward.1} parent=11 // pred_fallthru
          _
        // Predicated region
        $region17: #{basic_block_forward.1} parent=11 // pred_check
          %p226 = pneg %p96
        $region18: #{basic_block_forward.1} parent=11 // pred_check_branch
          %228 = sbr.rel (%p226) target = $region20
        $region19: #{basic_block_forward.1} parent=11 // pred_region
          _
        $region20: #{basic_block_forward.1} parent=11 // pred_fallthru
          _
        // Predicated region
        $region21: #{basic_block_forward.1} parent=11 // pred_check
          %p229 = pneg %p117
        $region22: #{basic_block_forward.1} parent=11 // pred_check_branch
          %231 = sbr.rel (%p229) target = $region24
        $region23: #{basic_block_forward.1} parent=11 // pred_region
          _
        $region24: #{basic_block_forward.1} parent=11 // pred_fallthru
          _
        // Predicated region
        $region25: #{basic_block_forward.1} parent=11 // pred_check
          %p232 = pneg %p138
        $region26: #{basic_block_forward.1} parent=11 // pred_check_branch
          %234 = sbr.rel (%p232) target = $region28
        $region27: #{basic_block_forward.1} parent=11 // pred_region
          _
        $region28: #{basic_block_forward.1} parent=11 // pred_fallthru
          _
        // Predicated region
        $region29: #{basic_block_forward.1} parent=11 // pred_check
          %p235 = pneg %p159
        $region30: #{basic_block_forward.1} parent=11 // pred_check_branch
          %237 = sbr.rel (%p235) target = $region32
        $region31: #{basic_block_forward.1} parent=11 // pred_region
          _
        $region32: #{basic_block_forward.1} parent=11 // pred_fallthru
          _
        // Predicated region
        $region33: #{basic_block_forward.1} parent=11 // pred_check
          %p238 = pneg %p180
        $region34: #{basic_block_forward.1} parent=11 // pred_check_branch
          %240 = sbr.rel (%p238) target = $region36
        $region35: #{basic_block_forward.1} parent=11 // pred_region
          _
        $region36: #{basic_block_forward.1} parent=11 // pred_fallthru
          _
      $region12: #{basic_block_forward.1} parent=5 // pred_fallthru
        _
      %p241 = scmp.lt.s32.totalorder %s16, 4
      // Predicated region
      $region37: #{basic_block_forward.1} parent=5 // pred_check
        %p242 = pneg %p241
      $region38: #{basic_block_forward.1} parent=5 // pred_check_branch
        %244 = sbr.rel (%p242) target = $region40
      $region39: #{basic_block_forward.1} parent=5 // pred_region
        // Predicated region
        $region41: #{basic_block_forward.1} parent=39 // pred_check
          %p245 = pneg %p48
        $region42: #{basic_block_forward.1} parent=39 // pred_check_branch
          %247 = sbr.rel (%p245) target = $region44
        $region43: #{basic_block_forward.1} parent=39 // pred_region
          %p248 = scmp.lt.s32.totalorder %s23, 1
          %s249 = scalar_select %p248, %s23, 1
          %s250 = smul.addr %s249, 32
          %s251 = smul.addr %s250, 8
          %s252 = scalar_lea.vmem %s0, %s251
        $region44: #{basic_block_forward.1} parent=39 // pred_fallthru
          _
      $region40: #{basic_block_forward.1} parent=5 // pred_fallthru
        _
      %p253 = scmp.le.s32.totalorder 1, %s16
      %p254 = scmp.lt.s32.totalorder %s16, 5
      %p255 = pnand %p253, %p254
      %p256 = pneg %p255
      // Predicated region
      $region45: #{basic_block_forward.1} parent=5 // pred_check
        _
      $region46: #{basic_block_forward.1} parent=5 // pred_check_branch
        %258 = sbr.rel (%p255) target = $region48
      $region47: #{basic_block_forward.1} parent=5 // pred_region
        %s259 = ssub.s32 %s16, 1
        %p260 = scmp.lt.s32.totalorder %s25, 1
        %s261 = scalar_select %p260, %s25, 1
        %s262 = smul.addr %s261, 32
        %s263 = smul.addr %s262, 8
        %s264 = scalar_lea.vmem %s0, %s263
        %p265 = pneg %p54
        %p266 = pneg %p51
        %p267 = pneg %p75
        %p268 = pneg %p72
        %p269 = pneg %p96
        %p270 = pneg %p93
        %p271 = pneg %p117
        %p272 = pneg %p114
        %p273 = pneg %p138
        %p274 = pneg %p135
        %p275 = pneg %p159
        %p276 = pneg %p156
        %p277 = pneg %p180
        %p278 = pneg %p177
        %p279 = pneg %p208
        %p280 = pneg %p205
        %s281 = sand.u32 %s195, 1
        %s282 = scalar_lea.sflag [#allocation6], %s281
        %s283 = sand.u32 %s195, 1
        %s284 = smul.addr %s283, 128
        %s285 = scalar_lea.vmem [#allocation5], %s284
        %p286 = scmp.lt.s32.totalorder %s25, 1
        %s287 = scalar_select %p286, %s25, 1
        %s288 = smul.addr %s287, 32
        %s289 = smul.addr %s288, 8
        %s290 = scalar_lea.vmem %s0, %s289
        %s291 = smul.u32 8, %s26
        %s293 = smul.u32 %s26, 8
        %s294 = smul.u32 %s293, 16
        %s295 = scalar_lea.vmem %s290, %s294
        %v296 = vld [vmem:[%s295] sm:$0xff]
        %v297 = vld [vmem:[%s295 + $0x8] sm:$0xff]
        %v298 = vld [vmem:[%s295 + $0x10] sm:$0xff]
        %v299 = vld [vmem:[%s295 + $0x18] sm:$0xff]
        %v300 = vld [vmem:[%s295 + $0x20] sm:$0xff]
        %v301 = vld [vmem:[%s295 + $0x28] sm:$0xff]
        %v302 = vld [vmem:[%s295 + $0x30] sm:$0xff]
        %v303 = vld [vmem:[%s295 + $0x38] sm:$0xff]
        %v304 = vld [vmem:[%s295 + $0x40] sm:$0xff]
        %v305 = vld [vmem:[%s295 + $0x48] sm:$0xff]
        %v306 = vld [vmem:[%s295 + $0x50] sm:$0xff]
        %v307 = vld [vmem:[%s295 + $0x58] sm:$0xff]
        %v308 = vld [vmem:[%s295 + $0x60] sm:$0xff]
        %v309 = vld [vmem:[%s295 + $0x68] sm:$0xff]
        %v310 = vld [vmem:[%s295 + $0x70] sm:$0xff]
        %v311 = vld [vmem:[%s295 + $0x78] sm:$0xff]
        %v312 = vpack.c.bf16 %v297, %v296
        %v313 = vpack.c.bf16 %v299, %v298
        %v314 = vpack.c.bf16 %v301, %v300
        %v315 = vpack.c.bf16 %v303, %v302
        %v316 = vpack.c.bf16 %v305, %v304
        %v317 = vpack.c.bf16 %v307, %v306
        %v318 = vpack.c.bf16 %v309, %v308
        %v319 = vpack.c.bf16 %v311, %v310
        %v328 = vunpack.c.l.b16 %v312
        %v329 = vunpack.c.h.b16 %v312
        %v330 = vunpack.c.l.b16 %v313
        %v331 = vunpack.c.h.b16 %v313
        %v332 = vunpack.c.l.b16 %v314
        %v333 = vunpack.c.h.b16 %v314
        %v334 = vunpack.c.l.b16 %v315
        %v335 = vunpack.c.h.b16 %v315
        %v336 = vunpack.c.l.b16 %v316
        %v337 = vunpack.c.h.b16 %v316
        %v338 = vunpack.c.l.b16 %v317
        %v339 = vunpack.c.h.b16 %v317
        %v340 = vunpack.c.l.b16 %v318
        %v341 = vunpack.c.h.b16 %v318
        %v342 = vunpack.c.l.b16 %v319
        %v343 = vunpack.c.h.b16 %v319
        %v344 = vpack.c.b16 %v328, %v328
        %v345 = vpack.c.b16 %v329, %v329
        %v346 = vpack.c.b16 %v330, %v330
        %v347 = vpack.c.b16 %v331, %v331
        %v348 = vpack.c.b16 %v332, %v332
        %v349 = vpack.c.b16 %v333, %v333
        %v350 = vpack.c.b16 %v334, %v334
        %v351 = vpack.c.b16 %v335, %v335
        %v352 = vpack.c.b16 %v336, %v336
        %v353 = vpack.c.b16 %v337, %v337
        %v354 = vpack.c.b16 %v338, %v338
        %v355 = vpack.c.b16 %v339, %v339
        %v356 = vpack.c.b16 %v340, %v340
        %v357 = vpack.c.b16 %v341, %v341
        %v358 = vpack.c.b16 %v342, %v342
        %v359 = vpack.c.b16 %v343, %v343
        %s376 = scalar_lea.vmem [#allocation2], 16
        %377 = vst [vmem:[%s376] sm:$0xf] %v344
        %378 = vst [vmem:[%s376 + $0x4] sm:$0xf] %v345
        %379 = vst [vmem:[%s376 + $0x8] sm:$0xf] %v346
        %380 = vst [vmem:[%s376 + $0xc] sm:$0xf] %v347
        %381 = vst [vmem:[%s376 + $0x10] sm:$0xf] %v348
        %382 = vst [vmem:[%s376 + $0x14] sm:$0xf] %v349
        %383 = vst [vmem:[%s376 + $0x18] sm:$0xf] %v350
        %384 = vst [vmem:[%s376 + $0x1c] sm:$0xf] %v351
        %385 = vst [vmem:[%s376 + $0x20] sm:$0xf] %v352
        %386 = vst [vmem:[%s376 + $0x24] sm:$0xf] %v353
        %387 = vst [vmem:[%s376 + $0x28] sm:$0xf] %v354
        %388 = vst [vmem:[%s376 + $0x2c] sm:$0xf] %v355
        %389 = vst [vmem:[%s376 + $0x30] sm:$0xf] %v356
        %390 = vst [vmem:[%s376 + $0x34] sm:$0xf] %v357
        %391 = vst [vmem:[%s376 + $0x38] sm:$0xf] %v358
        %392 = vst [vmem:[%s376 + $0x3c] sm:$0xf] %v359
        %p393 = scmp.gt.s32.totalorder %s26, 0
        // Predicated region
        $region49: #{basic_block_forward.1} parent=47 // pred_check
          %p394 = pneg %p393
        $region50: #{basic_block_forward.1} parent=47 // pred_check_branch
          %396 = sbr.rel (%p394) target = $region52
        $region51: #{basic_block_forward.1} parent=47 // pred_region
          %s397 = ssub.s32 %s293, 2
          %s398 = smul.u32 %s397, 16
          %s399 = scalar_lea.vmem %s290, %s398
          %v400 = vld [vmem:[%s399] sm:$0xff]
          %v401 = vld [vmem:[%s399 + $0x8] sm:$0xff]
          %v402 = vld [vmem:[%s399 + $0x10] sm:$0xff]
          %v403 = vld [vmem:[%s399 + $0x18] sm:$0xff]
          %v404 = vpack.c.bf16 %v401, %v400
          %v405 = vpack.c.bf16 %v403, %v402
          %v408 = vunpack.c.l.b16 %v404
          %v409 = vunpack.c.h.b16 %v404
          %v410 = vunpack.c.l.b16 %v405
          %v411 = vunpack.c.h.b16 %v405
          %v412 = vpack.c.b16 %v408, %v408
          %v413 = vpack.c.b16 %v409, %v409
          %v414 = vpack.c.b16 %v410, %v410
          %v415 = vpack.c.b16 %v411, %v411
          %420 = vst [vmem:[#allocation2] sm:$0xf] %v412
          %421 = vst [vmem:[#allocation2 + $0x4] sm:$0xf] %v413
          %422 = vst [vmem:[#allocation2 + $0x8] sm:$0xf] %v414
          %423 = vst [vmem:[#allocation2 + $0xc] sm:$0xf] %v415
        $region52: #{basic_block_forward.1} parent=47 // pred_fallthru
          _
        %p424 = scmp.eq.s32.totalorder %s26, 0
        // Predicated region
        $region53: #{basic_block_forward.1} parent=47 // pred_check
          %p425 = pneg %p424
        $region54: #{basic_block_forward.1} parent=47 // pred_check_branch
          %427 = sbr.rel (%p425) target = $region56
        $region55: #{basic_block_forward.1} parent=47 // pred_region
          %428 = vst [vmem:[#allocation2] sm:$0xf] 0
          %429 = vst [vmem:[#allocation2 + $0x4] sm:$0xf] 0
          %430 = vst [vmem:[#allocation2 + $0x8] sm:$0xf] 0
          %431 = vst [vmem:[#allocation2 + $0xc] sm:$0xf] 0
        $region56: #{basic_block_forward.1} parent=47 // pred_fallthru
          _
        %p432 = scmp.lt.s32.totalorder %s26, 1
        // Predicated region
        $region57: #{basic_block_forward.1} parent=47 // pred_check
          %p433 = pneg %p432
        $region58: #{basic_block_forward.1} parent=47 // pred_check_branch
          %435 = sbr.rel (%p433) target = $region60
        $region59: #{basic_block_forward.1} parent=47 // pred_region
          %s436 = sadd.s32 %s293, 8
          %s437 = smul.u32 %s436, 16
          %s438 = scalar_lea.vmem %s290, %s437
          %v439 = vld [vmem:[%s438] sm:$0xff]
          %v440 = vld [vmem:[%s438 + $0x8] sm:$0xff]
          %v441 = vld [vmem:[%s438 + $0x10] sm:$0xff]
          %v442 = vld [vmem:[%s438 + $0x18] sm:$0xff]
          %v443 = vpack.c.bf16 %v440, %v439
          %v444 = vpack.c.bf16 %v442, %v441
          %v447 = vunpack.c.l.b16 %v443
          %v448 = vunpack.c.h.b16 %v443
          %v449 = vunpack.c.l.b16 %v444
          %v450 = vunpack.c.h.b16 %v444
          %v451 = vpack.c.b16 %v447, %v447
          %v452 = vpack.c.b16 %v448, %v448
          %v453 = vpack.c.b16 %v449, %v449
          %v454 = vpack.c.b16 %v450, %v450
          %s459 = scalar_lea.vmem [#allocation2], 80
          %460 = vst [vmem:[%s459] sm:$0xf] %v451
          %461 = vst [vmem:[%s459 + $0x4] sm:$0xf] %v452
          %462 = vst [vmem:[%s459 + $0x8] sm:$0xf] %v453
          %463 = vst [vmem:[%s459 + $0xc] sm:$0xf] %v454
        $region60: #{basic_block_forward.1} parent=47 // pred_fallthru
          _
        %p464 = scmp.eq.s32.totalorder %s26, 1
        // Predicated region
        $region61: #{basic_block_forward.1} parent=47 // pred_check
          %p465 = pneg %p464
        $region62: #{basic_block_forward.1} parent=47 // pred_check_branch
          %467 = sbr.rel (%p465) target = $region64
        $region63: #{basic_block_forward.1} parent=47 // pred_region
          %s468 = scalar_lea.vmem [#allocation2], 80
          %469 = vst [vmem:[%s468] sm:$0xf] 0
          %470 = vst [vmem:[%s468 + $0x4] sm:$0xf] 0
          %471 = vst [vmem:[%s468 + $0x8] sm:$0xf] 0
          %472 = vst [vmem:[%s468 + $0xc] sm:$0xf] 0
        $region64: #{basic_block_forward.1} parent=47 // pred_fallthru
          _
        %v473 = vld [vmem:[#allocation2] sm:$0xf]
        %v474 = vld [vmem:[#allocation2 + $0x4] sm:$0xf]
        %v475 = vld [vmem:[#allocation2 + $0x8] sm:$0xf]
        %v476 = vld [vmem:[#allocation2 + $0xc] sm:$0xf]
        %v477 = vld [vmem:[#allocation2 + $0x10] sm:$0xf]
        %v478 = vld [vmem:[#allocation2 + $0x14] sm:$0xf]
        %v479 = vld [vmem:[#allocation2 + $0x18] sm:$0xf]
        %v480 = vld [vmem:[#allocation2 + $0x1c] sm:$0xf]
        %v481 = vld [vmem:[#allocation2 + $0x20] sm:$0xf]
        %v482 = vld [vmem:[#allocation2 + $0x24] sm:$0xf]
        %v483 = vld [vmem:[#allocation2 + $0x28] sm:$0xf]
        %v484 = vld [vmem:[#allocation2 + $0x2c] sm:$0xf]
        %v485 = vld [vmem:[#allocation2 + $0x30] sm:$0xf]
        %v486 = vld [vmem:[#allocation2 + $0x34] sm:$0xf]
        %v487 = vld [vmem:[#allocation2 + $0x38] sm:$0xf]
        %v488 = vld [vmem:[#allocation2 + $0x3c] sm:$0xf]
        %v489 = vld [vmem:[#allocation2 + $0x40] sm:$0xf]
        %v490 = vld [vmem:[#allocation2 + $0x44] sm:$0xf]
        %v491 = vld [vmem:[#allocation2 + $0x48] sm:$0xf]
        %v492 = vld [vmem:[#allocation2 + $0x4c] sm:$0xf]
        %v493 = vld [vmem:[#allocation2 + $0x50] sm:$0xf]
        %v494 = vld [vmem:[#allocation2 + $0x54] sm:$0xf]
        %v495 = vld [vmem:[#allocation2 + $0x58] sm:$0xf]
        %v496 = vld [vmem:[#allocation2 + $0x5c] sm:$0xf]
        %497 = vst [vmem:[#allocation4 + $0x4] sm:$0xf] %v473
        %498 = vst [vmem:[#allocation4 + $0x10] sm:$0xf] %v474
        %499 = vst [vmem:[#allocation4 + $0x1c] sm:$0xf] %v475
        %500 = vst [vmem:[#allocation4 + $0x28] sm:$0xf] %v476
        %501 = vst [vmem:[#allocation4 + $0x34] sm:$0xf] %v477
        %502 = vst [vmem:[#allocation4 + $0x40] sm:$0xf] %v478
        %503 = vst [vmem:[#allocation4 + $0x4c] sm:$0xf] %v479
        %504 = vst [vmem:[#allocation4 + $0x58] sm:$0xf] %v480
        %505 = vst [vmem:[#allocation4 + $0x64] sm:$0xf] %v481
        %506 = vst [vmem:[#allocation4 + $0x70] sm:$0xf] %v482
        %507 = vst [vmem:[#allocation4 + $0x7c] sm:$0xf] %v483
        %508 = vst [vmem:[#allocation4 + $0x88] sm:$0xf] %v484
        %509 = vst [vmem:[#allocation4 + $0x94] sm:$0xf] %v485
        %510 = vst [vmem:[#allocation4 + $0xa0] sm:$0xf] %v486
        %511 = vst [vmem:[#allocation4 + $0xac] sm:$0xf] %v487
        %512 = vst [vmem:[#allocation4 + $0xb8] sm:$0xf] %v488
        %513 = vst [vmem:[#allocation4 + $0xc4] sm:$0xf] %v489
        %514 = vst [vmem:[#allocation4 + $0xd0] sm:$0xf] %v490
        %515 = vst [vmem:[#allocation4 + $0xdc] sm:$0xf] %v491
        %516 = vst [vmem:[#allocation4 + $0xe8] sm:$0xf] %v492
        %517 = vst [vmem:[#allocation4 + $0xf4] sm:$0xf] %v493
        %518 = vst [vmem:[#allocation4 + $0x100] sm:$0xf] %v494
        %519 = vst [vmem:[#allocation4 + $0x10c] sm:$0xf] %v495
        %520 = vst [vmem:[#allocation4 + $0x118] sm:$0xf] %v496
        %vm521 = vsmask.f32 256
        %vm522 = vsmask.f32 4368
        %vm523 = vmor %vm521, %vm522
        %v525 = vshrl.u32 %v473, 16
        %v527 = vrot.slane %v525, 7
        %v528 = vshll.u32 %v473, 16
        %v530 = vor.u32 %v527, %v528
        %v531 = vrot.slane %v527, 4
        %v533 = vshrl.u32 %v474, 16
        %v535 = vrot.slane %v533, 7
        %v536 = vshll.u32 %v474, 16
        %v538 = vor.u32 %v535, %v536
        %v539 = vsel %vm523, %v531, %v538
        %v541 = vshrl.u32 %v475, 16
        %v543 = vrot.slane %v541, 7
        %v544 = vshll.u32 %v475, 16
        %v546 = vor.u32 %v543, %v544
        %v547 = vrot.slane %v543, 4
        %v549 = vshrl.u32 %v476, 16
        %v551 = vrot.slane %v549, 7
        %v552 = vshll.u32 %v476, 16
        %v554 = vor.u32 %v551, %v552
        %v555 = vsel %vm523, %v547, %v554
        %v557 = vshrl.u32 %v477, 16
        %v559 = vrot.slane %v557, 7
        %v560 = vshll.u32 %v477, 16
        %v562 = vor.u32 %v559, %v560
        %v563 = vrot.slane %v559, 4
        %v565 = vshrl.u32 %v478, 16
        %v567 = vrot.slane %v565, 7
        %v568 = vshll.u32 %v478, 16
        %v570 = vor.u32 %v567, %v568
        %v571 = vsel %vm523, %v563, %v570
        %v573 = vshrl.u32 %v479, 16
        %v575 = vrot.slane %v573, 7
        %v576 = vshll.u32 %v479, 16
        %v578 = vor.u32 %v575, %v576
        %v579 = vrot.slane %v575, 4
        %v581 = vshrl.u32 %v480, 16
        %v583 = vrot.slane %v581, 7
        %v584 = vshll.u32 %v480, 16
        %v586 = vor.u32 %v583, %v584
        %v587 = vsel %vm523, %v579, %v586
        %v589 = vshrl.u32 %v481, 16
        %v591 = vrot.slane %v589, 7
        %v592 = vshll.u32 %v481, 16
        %v594 = vor.u32 %v591, %v592
        %v595 = vrot.slane %v591, 4
        %v597 = vshrl.u32 %v482, 16
        %v599 = vrot.slane %v597, 7
        %v600 = vshll.u32 %v482, 16
        %v602 = vor.u32 %v599, %v600
        %v603 = vsel %vm523, %v595, %v602
        %v605 = vshrl.u32 %v483, 16
        %v607 = vrot.slane %v605, 7
        %v608 = vshll.u32 %v483, 16
        %v610 = vor.u32 %v607, %v608
        %v611 = vrot.slane %v607, 4
        %v613 = vshrl.u32 %v484, 16
        %v615 = vrot.slane %v613, 7
        %v616 = vshll.u32 %v484, 16
        %v618 = vor.u32 %v615, %v616
        %v619 = vsel %vm523, %v611, %v618
        %v621 = vshrl.u32 %v485, 16
        %v623 = vrot.slane %v621, 7
        %v624 = vshll.u32 %v485, 16
        %v626 = vor.u32 %v623, %v624
        %v627 = vrot.slane %v623, 4
        %v629 = vshrl.u32 %v486, 16
        %v631 = vrot.slane %v629, 7
        %v632 = vshll.u32 %v486, 16
        %v634 = vor.u32 %v631, %v632
        %v635 = vsel %vm523, %v627, %v634
        %v637 = vshrl.u32 %v487, 16
        %v639 = vrot.slane %v637, 7
        %v640 = vshll.u32 %v487, 16
        %v642 = vor.u32 %v639, %v640
        %v643 = vrot.slane %v639, 4
        %v645 = vshrl.u32 %v488, 16
        %v647 = vrot.slane %v645, 7
        %v648 = vshll.u32 %v488, 16
        %v650 = vor.u32 %v647, %v648
        %v651 = vsel %vm523, %v643, %v650
        %v653 = vshrl.u32 %v489, 16
        %v655 = vrot.slane %v653, 7
        %v656 = vshll.u32 %v489, 16
        %v658 = vor.u32 %v655, %v656
        %v659 = vrot.slane %v655, 4
        %v661 = vshrl.u32 %v490, 16
        %v663 = vrot.slane %v661, 7
        %v664 = vshll.u32 %v490, 16
        %v666 = vor.u32 %v663, %v664
        %v667 = vsel %vm523, %v659, %v666
        %v669 = vshrl.u32 %v491, 16
        %v671 = vrot.slane %v669, 7
        %v672 = vshll.u32 %v491, 16
        %v674 = vor.u32 %v671, %v672
        %v675 = vrot.slane %v671, 4
        %v677 = vshrl.u32 %v492, 16
        %v679 = vrot.slane %v677, 7
        %v680 = vshll.u32 %v492, 16
        %v682 = vor.u32 %v679, %v680
        %v683 = vsel %vm523, %v675, %v682
        %v685 = vshrl.u32 %v493, 16
        %v687 = vrot.slane %v685, 7
        %v688 = vshll.u32 %v493, 16
        %v690 = vor.u32 %v687, %v688
        %v691 = vrot.slane %v687, 4
        %v693 = vshrl.u32 %v494, 16
        %v695 = vrot.slane %v693, 7
        %v696 = vshll.u32 %v494, 16
        %v698 = vor.u32 %v695, %v696
        %v699 = vsel %vm523, %v691, %v698
        %v701 = vshrl.u32 %v495, 16
        %v703 = vrot.slane %v701, 7
        %v704 = vshll.u32 %v495, 16
        %v706 = vor.u32 %v703, %v704
        %v707 = vrot.slane %v703, 4
        %v709 = vshrl.u32 %v496, 16
        %v711 = vrot.slane %v709, 7
        %v712 = vshll.u32 %v496, 16
        %v714 = vor.u32 %v711, %v712
        %v715 = vsel %vm523, %v707, %v714
        %vm740 = vcmask 1043456
        %vm741 = vsmask.f32 7938
        %vm742 = vmand %vm740, %vm741
        %v743 = vld [vmem:[#allocation4] sm:$0xf]
        %v744 = vsel %vm742, %v530, %v743
        %745 = vst [vmem:[#allocation4] sm:$0xf] %v744
        %746 = vst [vmem:[#allocation4 + $0xc] sm:$0xf] %v539
        %v747 = vld [vmem:[#allocation4 + $0x18] sm:$0xf]
        %v748 = vsel %vm742, %v546, %v747
        %749 = vst [vmem:[#allocation4 + $0x18] sm:$0xf] %v748
        %750 = vst [vmem:[#allocation4 + $0x24] sm:$0xf] %v555
        %v751 = vld [vmem:[#allocation4 + $0x30] sm:$0xf]
        %v752 = vsel %vm742, %v562, %v751
        %753 = vst [vmem:[#allocation4 + $0x30] sm:$0xf] %v752
        %754 = vst [vmem:[#allocation4 + $0x3c] sm:$0xf] %v571
        %v755 = vld [vmem:[#allocation4 + $0x48] sm:$0xf]
        %v756 = vsel %vm742, %v578, %v755
        %757 = vst [vmem:[#allocation4 + $0x48] sm:$0xf] %v756
        %758 = vst [vmem:[#allocation4 + $0x54] sm:$0xf] %v587
        %v759 = vld [vmem:[#allocation4 + $0x60] sm:$0xf]
        %v760 = vsel %vm742, %v594, %v759
        %761 = vst [vmem:[#allocation4 + $0x60] sm:$0xf] %v760
        %762 = vst [vmem:[#allocation4 + $0x6c] sm:$0xf] %v603
        %v763 = vld [vmem:[#allocation4 + $0x78] sm:$0xf]
        %v764 = vsel %vm742, %v610, %v763
        %765 = vst [vmem:[#allocation4 + $0x78] sm:$0xf] %v764
        %766 = vst [vmem:[#allocation4 + $0x84] sm:$0xf] %v619
        %v767 = vld [vmem:[#allocation4 + $0x90] sm:$0xf]
        %v768 = vsel %vm742, %v626, %v767
        %769 = vst [vmem:[#allocation4 + $0x90] sm:$0xf] %v768
        %770 = vst [vmem:[#allocation4 + $0x9c] sm:$0xf] %v635
        %v771 = vld [vmem:[#allocation4 + $0xa8] sm:$0xf]
        %v772 = vsel %vm742, %v642, %v771
        %773 = vst [vmem:[#allocation4 + $0xa8] sm:$0xf] %v772
        %774 = vst [vmem:[#allocation4 + $0xb4] sm:$0xf] %v651
        %v775 = vld [vmem:[#allocation4 + $0xc0] sm:$0xf]
        %v776 = vsel %vm742, %v658, %v775
        %777 = vst [vmem:[#allocation4 + $0xc0] sm:$0xf] %v776
        %778 = vst [vmem:[#allocation4 + $0xcc] sm:$0xf] %v667
        %v779 = vld [vmem:[#allocation4 + $0xd8] sm:$0xf]
        %v780 = vsel %vm742, %v674, %v779
        %781 = vst [vmem:[#allocation4 + $0xd8] sm:$0xf] %v780
        %782 = vst [vmem:[#allocation4 + $0xe4] sm:$0xf] %v683
        %v783 = vld [vmem:[#allocation4 + $0xf0] sm:$0xf]
        %v784 = vsel %vm742, %v690, %v783
        %785 = vst [vmem:[#allocation4 + $0xf0] sm:$0xf] %v784
        %786 = vst [vmem:[#allocation4 + $0xfc] sm:$0xf] %v699
        %v787 = vld [vmem:[#allocation4 + $0x108] sm:$0xf]
        %v788 = vsel %vm742, %v706, %v787
        %789 = vst [vmem:[#allocation4 + $0x108] sm:$0xf] %v788
        %790 = vst [vmem:[#allocation4 + $0x114] sm:$0xf] %v715
        %vm791 = vcmask 1040384
        %vm792 = vmand %vm791, %vm521
        %v793 = vld [vmem:[#allocation4] sm:$0x1]
        %v794 = vsel %vm792, 0, %v793
        %795 = vst [vmem:[#allocation4] sm:$0x1] %v794
        %v796 = vld [vmem:[#allocation4 + $0x18] sm:$0x1]
        %v797 = vsel %vm792, 0, %v796
        %798 = vst [vmem:[#allocation4 + $0x18] sm:$0x1] %v797
        %v799 = vld [vmem:[#allocation4 + $0x30] sm:$0x1]
        %v800 = vsel %vm792, 0, %v799
        %801 = vst [vmem:[#allocation4 + $0x30] sm:$0x1] %v800
        %v802 = vld [vmem:[#allocation4 + $0x48] sm:$0x1]
        %v803 = vsel %vm792, 0, %v802
        %804 = vst [vmem:[#allocation4 + $0x48] sm:$0x1] %v803
        %v805 = vld [vmem:[#allocation4 + $0x60] sm:$0x1]
        %v806 = vsel %vm792, 0, %v805
        %807 = vst [vmem:[#allocation4 + $0x60] sm:$0x1] %v806
        %v808 = vld [vmem:[#allocation4 + $0x78] sm:$0x1]
        %v809 = vsel %vm792, 0, %v808
        %810 = vst [vmem:[#allocation4 + $0x78] sm:$0x1] %v809
        %v811 = vld [vmem:[#allocation4 + $0x90] sm:$0x1]
        %v812 = vsel %vm792, 0, %v811
        %813 = vst [vmem:[#allocation4 + $0x90] sm:$0x1] %v812
        %v814 = vld [vmem:[#allocation4 + $0xa8] sm:$0x1]
        %v815 = vsel %vm792, 0, %v814
        %816 = vst [vmem:[#allocation4 + $0xa8] sm:$0x1] %v815
        %v817 = vld [vmem:[#allocation4 + $0xc0] sm:$0x1]
        %v818 = vsel %vm792, 0, %v817
        %819 = vst [vmem:[#allocation4 + $0xc0] sm:$0x1] %v818
        %v820 = vld [vmem:[#allocation4 + $0xd8] sm:$0x1]
        %v821 = vsel %vm792, 0, %v820
        %822 = vst [vmem:[#allocation4 + $0xd8] sm:$0x1] %v821
        %v823 = vld [vmem:[#allocation4 + $0xf0] sm:$0x1]
        %v824 = vsel %vm792, 0, %v823
        %825 = vst [vmem:[#allocation4 + $0xf0] sm:$0x1] %v824
        %v826 = vld [vmem:[#allocation4 + $0x108] sm:$0x1]
        %v827 = vsel %vm792, 0, %v826
        %828 = vst [vmem:[#allocation4 + $0x108] sm:$0x1] %v827
        %vm829 = vsmask.f32 3328
        %vm830 = vsmask.f32 7440
        %vm831 = vmor %vm829, %vm830
        %v832 = vrot.slane %v525, 4
        %v833 = vrot.slane %v528, 5
        %v834 = vor.u32 %v832, %v833
        %v835 = vrot.slane %v834, 4
        %v836 = vrot.slane %v536, 5
        %v837 = vsel %vm831, %v835, %v836
        %v838 = vrot.slane %v533, 4
        %v839 = vor.u32 %v838, %v836
        %v840 = vrot.slane %v839, 4
        %v841 = vrot.slane %v541, 4
        %v842 = vrot.slane %v544, 5
        %v843 = vor.u32 %v841, %v842
        %v844 = vrot.slane %v843, 4
        %v845 = vrot.slane %v552, 5
        %v846 = vsel %vm831, %v844, %v845
        %v847 = vrot.slane %v549, 4
        %v848 = vor.u32 %v847, %v845
        %v849 = vrot.slane %v848, 4
        %v850 = vrot.slane %v557, 4
        %v851 = vrot.slane %v560, 5
        %v852 = vor.u32 %v850, %v851
        %v853 = vrot.slane %v852, 4
        %v854 = vrot.slane %v568, 5
        %v855 = vsel %vm831, %v853, %v854
        %v856 = vrot.slane %v565, 4
        %v857 = vor.u32 %v856, %v854
        %v858 = vrot.slane %v857, 4
        %v859 = vrot.slane %v573, 4
        %v860 = vrot.slane %v576, 5
        %v861 = vor.u32 %v859, %v860
        %v862 = vrot.slane %v861, 4
        %v863 = vrot.slane %v584, 5
        %v864 = vsel %vm831, %v862, %v863
        %v865 = vrot.slane %v581, 4
        %v866 = vor.u32 %v865, %v863
        %v867 = vrot.slane %v866, 4
        %v868 = vrot.slane %v589, 4
        %v869 = vrot.slane %v592, 5
        %v870 = vor.u32 %v868, %v869
        %v871 = vrot.slane %v870, 4
        %v872 = vrot.slane %v600, 5
        %v873 = vsel %vm831, %v871, %v872
        %v874 = vrot.slane %v597, 4
        %v875 = vor.u32 %v874, %v872
        %v876 = vrot.slane %v875, 4
        %v877 = vrot.slane %v605, 4
        %v878 = vrot.slane %v608, 5
        %v879 = vor.u32 %v877, %v878
        %v880 = vrot.slane %v879, 4
        %v881 = vrot.slane %v616, 5
        %v882 = vsel %vm831, %v880, %v881
        %v883 = vrot.slane %v613, 4
        %v884 = vor.u32 %v883, %v881
        %v885 = vrot.slane %v884, 4
        %v886 = vrot.slane %v621, 4
        %v887 = vrot.slane %v624, 5
        %v888 = vor.u32 %v886, %v887
        %v889 = vrot.slane %v888, 4
        %v890 = vrot.slane %v632, 5
        %v891 = vsel %vm831, %v889, %v890
        %v892 = vrot.slane %v629, 4
        %v893 = vor.u32 %v892, %v890
        %v894 = vrot.slane %v893, 4
        %v895 = vrot.slane %v637, 4
        %v896 = vrot.slane %v640, 5
        %v897 = vor.u32 %v895, %v896
        %v898 = vrot.slane %v897, 4
        %v899 = vrot.slane %v648, 5
        %v900 = vsel %vm831, %v898, %v899
        %v901 = vrot.slane %v645, 4
        %v902 = vor.u32 %v901, %v899
        %v903 = vrot.slane %v902, 4
        %v904 = vrot.slane %v653, 4
        %v905 = vrot.slane %v656, 5
        %v906 = vor.u32 %v904, %v905
        %v907 = vrot.slane %v906, 4
        %v908 = vrot.slane %v664, 5
        %v909 = vsel %vm831, %v907, %v908
        %v910 = vrot.slane %v661, 4
        %v911 = vor.u32 %v910, %v908
        %v912 = vrot.slane %v911, 4
        %v913 = vrot.slane %v669, 4
        %v914 = vrot.slane %v672, 5
        %v915 = vor.u32 %v913, %v914
        %v916 = vrot.slane %v915, 4
        %v917 = vrot.slane %v680, 5
        %v918 = vsel %vm831, %v916, %v917
        %v919 = vrot.slane %v677, 4
        %v920 = vor.u32 %v919, %v917
        %v921 = vrot.slane %v920, 4
        %v922 = vrot.slane %v685, 4
        %v923 = vrot.slane %v688, 5
        %v924 = vor.u32 %v922, %v923
        %v925 = vrot.slane %v924, 4
        %v926 = vrot.slane %v696, 5
        %v927 = vsel %vm831, %v925, %v926
        %v928 = vrot.slane %v693, 4
        %v929 = vor.u32 %v928, %v926
        %v930 = vrot.slane %v929, 4
        %v931 = vrot.slane %v701, 4
        %v932 = vrot.slane %v704, 5
        %v933 = vor.u32 %v931, %v932
        %v934 = vrot.slane %v933, 4
        %v935 = vrot.slane %v712, 5
        %v936 = vsel %vm831, %v934, %v935
        %v937 = vrot.slane %v709, 4
        %v938 = vor.u32 %v937, %v935
        %v939 = vrot.slane %v938, 4
        %964 = vst [vmem:[#allocation4 + $0x8] sm:$0xf] %v837
        %vm965 = vmand %vm740, %vm829
        %v966 = vld [vmem:[#allocation4 + $0x14] sm:$0xf]
        %v967 = vsel %vm965, %v840, %v966
        %968 = vst [vmem:[#allocation4 + $0x14] sm:$0xf] %v967
        %969 = vst [vmem:[#allocation4 + $0x20] sm:$0xf] %v846
        %v970 = vld [vmem:[#allocation4 + $0x2c] sm:$0xf]
        %v971 = vsel %vm965, %v849, %v970
        %972 = vst [vmem:[#allocation4 + $0x2c] sm:$0xf] %v971
        %973 = vst [vmem:[#allocation4 + $0x38] sm:$0xf] %v855
        %v974 = vld [vmem:[#allocation4 + $0x44] sm:$0xf]
        %v975 = vsel %vm965, %v858, %v974
        %976 = vst [vmem:[#allocation4 + $0x44] sm:$0xf] %v975
        %977 = vst [vmem:[#allocation4 + $0x50] sm:$0xf] %v864
        %v978 = vld [vmem:[#allocation4 + $0x5c] sm:$0xf]
        %v979 = vsel %vm965, %v867, %v978
        %980 = vst [vmem:[#allocation4 + $0x5c] sm:$0xf] %v979
        %981 = vst [vmem:[#allocation4 + $0x68] sm:$0xf] %v873
        %v982 = vld [vmem:[#allocation4 + $0x74] sm:$0xf]
        %v983 = vsel %vm965, %v876, %v982
        %984 = vst [vmem:[#allocation4 + $0x74] sm:$0xf] %v983
        %985 = vst [vmem:[#allocation4 + $0x80] sm:$0xf] %v882
        %v986 = vld [vmem:[#allocation4 + $0x8c] sm:$0xf]
        %v987 = vsel %vm965, %v885, %v986
        %988 = vst [vmem:[#allocation4 + $0x8c] sm:$0xf] %v987
        %989 = vst [vmem:[#allocation4 + $0x98] sm:$0xf] %v891
        %v990 = vld [vmem:[#allocation4 + $0xa4] sm:$0xf]
        %v991 = vsel %vm965, %v894, %v990
        %992 = vst [vmem:[#allocation4 + $0xa4] sm:$0xf] %v991
        %993 = vst [vmem:[#allocation4 + $0xb0] sm:$0xf] %v900
        %v994 = vld [vmem:[#allocation4 + $0xbc] sm:$0xf]
        %v995 = vsel %vm965, %v903, %v994
        %996 = vst [vmem:[#allocation4 + $0xbc] sm:$0xf] %v995
        %997 = vst [vmem:[#allocation4 + $0xc8] sm:$0xf] %v909
        %v998 = vld [vmem:[#allocation4 + $0xd4] sm:$0xf]
        %v999 = vsel %vm965, %v912, %v998
        %1000 = vst [vmem:[#allocation4 + $0xd4] sm:$0xf] %v999
        %1001 = vst [vmem:[#allocation4 + $0xe0] sm:$0xf] %v918
        %v1002 = vld [vmem:[#allocation4 + $0xec] sm:$0xf]
        %v1003 = vsel %vm965, %v921, %v1002
        %1004 = vst [vmem:[#allocation4 + $0xec] sm:$0xf] %v1003
        %1005 = vst [vmem:[#allocation4 + $0xf8] sm:$0xf] %v927
        %v1006 = vld [vmem:[#allocation4 + $0x104] sm:$0xf]
        %v1007 = vsel %vm965, %v930, %v1006
        %1008 = vst [vmem:[#allocation4 + $0x104] sm:$0xf] %v1007
        %1009 = vst [vmem:[#allocation4 + $0x110] sm:$0xf] %v936
        %v1010 = vld [vmem:[#allocation4 + $0x11c] sm:$0xf]
        %v1011 = vsel %vm965, %v939, %v1010
        %1012 = vst [vmem:[#allocation4 + $0x11c] sm:$0xf] %v1011
        %vm1013 = vcmask 1043459
        %vm1014 = vsmask.f32 7950
        %vm1015 = vmand %vm1013, %vm1014
        %v1016 = vld [vmem:[#allocation4 + $0x14] sm:$0x8]
        %v1017 = vsel %vm1015, 0, %v1016
        %1018 = vst [vmem:[#allocation4 + $0x14] sm:$0x8] %v1017
        %v1019 = vld [vmem:[#allocation4 + $0x2c] sm:$0x8]
        %v1020 = vsel %vm1015, 0, %v1019
        %1021 = vst [vmem:[#allocation4 + $0x2c] sm:$0x8] %v1020
        %v1022 = vld [vmem:[#allocation4 + $0x44] sm:$0x8]
        %v1023 = vsel %vm1015, 0, %v1022
        %1024 = vst [vmem:[#allocation4 + $0x44] sm:$0x8] %v1023
        %v1025 = vld [vmem:[#allocation4 + $0x5c] sm:$0x8]
        %v1026 = vsel %vm1015, 0, %v1025
        %1027 = vst [vmem:[#allocation4 + $0x5c] sm:$0x8] %v1026
        %v1028 = vld [vmem:[#allocation4 + $0x74] sm:$0x8]
        %v1029 = vsel %vm1015, 0, %v1028
        %1030 = vst [vmem:[#allocation4 + $0x74] sm:$0x8] %v1029
        %v1031 = vld [vmem:[#allocation4 + $0x8c] sm:$0x8]
        %v1032 = vsel %vm1015, 0, %v1031
        %1033 = vst [vmem:[#allocation4 + $0x8c] sm:$0x8] %v1032
        %v1034 = vld [vmem:[#allocation4 + $0xa4] sm:$0x8]
        %v1035 = vsel %vm1015, 0, %v1034
        %1036 = vst [vmem:[#allocation4 + $0xa4] sm:$0x8] %v1035
        %v1037 = vld [vmem:[#allocation4 + $0xbc] sm:$0x8]
        %v1038 = vsel %vm1015, 0, %v1037
        %1039 = vst [vmem:[#allocation4 + $0xbc] sm:$0x8] %v1038
        %v1040 = vld [vmem:[#allocation4 + $0xd4] sm:$0x8]
        %v1041 = vsel %vm1015, 0, %v1040
        %1042 = vst [vmem:[#allocation4 + $0xd4] sm:$0x8] %v1041
        %v1043 = vld [vmem:[#allocation4 + $0xec] sm:$0x8]
        %v1044 = vsel %vm1015, 0, %v1043
        %1045 = vst [vmem:[#allocation4 + $0xec] sm:$0x8] %v1044
        %v1046 = vld [vmem:[#allocation4 + $0x104] sm:$0x8]
        %v1047 = vsel %vm1015, 0, %v1046
        %1048 = vst [vmem:[#allocation4 + $0x104] sm:$0x8] %v1047
        %v1049 = vld [vmem:[#allocation4 + $0x11c] sm:$0x8]
        %v1050 = vsel %vm1015, 0, %v1049
        %1051 = vst [vmem:[#allocation4 + $0x11c] sm:$0x8] %v1050
        %v1052 = vld [vmem:[#allocation4] sm:$0xff]
        %v1053 = vld [vmem:[#allocation4 + $0x8] sm:$0xf]
        %v1054 = vld [vmem:[#allocation4 + $0xc] sm:$0xff]
        %v1055 = vld [vmem:[#allocation4 + $0x14] sm:$0xf]
        %v1056 = vld [vmem:[#allocation4 + $0x18] sm:$0xff]
        %v1057 = vld [vmem:[#allocation4 + $0x20] sm:$0xf]
        %v1058 = vld [vmem:[#allocation4 + $0x24] sm:$0xff]
        %v1059 = vld [vmem:[#allocation4 + $0x2c] sm:$0xf]
        %v1060 = vld [vmem:[#allocation4 + $0x30] sm:$0xff]
        %v1061 = vld [vmem:[#allocation4 + $0x38] sm:$0xf]
        %v1062 = vld [vmem:[#allocation4 + $0x3c] sm:$0xff]
        %v1063 = vld [vmem:[#allocation4 + $0x44] sm:$0xf]
        %v1064 = vld [vmem:[#allocation4 + $0x48] sm:$0xff]
        %v1065 = vld [vmem:[#allocation4 + $0x50] sm:$0xf]
        %v1066 = vld [vmem:[#allocation4 + $0x54] sm:$0xff]
        %v1067 = vld [vmem:[#allocation4 + $0x5c] sm:$0xf]
        %v1068 = vld [vmem:[#allocation4 + $0x60] sm:$0xff]
        %v1069 = vld [vmem:[#allocation4 + $0x68] sm:$0xf]
        %v1070 = vld [vmem:[#allocation4 + $0x6c] sm:$0xff]
        %v1071 = vld [vmem:[#allocation4 + $0x74] sm:$0xf]
        %v1072 = vld [vmem:[#allocation4 + $0x78] sm:$0xff]
        %v1073 = vld [vmem:[#allocation4 + $0x80] sm:$0xf]
        %v1074 = vld [vmem:[#allocation4 + $0x84] sm:$0xff]
        %v1075 = vld [vmem:[#allocation4 + $0x8c] sm:$0xf]
        %v1076 = vld [vmem:[#allocation4 + $0x90] sm:$0xff]
        %v1077 = vld [vmem:[#allocation4 + $0x98] sm:$0xf]
        %v1078 = vld [vmem:[#allocation4 + $0x9c] sm:$0xff]
        %v1079 = vld [vmem:[#allocation4 + $0xa4] sm:$0xf]
        %v1080 = vld [vmem:[#allocation4 + $0xa8] sm:$0xff]
        %v1081 = vld [vmem:[#allocation4 + $0xb0] sm:$0xf]
        %v1082 = vld [vmem:[#allocation4 + $0xb4] sm:$0xff]
        %v1083 = vld [vmem:[#allocation4 + $0xbc] sm:$0xf]
        %v1084 = vld [vmem:[#allocation4 + $0xc0] sm:$0xff]
        %v1085 = vld [vmem:[#allocation4 + $0xc8] sm:$0xf]
        %v1086 = vld [vmem:[#allocation4 + $0xcc] sm:$0xff]
        %v1087 = vld [vmem:[#allocation4 + $0xd4] sm:$0xf]
        %v1088 = vld [vmem:[#allocation4 + $0xd8] sm:$0xff]
        %v1089 = vld [vmem:[#allocation4 + $0xe0] sm:$0xf]
        %v1090 = vld [vmem:[#allocation4 + $0xe4] sm:$0xff]
        %v1091 = vld [vmem:[#allocation4 + $0xec] sm:$0xf]
        %v1092 = vld [vmem:[%s1] sm:$0xf]
        %v1093 = vld [vmem:[%s1 + $0x4] sm:$0xf]
        %v1094 = vld [vmem:[%s1 + $0x8] sm:$0xf]
        %v1095 = vld [vmem:[%s1 + $0xc] sm:$0xf]
        %v1096 = vld [vmem:[%s1 + $0x10] sm:$0xf]
        %v1097 = vld [vmem:[%s1 + $0x14] sm:$0xf]
        %v1098 = vld [vmem:[%s1 + $0x18] sm:$0xf]
        %v1099 = vld [vmem:[%s1 + $0x1c] sm:$0xf]
        %v1100 = vld [vmem:[%s1 + $0x20] sm:$0xf]
        %v1101 = vld [vmem:[%s1 + $0x24] sm:$0xf]
        %v1102 = vld [vmem:[%s1 + $0x28] sm:$0xf]
        %v1103 = vld [vmem:[%s1 + $0x2c] sm:$0xf]
        %v1104 = vld [vmem:[%s1 + $0x30] sm:$0xf]
        %v1105 = vld [vmem:[%s1 + $0x34] sm:$0xf]
        %v1106 = vld [vmem:[%s1 + $0x38] sm:$0xf]
        %v1107 = vld [vmem:[%s1 + $0x3c] sm:$0xf]
        %v1108 = vld [vmem:[%s1 + $0x40] sm:$0xf]
        %v1109 = vld [vmem:[%s1 + $0x44] sm:$0xf]
        %v1110 = vld [vmem:[%s1 + $0x48] sm:$0xf]
        %v1111 = vld [vmem:[%s1 + $0x4c] sm:$0xf]
        %v1112 = vld [vmem:[%s1 + $0x50] sm:$0xf]
        %v1113 = vld [vmem:[%s1 + $0x54] sm:$0xf]
        %v1114 = vld [vmem:[%s1 + $0x58] sm:$0xf]
        %v1115 = vld [vmem:[%s1 + $0x5c] sm:$0xf]
        %v1116 = vld [vmem:[%s1 + $0x60] sm:$0xf]
        %v1117 = vld [vmem:[%s1 + $0x64] sm:$0xf]
        %v1118 = vld [vmem:[%s1 + $0x68] sm:$0xf]
        %v1119 = vld [vmem:[%s1 + $0x6c] sm:$0xf]
        %v1120 = vld [vmem:[%s1 + $0x70] sm:$0xf]
        %v1121 = vld [vmem:[%s1 + $0x74] sm:$0xf]
        %v1122 = vld [vmem:[%s1 + $0x78] sm:$0xf]
        %v1123 = vld [vmem:[%s1 + $0x7c] sm:$0xf]
        %v1124 = vld [vmem:[%s1 + $0x80] sm:$0xf]
        %v1125 = vld [vmem:[%s1 + $0x84] sm:$0xf]
        %v1126 = vld [vmem:[%s1 + $0x88] sm:$0xf]
        %v1127 = vld [vmem:[%s1 + $0x8c] sm:$0xf]
        %v1128 = vld [vmem:[%s1 + $0x90] sm:$0xf]
        %v1129 = vld [vmem:[%s1 + $0x94] sm:$0xf]
        %v1130 = vld [vmem:[%s1 + $0x98] sm:$0xf]
        %v1131 = vld [vmem:[%s1 + $0x9c] sm:$0xf]
        %v1132 = vld [vmem:[%s1 + $0xa0] sm:$0xf]
        %v1133 = vld [vmem:[%s1 + $0xa4] sm:$0xf]
        %v1134 = vld [vmem:[%s1 + $0xa8] sm:$0xf]
        %v1135 = vld [vmem:[%s1 + $0xac] sm:$0xf]
        %v1136 = vld [vmem:[%s1 + $0xb0] sm:$0xf]
        %v1137 = vld [vmem:[%s1 + $0xb4] sm:$0xf]
        %v1138 = vld [vmem:[%s1 + $0xb8] sm:$0xf]
        %v1139 = vld [vmem:[%s1 + $0xbc] sm:$0xf]
        %s1140 = scalar_lea.vmem [#allocation4], 24
        %v1141 = vld [vmem:[%s1140] sm:$0xff]
        %v1142 = vld [vmem:[%s1140 + $0x8] sm:$0xf]
        %v1143 = vld [vmem:[%s1140 + $0xc] sm:$0xff]
        %v1144 = vld [vmem:[%s1140 + $0x14] sm:$0xf]
        %v1145 = vld [vmem:[%s1140 + $0x18] sm:$0xff]
        %v1146 = vld [vmem:[%s1140 + $0x20] sm:$0xf]
        %v1147 = vld [vmem:[%s1140 + $0x24] sm:$0xff]
        %v1148 = vld [vmem:[%s1140 + $0x2c] sm:$0xf]
        %v1149 = vld [vmem:[%s1140 + $0x30] sm:$0xff]
        %v1150 = vld [vmem:[%s1140 + $0x38] sm:$0xf]
        %v1151 = vld [vmem:[%s1140 + $0x3c] sm:$0xff]
        %v1152 = vld [vmem:[%s1140 + $0x44] sm:$0xf]
        %v1153 = vld [vmem:[%s1140 + $0x48] sm:$0xff]
        %v1154 = vld [vmem:[%s1140 + $0x50] sm:$0xf]
        %v1155 = vld [vmem:[%s1140 + $0x54] sm:$0xff]
        %v1156 = vld [vmem:[%s1140 + $0x5c] sm:$0xf]
        %v1157 = vld [vmem:[%s1140 + $0x60] sm:$0xff]
        %v1158 = vld [vmem:[%s1140 + $0x68] sm:$0xf]
        %v1159 = vld [vmem:[%s1140 + $0x6c] sm:$0xff]
        %v1160 = vld [vmem:[%s1140 + $0x74] sm:$0xf]
        %v1161 = vld [vmem:[%s1140 + $0x78] sm:$0xff]
        %v1162 = vld [vmem:[%s1140 + $0x80] sm:$0xf]
        %v1163 = vld [vmem:[%s1140 + $0x84] sm:$0xff]
        %v1164 = vld [vmem:[%s1140 + $0x8c] sm:$0xf]
        %v1165 = vld [vmem:[%s1140 + $0x90] sm:$0xff]
        %v1166 = vld [vmem:[%s1140 + $0x98] sm:$0xf]
        %v1167 = vld [vmem:[%s1140 + $0x9c] sm:$0xff]
        %v1168 = vld [vmem:[%s1140 + $0xa4] sm:$0xf]
        %v1169 = vld [vmem:[%s1140 + $0xa8] sm:$0xff]
        %v1170 = vld [vmem:[%s1140 + $0xb0] sm:$0xf]
        %v1171 = vld [vmem:[%s1140 + $0xb4] sm:$0xff]
        %v1172 = vld [vmem:[%s1140 + $0xbc] sm:$0xf]
        %v1173 = vld [vmem:[%s1140 + $0xc0] sm:$0xff]
        %v1174 = vld [vmem:[%s1140 + $0xc8] sm:$0xf]
        %v1175 = vld [vmem:[%s1140 + $0xcc] sm:$0xff]
        %v1176 = vld [vmem:[%s1140 + $0xd4] sm:$0xf]
        %v1177 = vld [vmem:[%s1140 + $0xd8] sm:$0xff]
        %v1178 = vld [vmem:[%s1140 + $0xe0] sm:$0xf]
        %v1179 = vld [vmem:[%s1140 + $0xe4] sm:$0xff]
        %v1180 = vld [vmem:[%s1140 + $0xec] sm:$0xf]
        %s1181 = scalar_lea.vmem %s1, 192
        %v1182 = vld [vmem:[%s1181] sm:$0xf]
        %v1183 = vld [vmem:[%s1181 + $0x4] sm:$0xf]
        %v1184 = vld [vmem:[%s1181 + $0x8] sm:$0xf]
        %v1185 = vld [vmem:[%s1181 + $0xc] sm:$0xf]
        %v1186 = vld [vmem:[%s1181 + $0x10] sm:$0xf]
        %v1187 = vld [vmem:[%s1181 + $0x14] sm:$0xf]
        %v1188 = vld [vmem:[%s1181 + $0x18] sm:$0xf]
        %v1189 = vld [vmem:[%s1181 + $0x1c] sm:$0xf]
        %v1190 = vld [vmem:[%s1181 + $0x20] sm:$0xf]
        %v1191 = vld [vmem:[%s1181 + $0x24] sm:$0xf]
        %v1192 = vld [vmem:[%s1181 + $0x28] sm:$0xf]
        %v1193 = vld [vmem:[%s1181 + $0x2c] sm:$0xf]
        %v1194 = vld [vmem:[%s1181 + $0x30] sm:$0xf]
        %v1195 = vld [vmem:[%s1181 + $0x34] sm:$0xf]
        %v1196 = vld [vmem:[%s1181 + $0x38] sm:$0xf]
        %v1197 = vld [vmem:[%s1181 + $0x3c] sm:$0xf]
        %v1198 = vld [vmem:[%s1181 + $0x40] sm:$0xf]
        %v1199 = vld [vmem:[%s1181 + $0x44] sm:$0xf]
        %v1200 = vld [vmem:[%s1181 + $0x48] sm:$0xf]
        %v1201 = vld [vmem:[%s1181 + $0x4c] sm:$0xf]
        %v1202 = vld [vmem:[%s1181 + $0x50] sm:$0xf]
        %v1203 = vld [vmem:[%s1181 + $0x54] sm:$0xf]
        %v1204 = vld [vmem:[%s1181 + $0x58] sm:$0xf]
        %v1205 = vld [vmem:[%s1181 + $0x5c] sm:$0xf]
        %v1206 = vld [vmem:[%s1181 + $0x60] sm:$0xf]
        %v1207 = vld [vmem:[%s1181 + $0x64] sm:$0xf]
        %v1208 = vld [vmem:[%s1181 + $0x68] sm:$0xf]
        %v1209 = vld [vmem:[%s1181 + $0x6c] sm:$0xf]
        %v1210 = vld [vmem:[%s1181 + $0x70] sm:$0xf]
        %v1211 = vld [vmem:[%s1181 + $0x74] sm:$0xf]
        %v1212 = vld [vmem:[%s1181 + $0x78] sm:$0xf]
        %v1213 = vld [vmem:[%s1181 + $0x7c] sm:$0xf]
        %v1214 = vld [vmem:[%s1181 + $0x80] sm:$0xf]
        %v1215 = vld [vmem:[%s1181 + $0x84] sm:$0xf]
        %v1216 = vld [vmem:[%s1181 + $0x88] sm:$0xf]
        %v1217 = vld [vmem:[%s1181 + $0x8c] sm:$0xf]
        %v1218 = vld [vmem:[%s1181 + $0x90] sm:$0xf]
        %v1219 = vld [vmem:[%s1181 + $0x94] sm:$0xf]
        %v1220 = vld [vmem:[%s1181 + $0x98] sm:$0xf]
        %v1221 = vld [vmem:[%s1181 + $0x9c] sm:$0xf]
        %v1222 = vld [vmem:[%s1181 + $0xa0] sm:$0xf]
        %v1223 = vld [vmem:[%s1181 + $0xa4] sm:$0xf]
        %v1224 = vld [vmem:[%s1181 + $0xa8] sm:$0xf]
        %v1225 = vld [vmem:[%s1181 + $0xac] sm:$0xf]
        %v1226 = vld [vmem:[%s1181 + $0xb0] sm:$0xf]
        %v1227 = vld [vmem:[%s1181 + $0xb4] sm:$0xf]
        %v1228 = vld [vmem:[%s1181 + $0xb8] sm:$0xf]
        %v1229 = vld [vmem:[%s1181 + $0xbc] sm:$0xf]
        %v1270 = vunpack.c.l.b16 %v1141
        %v1271 = vunpack.c.h.b16 %v1141
        %v1272 = vunpack.c.l.b16 %v1142
        %v1273 = vunpack.c.l.b16 %v1143
        %v1274 = vunpack.c.h.b16 %v1143
        %v1275 = vunpack.c.l.b16 %v1144
        %v1276 = vunpack.c.l.b16 %v1145
        %v1277 = vunpack.c.h.b16 %v1145
        %v1278 = vunpack.c.l.b16 %v1146
        %v1279 = vunpack.c.l.b16 %v1147
        %v1280 = vunpack.c.h.b16 %v1147
        %v1281 = vunpack.c.l.b16 %v1148
        %v1282 = vunpack.c.l.b16 %v1149
        %v1283 = vunpack.c.h.b16 %v1149
        %v1284 = vunpack.c.l.b16 %v1150
        %v1285 = vunpack.c.l.b16 %v1151
        %v1286 = vunpack.c.h.b16 %v1151
        %v1287 = vunpack.c.l.b16 %v1152
        %v1288 = vunpack.c.l.b16 %v1153
        %v1289 = vunpack.c.h.b16 %v1153
        %v1290 = vunpack.c.l.b16 %v1154
        %v1291 = vunpack.c.l.b16 %v1155
        %v1292 = vunpack.c.h.b16 %v1155
        %v1293 = vunpack.c.l.b16 %v1156
        %v1294 = vunpack.c.l.b16 %v1157
        %v1295 = vunpack.c.h.b16 %v1157
        %v1296 = vunpack.c.l.b16 %v1158
        %v1297 = vunpack.c.l.b16 %v1159
        %v1298 = vunpack.c.h.b16 %v1159
        %v1299 = vunpack.c.l.b16 %v1160
        %v1300 = vunpack.c.l.b16 %v1161
        %v1301 = vunpack.c.h.b16 %v1161
        %v1302 = vunpack.c.l.b16 %v1162
        %v1303 = vunpack.c.l.b16 %v1163
        %v1304 = vunpack.c.h.b16 %v1163
        %v1305 = vunpack.c.l.b16 %v1164
        %v1306 = vunpack.c.l.b16 %v1165
        %v1307 = vunpack.c.h.b16 %v1165
        %v1308 = vunpack.c.l.b16 %v1166
        %v1309 = vunpack.c.l.b16 %v1167
        %v1310 = vunpack.c.h.b16 %v1167
        %v1311 = vunpack.c.l.b16 %v1168
        %v1312 = vunpack.c.l.b16 %v1169
        %v1313 = vunpack.c.h.b16 %v1169
        %v1314 = vunpack.c.l.b16 %v1170
        %v1315 = vunpack.c.l.b16 %v1171
        %v1316 = vunpack.c.h.b16 %v1171
        %v1317 = vunpack.c.l.b16 %v1172
        %v1318 = vunpack.c.l.b16 %v1173
        %v1319 = vunpack.c.h.b16 %v1173
        %v1320 = vunpack.c.l.b16 %v1174
        %v1321 = vunpack.c.l.b16 %v1175
        %v1322 = vunpack.c.h.b16 %v1175
        %v1323 = vunpack.c.l.b16 %v1176
        %v1324 = vunpack.c.l.b16 %v1177
        %v1325 = vunpack.c.h.b16 %v1177
        %v1326 = vunpack.c.l.b16 %v1178
        %v1327 = vunpack.c.l.b16 %v1179
        %v1328 = vunpack.c.h.b16 %v1179
        %v1329 = vunpack.c.l.b16 %v1180
        %v1330 = vpack.c.b16 %v1273, %v1270
        %v1331 = vpack.c.b16 %v1274, %v1271
        %v1332 = vpack.c.b16 %v1275, %v1272
        %v1333 = vpack.c.b16 %v1279, %v1276
        %v1334 = vpack.c.b16 %v1280, %v1277
        %v1335 = vpack.c.b16 %v1281, %v1278
        %v1336 = vpack.c.b16 %v1285, %v1282
        %v1337 = vpack.c.b16 %v1286, %v1283
        %v1338 = vpack.c.b16 %v1287, %v1284
        %v1339 = vpack.c.b16 %v1291, %v1288
        %v1340 = vpack.c.b16 %v1292, %v1289
        %v1341 = vpack.c.b16 %v1293, %v1290
        %v1342 = vpack.c.b16 %v1297, %v1294
        %v1343 = vpack.c.b16 %v1298, %v1295
        %v1344 = vpack.c.b16 %v1299, %v1296
        %v1345 = vpack.c.b16 %v1303, %v1300
        %v1346 = vpack.c.b16 %v1304, %v1301
        %v1347 = vpack.c.b16 %v1305, %v1302
        %v1348 = vpack.c.b16 %v1309, %v1306
        %v1349 = vpack.c.b16 %v1310, %v1307
        %v1350 = vpack.c.b16 %v1311, %v1308
        %v1351 = vpack.c.b16 %v1315, %v1312
        %v1352 = vpack.c.b16 %v1316, %v1313
        %v1353 = vpack.c.b16 %v1317, %v1314
        %v1354 = vpack.c.b16 %v1321, %v1318
        %v1355 = vpack.c.b16 %v1322, %v1319
        %v1356 = vpack.c.b16 %v1323, %v1320
        %v1357 = vpack.c.b16 %v1327, %v1324
        %v1358 = vpack.c.b16 %v1328, %v1325
        %v1359 = vpack.c.b16 %v1329, %v1326
        %v1438 = vunpack.c.l.b16 %v1182
        %v1439 = vunpack.c.l.b16 %v1183
        %v1440 = vunpack.c.l.b16 %v1184
        %v1441 = vunpack.c.l.b16 %v1185
        %v1442 = vunpack.c.l.b16 %v1186
        %v1443 = vunpack.c.l.b16 %v1187
        %v1444 = vunpack.c.l.b16 %v1188
        %v1445 = vunpack.c.l.b16 %v1189
        %v1446 = vunpack.c.l.b16 %v1190
        %v1447 = vunpack.c.l.b16 %v1191
        %v1448 = vunpack.c.l.b16 %v1192
        %v1449 = vunpack.c.l.b16 %v1193
        %v1450 = vunpack.c.l.b16 %v1194
        %v1451 = vunpack.c.l.b16 %v1195
        %v1452 = vunpack.c.l.b16 %v1196
        %v1453 = vunpack.c.l.b16 %v1197
        %v1454 = vunpack.c.l.b16 %v1198
        %v1455 = vunpack.c.l.b16 %v1199
        %v1456 = vunpack.c.l.b16 %v1200
        %v1457 = vunpack.c.l.b16 %v1201
        %v1458 = vunpack.c.l.b16 %v1202
        %v1459 = vunpack.c.l.b16 %v1203
        %v1460 = vunpack.c.l.b16 %v1204
        %v1461 = vunpack.c.l.b16 %v1205
        %v1462 = vunpack.c.l.b16 %v1206
        %v1463 = vunpack.c.l.b16 %v1207
        %v1464 = vunpack.c.l.b16 %v1208
        %v1465 = vunpack.c.l.b16 %v1209
        %v1466 = vunpack.c.l.b16 %v1210
        %v1467 = vunpack.c.l.b16 %v1211
        %v1468 = vunpack.c.l.b16 %v1212
        %v1469 = vunpack.c.l.b16 %v1213
        %v1470 = vunpack.c.l.b16 %v1214
        %v1471 = vunpack.c.l.b16 %v1215
        %v1472 = vunpack.c.l.b16 %v1216
        %v1473 = vunpack.c.l.b16 %v1217
        %v1474 = vunpack.c.l.b16 %v1218
        %v1475 = vunpack.c.l.b16 %v1219
        %v1476 = vunpack.c.l.b16 %v1220
        %v1477 = vunpack.c.l.b16 %v1221
        %v1478 = vunpack.c.l.b16 %v1222
        %v1479 = vunpack.c.l.b16 %v1223
        %v1480 = vunpack.c.l.b16 %v1224
        %v1481 = vunpack.c.l.b16 %v1225
        %v1482 = vunpack.c.l.b16 %v1226
        %v1483 = vunpack.c.l.b16 %v1227
        %v1484 = vunpack.c.l.b16 %v1228
        %v1485 = vunpack.c.l.b16 %v1229
        %v1486 = vpack.c.b16 %v1439, %v1438
        %v1487 = vpack.c.b16 %v1441, %v1440
        %v1488 = vpack.c.b16 %v1443, %v1442
        %v1489 = vpack.c.b16 %v1445, %v1444
        %v1490 = vpack.c.b16 %v1447, %v1446
        %v1491 = vpack.c.b16 %v1449, %v1448
        %v1492 = vpack.c.b16 %v1451, %v1450
        %v1493 = vpack.c.b16 %v1453, %v1452
        %v1494 = vpack.c.b16 %v1455, %v1454
        %v1495 = vpack.c.b16 %v1457, %v1456
        %v1496 = vpack.c.b16 %v1459, %v1458
        %v1497 = vpack.c.b16 %v1461, %v1460
        %v1498 = vpack.c.b16 %v1463, %v1462
        %v1499 = vpack.c.b16 %v1465, %v1464
        %v1500 = vpack.c.b16 %v1467, %v1466
        %v1501 = vpack.c.b16 %v1469, %v1468
        %v1502 = vpack.c.b16 %v1471, %v1470
        %v1503 = vpack.c.b16 %v1473, %v1472
        %v1504 = vpack.c.b16 %v1475, %v1474
        %v1505 = vpack.c.b16 %v1477, %v1476
        %v1506 = vpack.c.b16 %v1479, %v1478
        %v1507 = vpack.c.b16 %v1481, %v1480
        %v1508 = vpack.c.b16 %v1483, %v1482
        %v1509 = vpack.c.b16 %v1485, %v1484
        %1534 = vmatprep.subr.bf16.mxu0 0
        %1535 = vmatpush1.bf16.msra.mxu0 %v1493
        %1536 = vmatprep.subr.bf16.mxu0 0
        %1537 = vmatpush1.bf16.msra.mxu0 %v1492
        %1538 = vmatprep.subr.bf16.mxu0 0
        %1539 = vmatpush1.bf16.msra.mxu0 %v1491
        %1540 = vmatprep.subr.bf16.mxu0 0
        %1541 = vmatpush1.bf16.msra.mxu0 %v1490
        %1542 = vmatprep.subr.bf16.mxu0 0
        %1543 = vmatpush1.bf16.msra.mxu0 %v1489
        %1544 = vmatprep.subr.bf16.mxu0 0
        %1545 = vmatpush1.bf16.msra.mxu0 %v1488
        %1546 = vmatprep.subr.bf16.mxu0 0
        %1547 = vmatpush1.bf16.msra.mxu0 %v1487
        %1548 = vmatprep.subr.bf16.mxu0 0
        %1549 = vmatpush1.bf16.msra.mxu0 %v1486
        %1550 = vmatprep.subr.bf16.mxu0 0
        %1551 = vmatpush2.bf16.msra.mxu0 %v1501
        %1552 = vmatprep.subr.bf16.mxu0 0
        %1553 = vmatpush2.bf16.msra.mxu0 %v1500
        %1554 = vmatprep.subr.bf16.mxu0 0
        %1555 = vmatpush2.bf16.msra.mxu0 %v1499
        %1556 = vmatprep.subr.bf16.mxu0 0
        %1557 = vmatpush2.bf16.msra.mxu0 %v1498
        %1558 = vmatprep.subr.bf16.mxu0 0
        %1559 = vmatpush2.bf16.msra.mxu0 %v1497
        %1560 = vmatprep.subr.bf16.mxu0 0
        %1561 = vmatpush2.bf16.msra.mxu0 %v1496
        %1562 = vmatprep.subr.bf16.mxu0 0
        %1563 = vmatpush2.bf16.msra.mxu0 %v1495
        %1564 = vmatprep.subr.bf16.mxu0 0
        %1565 = vmatpush2.bf16.msra.mxu0 %v1494
        %1566 = vmatprep.mubr.bf16.mxu0 %v1331
        %1567 = vmatmul.mubr.bf16.gmra.mxu0 %v1330
        %v1568 = vpop.f32.mrf.mxu0
        %v1569 = vadd.f32 0.0, %v1568
        %v1570 = vpop.f32.mrf.mxu0
        %v1571 = vpop.f32.mrf.mxu0
        %v1572 = vadd.f32 0.0, %v1571
        %v1573 = vpop.f32.mrf.mxu0
        %1574 = vmatprep.mubr.bf16.mxu0 %v1334
        %1575 = vmatmul.mubr.bf16.gmra.mxu0 %v1333
        %v1576 = vpop.f32.mrf.mxu0
        %v1577 = vadd.f32 0.0, %v1576
        %v1578 = vpop.f32.mrf.mxu0
        %v1579 = vpop.f32.mrf.mxu0
        %v1580 = vadd.f32 0.0, %v1579
        %v1581 = vpop.f32.mrf.mxu0
        %1582 = vmatprep.mubr.bf16.mxu0 %v1337
        %1583 = vmatmul.mubr.bf16.gmra.mxu0 %v1336
        %v1584 = vpop.f32.mrf.mxu0
        %v1585 = vadd.f32 0.0, %v1584
        %v1586 = vpop.f32.mrf.mxu0
        %v1587 = vpop.f32.mrf.mxu0
        %v1588 = vadd.f32 0.0, %v1587
        %v1589 = vpop.f32.mrf.mxu0
        %1590 = vmatprep.mubr.bf16.mxu0 %v1340
        %1591 = vmatmul.mubr.bf16.gmra.mxu0 %v1339
        %v1592 = vpop.f32.mrf.mxu0
        %v1593 = vadd.f32 0.0, %v1592
        %v1594 = vpop.f32.mrf.mxu0
        %v1595 = vpop.f32.mrf.mxu0
        %v1596 = vadd.f32 0.0, %v1595
        %v1597 = vpop.f32.mrf.mxu0
        %1598 = vmatprep.mubr.bf16.mxu0 %v1343
        %1599 = vmatmul.mubr.bf16.gmra.mxu0 %v1342
        %v1600 = vpop.f32.mrf.mxu0
        %v1601 = vadd.f32 0.0, %v1600
        %v1602 = vpop.f32.mrf.mxu0
        %v1603 = vpop.f32.mrf.mxu0
        %v1604 = vadd.f32 0.0, %v1603
        %v1605 = vpop.f32.mrf.mxu0
        %1606 = vmatprep.mubr.bf16.mxu0 %v1346
        %1607 = vmatmul.mubr.bf16.gmra.mxu0 %v1345
        %v1608 = vpop.f32.mrf.mxu0
        %v1609 = vadd.f32 0.0, %v1608
        %v1610 = vpop.f32.mrf.mxu0
        %v1611 = vpop.f32.mrf.mxu0
        %v1612 = vadd.f32 0.0, %v1611
        %v1613 = vpop.f32.mrf.mxu0
        %1614 = vmatprep.mubr.bf16.mxu0 %v1349
        %1615 = vmatmul.mubr.bf16.gmra.mxu0 %v1348
        %v1616 = vpop.f32.mrf.mxu0
        %v1617 = vadd.f32 0.0, %v1616
        %v1618 = vpop.f32.mrf.mxu0
        %v1619 = vpop.f32.mrf.mxu0
        %v1620 = vadd.f32 0.0, %v1619
        %v1621 = vpop.f32.mrf.mxu0
        %1622 = vmatprep.mubr.bf16.mxu0 %v1352
        %1623 = vmatmul.mubr.bf16.gmra.mxu0 %v1351
        %v1624 = vpop.f32.mrf.mxu0
        %v1625 = vadd.f32 0.0, %v1624
        %v1626 = vpop.f32.mrf.mxu0
        %v1627 = vpop.f32.mrf.mxu0
        %v1628 = vadd.f32 0.0, %v1627
        %v1629 = vpop.f32.mrf.mxu0
        %1630 = vmatprep.mubr.bf16.mxu0 %v1355
        %1631 = vmatmul.mubr.bf16.gmra.mxu0 %v1354
        %v1632 = vpop.f32.mrf.mxu0
        %v1633 = vadd.f32 0.0, %v1632
        %v1634 = vpop.f32.mrf.mxu0
        %v1635 = vpop.f32.mrf.mxu0
        %v1636 = vadd.f32 0.0, %v1635
        %v1637 = vpop.f32.mrf.mxu0
        %1638 = vmatprep.mubr.bf16.mxu0 %v1358
        %1639 = vmatmul.mubr.bf16.gmra.mxu0 %v1357
        %v1640 = vpop.f32.mrf.mxu0
        %v1641 = vadd.f32 0.0, %v1640
        %v1642 = vpop.f32.mrf.mxu0
        %v1643 = vpop.f32.mrf.mxu0
        %v1644 = vadd.f32 0.0, %v1643
        %v1645 = vpop.f32.mrf.mxu0
        %1646 = vdwg.mxu0
        %1647 = vmatprep.subr.bf16.mxu0 0
        %1648 = vmatpush1.bf16.msra.mxu0 %v1509
        %1649 = vmatprep.subr.bf16.mxu0 0
        %1650 = vmatpush1.bf16.msra.mxu0 %v1508
        %1651 = vmatprep.subr.bf16.mxu0 0
        %1652 = vmatpush1.bf16.msra.mxu0 %v1507
        %1653 = vmatprep.subr.bf16.mxu0 0
        %1654 = vmatpush1.bf16.msra.mxu0 %v1506
        %1655 = vmatprep.subr.bf16.mxu0 0
        %1656 = vmatpush1.bf16.msra.mxu0 %v1505
        %1657 = vmatprep.subr.bf16.mxu0 0
        %1658 = vmatpush1.bf16.msra.mxu0 %v1504
        %1659 = vmatprep.subr.bf16.mxu0 0
        %1660 = vmatpush1.bf16.msra.mxu0 %v1503
        %1661 = vmatprep.subr.bf16.mxu0 0
        %1662 = vmatpush1.bf16.msra.mxu0 %v1502
        %1663 = vmatprep.subr.bf16.mxu0 0
        %1664 = vmatpush2.bf16.msra.mxu0 0
        %1665 = vmatprep.subr.bf16.mxu0 0
        %1666 = vmatpush2.bf16.msra.mxu0 0
        %1667 = vmatprep.subr.bf16.mxu0 0
        %1668 = vmatpush2.bf16.msra.mxu0 0
        %1669 = vmatprep.subr.bf16.mxu0 0
        %1670 = vmatpush2.bf16.msra.mxu0 0
        %1671 = vmatprep.subr.bf16.mxu0 0
        %1672 = vmatpush2.bf16.msra.mxu0 0
        %1673 = vmatprep.subr.bf16.mxu0 0
        %1674 = vmatpush2.bf16.msra.mxu0 0
        %1675 = vmatprep.subr.bf16.mxu0 0
        %1676 = vmatpush2.bf16.msra.mxu0 0
        %1677 = vmatprep.subr.bf16.mxu0 0
        %1678 = vmatpush2.bf16.msra.mxu0 0
        %1679 = vmatprep.mubr.bf16.mxu0 0
        %1680 = vmatmul.mubr.bf16.gmra.mxu0 %v1332
        %v1681 = vpop.f32.mrf.mxu0
        %v1682 = vadd.f32 %v1569, %v1681
        %v1683 = vpop.f32.mrf.mxu0
        %v1684 = vpop.f32.mrf.mxu0
        %v1685 = vadd.f32 %v1572, %v1684
        %v1686 = vpop.f32.mrf.mxu0
        %1687 = vmatprep.mubr.bf16.mxu0 0
        %1688 = vmatmul.mubr.bf16.gmra.mxu0 %v1335
        %v1689 = vpop.f32.mrf.mxu0
        %v1690 = vadd.f32 %v1577, %v1689
        %v1691 = vpop.f32.mrf.mxu0
        %v1692 = vpop.f32.mrf.mxu0
        %v1693 = vadd.f32 %v1580, %v1692
        %v1694 = vpop.f32.mrf.mxu0
        %1695 = vmatprep.mubr.bf16.mxu0 0
        %1696 = vmatmul.mubr.bf16.gmra.mxu0 %v1338
        %v1697 = vpop.f32.mrf.mxu0
        %v1698 = vadd.f32 %v1585, %v1697
        %v1699 = vpop.f32.mrf.mxu0
        %v1700 = vpop.f32.mrf.mxu0
        %v1701 = vadd.f32 %v1588, %v1700
        %v1702 = vpop.f32.mrf.mxu0
        %1703 = vmatprep.mubr.bf16.mxu0 0
        %1704 = vmatmul.mubr.bf16.gmra.mxu0 %v1341
        %v1705 = vpop.f32.mrf.mxu0
        %v1706 = vadd.f32 %v1593, %v1705
        %v1707 = vpop.f32.mrf.mxu0
        %v1708 = vpop.f32.mrf.mxu0
        %v1709 = vadd.f32 %v1596, %v1708
        %v1710 = vpop.f32.mrf.mxu0
        %1711 = vmatprep.mubr.bf16.mxu0 0
        %1712 = vmatmul.mubr.bf16.gmra.mxu0 %v1344
        %v1713 = vpop.f32.mrf.mxu0
        %v1714 = vadd.f32 %v1601, %v1713
        %v1715 = vpop.f32.mrf.mxu0
        %v1716 = vpop.f32.mrf.mxu0
        %v1717 = vadd.f32 %v1604, %v1716
        %v1718 = vpop.f32.mrf.mxu0
        %1719 = vmatprep.mubr.bf16.mxu0 0
        %1720 = vmatmul.mubr.bf16.gmra.mxu0 %v1347
        %v1721 = vpop.f32.mrf.mxu0
        %v1722 = vadd.f32 %v1609, %v1721
        %v1723 = vpop.f32.mrf.mxu0
        %v1724 = vpop.f32.mrf.mxu0
        %v1725 = vadd.f32 %v1612, %v1724
        %v1726 = vpop.f32.mrf.mxu0
        %1727 = vmatprep.mubr.bf16.mxu0 0
        %1728 = vmatmul.mubr.bf16.gmra.mxu0 %v1350
        %v1729 = vpop.f32.mrf.mxu0
        %v1730 = vadd.f32 %v1617, %v1729
        %v1731 = vpop.f32.mrf.mxu0
        %v1732 = vpop.f32.mrf.mxu0
        %v1733 = vadd.f32 %v1620, %v1732
        %v1734 = vpop.f32.mrf.mxu0
        %1735 = vmatprep.mubr.bf16.mxu0 0
        %1736 = vmatmul.mubr.bf16.gmra.mxu0 %v1353
        %v1737 = vpop.f32.mrf.mxu0
        %v1738 = vadd.f32 %v1625, %v1737
        %v1739 = vpop.f32.mrf.mxu0
        %v1740 = vpop.f32.mrf.mxu0
        %v1741 = vadd.f32 %v1628, %v1740
        %v1742 = vpop.f32.mrf.mxu0
        %1743 = vmatprep.mubr.bf16.mxu0 0
        %1744 = vmatmul.mubr.bf16.gmra.mxu0 %v1356
        %v1745 = vpop.f32.mrf.mxu0
        %v1746 = vadd.f32 %v1633, %v1745
        %v1747 = vpop.f32.mrf.mxu0
        %v1748 = vpop.f32.mrf.mxu0
        %v1749 = vadd.f32 %v1636, %v1748
        %v1750 = vpop.f32.mrf.mxu0
        %1751 = vmatprep.mubr.bf16.mxu0 0
        %1752 = vmatmul.mubr.bf16.gmra.mxu0 %v1359
        %v1753 = vpop.f32.mrf.mxu0
        %v1754 = vadd.f32 %v1641, %v1753
        %v1755 = vpop.f32.mrf.mxu0
        %v1756 = vpop.f32.mrf.mxu0
        %v1757 = vadd.f32 %v1644, %v1756
        %v1758 = vpop.f32.mrf.mxu0
        %1759 = vdwg.mxu0
        %v1800 = vunpack.c.l.b16 %v1052
        %v1801 = vunpack.c.h.b16 %v1052
        %v1802 = vunpack.c.l.b16 %v1053
        %v1803 = vunpack.c.l.b16 %v1054
        %v1804 = vunpack.c.h.b16 %v1054
        %v1805 = vunpack.c.l.b16 %v1055
        %v1806 = vunpack.c.l.b16 %v1056
        %v1807 = vunpack.c.h.b16 %v1056
        %v1808 = vunpack.c.l.b16 %v1057
        %v1809 = vunpack.c.l.b16 %v1058
        %v1810 = vunpack.c.h.b16 %v1058
        %v1811 = vunpack.c.l.b16 %v1059
        %v1812 = vunpack.c.l.b16 %v1060
        %v1813 = vunpack.c.h.b16 %v1060
        %v1814 = vunpack.c.l.b16 %v1061
        %v1815 = vunpack.c.l.b16 %v1062
        %v1816 = vunpack.c.h.b16 %v1062
        %v1817 = vunpack.c.l.b16 %v1063
        %v1818 = vunpack.c.l.b16 %v1064
        %v1819 = vunpack.c.h.b16 %v1064
        %v1820 = vunpack.c.l.b16 %v1065
        %v1821 = vunpack.c.l.b16 %v1066
        %v1822 = vunpack.c.h.b16 %v1066
        %v1823 = vunpack.c.l.b16 %v1067
        %v1824 = vunpack.c.l.b16 %v1068
        %v1825 = vunpack.c.h.b16 %v1068
        %v1826 = vunpack.c.l.b16 %v1069
        %v1827 = vunpack.c.l.b16 %v1070
        %v1828 = vunpack.c.h.b16 %v1070
        %v1829 = vunpack.c.l.b16 %v1071
        %v1830 = vunpack.c.l.b16 %v1072
        %v1831 = vunpack.c.h.b16 %v1072
        %v1832 = vunpack.c.l.b16 %v1073
        %v1833 = vunpack.c.l.b16 %v1074
        %v1834 = vunpack.c.h.b16 %v1074
        %v1835 = vunpack.c.l.b16 %v1075
        %v1836 = vunpack.c.l.b16 %v1076
        %v1837 = vunpack.c.h.b16 %v1076
        %v1838 = vunpack.c.l.b16 %v1077
        %v1839 = vunpack.c.l.b16 %v1078
        %v1840 = vunpack.c.h.b16 %v1078
        %v1841 = vunpack.c.l.b16 %v1079
        %v1842 = vunpack.c.l.b16 %v1080
        %v1843 = vunpack.c.h.b16 %v1080
        %v1844 = vunpack.c.l.b16 %v1081
        %v1845 = vunpack.c.l.b16 %v1082
        %v1846 = vunpack.c.h.b16 %v1082
        %v1847 = vunpack.c.l.b16 %v1083
        %v1848 = vunpack.c.l.b16 %v1084
        %v1849 = vunpack.c.h.b16 %v1084
        %v1850 = vunpack.c.l.b16 %v1085
        %v1851 = vunpack.c.l.b16 %v1086
        %v1852 = vunpack.c.h.b16 %v1086
        %v1853 = vunpack.c.l.b16 %v1087
        %v1854 = vunpack.c.l.b16 %v1088
        %v1855 = vunpack.c.h.b16 %v1088
        %v1856 = vunpack.c.l.b16 %v1089
        %v1857 = vunpack.c.l.b16 %v1090
        %v1858 = vunpack.c.h.b16 %v1090
        %v1859 = vunpack.c.l.b16 %v1091
        %v1860 = vpack.c.b16 %v1803, %v1800
        %v1861 = vpack.c.b16 %v1804, %v1801
        %v1862 = vpack.c.b16 %v1805, %v1802
        %v1863 = vpack.c.b16 %v1809, %v1806
        %v1864 = vpack.c.b16 %v1810, %v1807
        %v1865 = vpack.c.b16 %v1811, %v1808
        %v1866 = vpack.c.b16 %v1815, %v1812
        %v1867 = vpack.c.b16 %v1816, %v1813
        %v1868 = vpack.c.b16 %v1817, %v1814
        %v1869 = vpack.c.b16 %v1821, %v1818
        %v1870 = vpack.c.b16 %v1822, %v1819
        %v1871 = vpack.c.b16 %v1823, %v1820
        %v1872 = vpack.c.b16 %v1827, %v1824
        %v1873 = vpack.c.b16 %v1828, %v1825
        %v1874 = vpack.c.b16 %v1829, %v1826
        %v1875 = vpack.c.b16 %v1833, %v1830
        %v1876 = vpack.c.b16 %v1834, %v1831
        %v1877 = vpack.c.b16 %v1835, %v1832
        %v1878 = vpack.c.b16 %v1839, %v1836
        %v1879 = vpack.c.b16 %v1840, %v1837
        %v1880 = vpack.c.b16 %v1841, %v1838
        %v1881 = vpack.c.b16 %v1845, %v1842
        %v1882 = vpack.c.b16 %v1846, %v1843
        %v1883 = vpack.c.b16 %v1847, %v1844
        %v1884 = vpack.c.b16 %v1851, %v1848
        %v1885 = vpack.c.b16 %v1852, %v1849
        %v1886 = vpack.c.b16 %v1853, %v1850
        %v1887 = vpack.c.b16 %v1857, %v1854
        %v1888 = vpack.c.b16 %v1858, %v1855
        %v1889 = vpack.c.b16 %v1859, %v1856
        %v1968 = vunpack.c.l.b16 %v1092
        %v1969 = vunpack.c.l.b16 %v1093
        %v1970 = vunpack.c.l.b16 %v1094
        %v1971 = vunpack.c.l.b16 %v1095
        %v1972 = vunpack.c.l.b16 %v1096
        %v1973 = vunpack.c.l.b16 %v1097
        %v1974 = vunpack.c.l.b16 %v1098
        %v1975 = vunpack.c.l.b16 %v1099
        %v1976 = vunpack.c.l.b16 %v1100
        %v1977 = vunpack.c.l.b16 %v1101
        %v1978 = vunpack.c.l.b16 %v1102
        %v1979 = vunpack.c.l.b16 %v1103
        %v1980 = vunpack.c.l.b16 %v1104
        %v1981 = vunpack.c.l.b16 %v1105
        %v1982 = vunpack.c.l.b16 %v1106
        %v1983 = vunpack.c.l.b16 %v1107
        %v1984 = vunpack.c.l.b16 %v1108
        %v1985 = vunpack.c.l.b16 %v1109
        %v1986 = vunpack.c.l.b16 %v1110
        %v1987 = vunpack.c.l.b16 %v1111
        %v1988 = vunpack.c.l.b16 %v1112
        %v1989 = vunpack.c.l.b16 %v1113
        %v1990 = vunpack.c.l.b16 %v1114
        %v1991 = vunpack.c.l.b16 %v1115
        %v1992 = vunpack.c.l.b16 %v1116
        %v1993 = vunpack.c.l.b16 %v1117
        %v1994 = vunpack.c.l.b16 %v1118
        %v1995 = vunpack.c.l.b16 %v1119
        %v1996 = vunpack.c.l.b16 %v1120
        %v1997 = vunpack.c.l.b16 %v1121
        %v1998 = vunpack.c.l.b16 %v1122
        %v1999 = vunpack.c.l.b16 %v1123
        %v2000 = vunpack.c.l.b16 %v1124
        %v2001 = vunpack.c.l.b16 %v1125
        %v2002 = vunpack.c.l.b16 %v1126
        %v2003 = vunpack.c.l.b16 %v1127
        %v2004 = vunpack.c.l.b16 %v1128
        %v2005 = vunpack.c.l.b16 %v1129
        %v2006 = vunpack.c.l.b16 %v1130
        %v2007 = vunpack.c.l.b16 %v1131
        %v2008 = vunpack.c.l.b16 %v1132
        %v2009 = vunpack.c.l.b16 %v1133
        %v2010 = vunpack.c.l.b16 %v1134
        %v2011 = vunpack.c.l.b16 %v1135
        %v2012 = vunpack.c.l.b16 %v1136
        %v2013 = vunpack.c.l.b16 %v1137
        %v2014 = vunpack.c.l.b16 %v1138
        %v2015 = vunpack.c.l.b16 %v1139
        %v2016 = vpack.c.b16 %v1969, %v1968
        %v2017 = vpack.c.b16 %v1971, %v1970
        %v2018 = vpack.c.b16 %v1973, %v1972
        %v2019 = vpack.c.b16 %v1975, %v1974
        %v2020 = vpack.c.b16 %v1977, %v1976
        %v2021 = vpack.c.b16 %v1979, %v1978
        %v2022 = vpack.c.b16 %v1981, %v1980
        %v2023 = vpack.c.b16 %v1983, %v1982
        %v2024 = vpack.c.b16 %v1985, %v1984
        %v2025 = vpack.c.b16 %v1987, %v1986
        %v2026 = vpack.c.b16 %v1989, %v1988
        %v2027 = vpack.c.b16 %v1991, %v1990
        %v2028 = vpack.c.b16 %v1993, %v1992
        %v2029 = vpack.c.b16 %v1995, %v1994
        %v2030 = vpack.c.b16 %v1997, %v1996
        %v2031 = vpack.c.b16 %v1999, %v1998
        %v2032 = vpack.c.b16 %v2001, %v2000
        %v2033 = vpack.c.b16 %v2003, %v2002
        %v2034 = vpack.c.b16 %v2005, %v2004
        %v2035 = vpack.c.b16 %v2007, %v2006
        %v2036 = vpack.c.b16 %v2009, %v2008
        %v2037 = vpack.c.b16 %v2011, %v2010
        %v2038 = vpack.c.b16 %v2013, %v2012
        %v2039 = vpack.c.b16 %v2015, %v2014
        %2064 = vmatprep.subr.bf16.mxu0 0
        %2065 = vmatpush1.bf16.msra.mxu0 %v2023
        %2066 = vmatprep.subr.bf16.mxu0 0
        %2067 = vmatpush1.bf16.msra.mxu0 %v2022
        %2068 = vmatprep.subr.bf16.mxu0 0
        %2069 = vmatpush1.bf16.msra.mxu0 %v2021
        %2070 = vmatprep.subr.bf16.mxu0 0
        %2071 = vmatpush1.bf16.msra.mxu0 %v2020
        %2072 = vmatprep.subr.bf16.mxu0 0
        %2073 = vmatpush1.bf16.msra.mxu0 %v2019
        %2074 = vmatprep.subr.bf16.mxu0 0
        %2075 = vmatpush1.bf16.msra.mxu0 %v2018
        %2076 = vmatprep.subr.bf16.mxu0 0
        %2077 = vmatpush1.bf16.msra.mxu0 %v2017
        %2078 = vmatprep.subr.bf16.mxu0 0
        %2079 = vmatpush1.bf16.msra.mxu0 %v2016
        %2080 = vmatprep.subr.bf16.mxu0 0
        %2081 = vmatpush2.bf16.msra.mxu0 %v2031
        %2082 = vmatprep.subr.bf16.mxu0 0
        %2083 = vmatpush2.bf16.msra.mxu0 %v2030
        %2084 = vmatprep.subr.bf16.mxu0 0
        %2085 = vmatpush2.bf16.msra.mxu0 %v2029
        %2086 = vmatprep.subr.bf16.mxu0 0
        %2087 = vmatpush2.bf16.msra.mxu0 %v2028
        %2088 = vmatprep.subr.bf16.mxu0 0
        %2089 = vmatpush2.bf16.msra.mxu0 %v2027
        %2090 = vmatprep.subr.bf16.mxu0 0
        %2091 = vmatpush2.bf16.msra.mxu0 %v2026
        %2092 = vmatprep.subr.bf16.mxu0 0
        %2093 = vmatpush2.bf16.msra.mxu0 %v2025
        %2094 = vmatprep.subr.bf16.mxu0 0
        %2095 = vmatpush2.bf16.msra.mxu0 %v2024
        %2096 = vmatprep.mubr.bf16.mxu0 %v1861
        %2097 = vmatmul.mubr.bf16.gmra.mxu0 %v1860
        %v2098 = vpop.f32.mrf.mxu0
        %v2099 = vadd.f32 %v1682, %v2098
        %v2100 = vpop.f32.mrf.mxu0
        %v2101 = vpop.f32.mrf.mxu0
        %v2102 = vadd.f32 %v1685, %v2101
        %v2103 = vpop.f32.mrf.mxu0
        %2104 = vmatprep.mubr.bf16.mxu0 %v1864
        %2105 = vmatmul.mubr.bf16.gmra.mxu0 %v1863
        %v2106 = vpop.f32.mrf.mxu0
        %v2107 = vadd.f32 %v1690, %v2106
        %v2108 = vpop.f32.mrf.mxu0
        %v2109 = vpop.f32.mrf.mxu0
        %v2110 = vadd.f32 %v1693, %v2109
        %v2111 = vpop.f32.mrf.mxu0
        %2112 = vmatprep.mubr.bf16.mxu0 %v1867
        %2113 = vmatmul.mubr.bf16.gmra.mxu0 %v1866
        %v2114 = vpop.f32.mrf.mxu0
        %v2115 = vadd.f32 %v1698, %v2114
        %v2116 = vpop.f32.mrf.mxu0
        %v2117 = vpop.f32.mrf.mxu0
        %v2118 = vadd.f32 %v1701, %v2117
        %v2119 = vpop.f32.mrf.mxu0
        %2120 = vmatprep.mubr.bf16.mxu0 %v1870
        %2121 = vmatmul.mubr.bf16.gmra.mxu0 %v1869
        %v2122 = vpop.f32.mrf.mxu0
        %v2123 = vadd.f32 %v1706, %v2122
        %v2124 = vpop.f32.mrf.mxu0
        %v2125 = vpop.f32.mrf.mxu0
        %v2126 = vadd.f32 %v1709, %v2125
        %v2127 = vpop.f32.mrf.mxu0
        %2128 = vmatprep.mubr.bf16.mxu0 %v1873
        %2129 = vmatmul.mubr.bf16.gmra.mxu0 %v1872
        %v2130 = vpop.f32.mrf.mxu0
        %v2131 = vadd.f32 %v1714, %v2130
        %v2132 = vpop.f32.mrf.mxu0
        %v2133 = vpop.f32.mrf.mxu0
        %v2134 = vadd.f32 %v1717, %v2133
        %v2135 = vpop.f32.mrf.mxu0
        %2136 = vmatprep.mubr.bf16.mxu0 %v1876
        %2137 = vmatmul.mubr.bf16.gmra.mxu0 %v1875
        %v2138 = vpop.f32.mrf.mxu0
        %v2139 = vadd.f32 %v1722, %v2138
        %v2140 = vpop.f32.mrf.mxu0
        %v2141 = vpop.f32.mrf.mxu0
        %v2142 = vadd.f32 %v1725, %v2141
        %v2143 = vpop.f32.mrf.mxu0
        %2144 = vmatprep.mubr.bf16.mxu0 %v1879
        %2145 = vmatmul.mubr.bf16.gmra.mxu0 %v1878
        %v2146 = vpop.f32.mrf.mxu0
        %v2147 = vadd.f32 %v1730, %v2146
        %v2148 = vpop.f32.mrf.mxu0
        %v2149 = vpop.f32.mrf.mxu0
        %v2150 = vadd.f32 %v1733, %v2149
        %v2151 = vpop.f32.mrf.mxu0
        %2152 = vmatprep.mubr.bf16.mxu0 %v1882
        %2153 = vmatmul.mubr.bf16.gmra.mxu0 %v1881
        %v2154 = vpop.f32.mrf.mxu0
        %v2155 = vadd.f32 %v1738, %v2154
        %v2156 = vpop.f32.mrf.mxu0
        %v2157 = vpop.f32.mrf.mxu0
        %v2158 = vadd.f32 %v1741, %v2157
        %v2159 = vpop.f32.mrf.mxu0
        %2160 = vmatprep.mubr.bf16.mxu0 %v1885
        %2161 = vmatmul.mubr.bf16.gmra.mxu0 %v1884
        %v2162 = vpop.f32.mrf.mxu0
        %v2163 = vadd.f32 %v1746, %v2162
        %v2164 = vpop.f32.mrf.mxu0
        %v2165 = vpop.f32.mrf.mxu0
        %v2166 = vadd.f32 %v1749, %v2165
        %v2167 = vpop.f32.mrf.mxu0
        %2168 = vmatprep.mubr.bf16.mxu0 %v1888
        %2169 = vmatmul.mubr.bf16.gmra.mxu0 %v1887
        %v2170 = vpop.f32.mrf.mxu0
        %v2171 = vadd.f32 %v1754, %v2170
        %v2172 = vpop.f32.mrf.mxu0
        %v2173 = vpop.f32.mrf.mxu0
        %v2174 = vadd.f32 %v1757, %v2173
        %v2175 = vpop.f32.mrf.mxu0
        %2176 = vdwg.mxu0
        %2177 = vmatprep.subr.bf16.mxu0 0
        %2178 = vmatpush1.bf16.msra.mxu0 %v2039
        %2179 = vmatprep.subr.bf16.mxu0 0
        %2180 = vmatpush1.bf16.msra.mxu0 %v2038
        %2181 = vmatprep.subr.bf16.mxu0 0
        %2182 = vmatpush1.bf16.msra.mxu0 %v2037
        %2183 = vmatprep.subr.bf16.mxu0 0
        %2184 = vmatpush1.bf16.msra.mxu0 %v2036
        %2185 = vmatprep.subr.bf16.mxu0 0
        %2186 = vmatpush1.bf16.msra.mxu0 %v2035
        %2187 = vmatprep.subr.bf16.mxu0 0
        %2188 = vmatpush1.bf16.msra.mxu0 %v2034
        %2189 = vmatprep.subr.bf16.mxu0 0
        %2190 = vmatpush1.bf16.msra.mxu0 %v2033
        %2191 = vmatprep.subr.bf16.mxu0 0
        %2192 = vmatpush1.bf16.msra.mxu0 %v2032
        %2193 = vmatprep.subr.bf16.mxu0 0
        %2194 = vmatpush2.bf16.msra.mxu0 0
        %2195 = vmatprep.subr.bf16.mxu0 0
        %2196 = vmatpush2.bf16.msra.mxu0 0
        %2197 = vmatprep.subr.bf16.mxu0 0
        %2198 = vmatpush2.bf16.msra.mxu0 0
        %2199 = vmatprep.subr.bf16.mxu0 0
        %2200 = vmatpush2.bf16.msra.mxu0 0
        %2201 = vmatprep.subr.bf16.mxu0 0
        %2202 = vmatpush2.bf16.msra.mxu0 0
        %2203 = vmatprep.subr.bf16.mxu0 0
        %2204 = vmatpush2.bf16.msra.mxu0 0
        %2205 = vmatprep.subr.bf16.mxu0 0
        %2206 = vmatpush2.bf16.msra.mxu0 0
        %2207 = vmatprep.subr.bf16.mxu0 0
        %2208 = vmatpush2.bf16.msra.mxu0 0
        %2209 = vmatprep.mubr.bf16.mxu0 0
        %2210 = vmatmul.mubr.bf16.gmra.mxu0 %v1862
        %v2211 = vpop.f32.mrf.mxu0
        %v2212 = vadd.f32 %v2099, %v2211
        %v2213 = vpop.f32.mrf.mxu0
        %v2214 = vpop.f32.mrf.mxu0
        %v2215 = vadd.f32 %v2102, %v2214
        %v2216 = vpop.f32.mrf.mxu0
        %2217 = vmatprep.mubr.bf16.mxu0 0
        %2218 = vmatmul.mubr.bf16.gmra.mxu0 %v1865
        %v2219 = vpop.f32.mrf.mxu0
        %v2220 = vadd.f32 %v2107, %v2219
        %v2221 = vpop.f32.mrf.mxu0
        %v2222 = vpop.f32.mrf.mxu0
        %v2223 = vadd.f32 %v2110, %v2222
        %v2224 = vpop.f32.mrf.mxu0
        %2225 = vmatprep.mubr.bf16.mxu0 0
        %2226 = vmatmul.mubr.bf16.gmra.mxu0 %v1868
        %v2227 = vpop.f32.mrf.mxu0
        %v2228 = vadd.f32 %v2115, %v2227
        %v2229 = vpop.f32.mrf.mxu0
        %v2230 = vpop.f32.mrf.mxu0
        %v2231 = vadd.f32 %v2118, %v2230
        %v2232 = vpop.f32.mrf.mxu0
        %2233 = vmatprep.mubr.bf16.mxu0 0
        %2234 = vmatmul.mubr.bf16.gmra.mxu0 %v1871
        %v2235 = vpop.f32.mrf.mxu0
        %v2236 = vadd.f32 %v2123, %v2235
        %v2237 = vpop.f32.mrf.mxu0
        %v2238 = vpop.f32.mrf.mxu0
        %v2239 = vadd.f32 %v2126, %v2238
        %v2240 = vpop.f32.mrf.mxu0
        %2241 = vmatprep.mubr.bf16.mxu0 0
        %2242 = vmatmul.mubr.bf16.gmra.mxu0 %v1874
        %v2243 = vpop.f32.mrf.mxu0
        %v2244 = vadd.f32 %v2131, %v2243
        %v2245 = vpop.f32.mrf.mxu0
        %v2246 = vpop.f32.mrf.mxu0
        %v2247 = vadd.f32 %v2134, %v2246
        %v2248 = vpop.f32.mrf.mxu0
        %2249 = vmatprep.mubr.bf16.mxu0 0
        %2250 = vmatmul.mubr.bf16.gmra.mxu0 %v1877
        %v2251 = vpop.f32.mrf.mxu0
        %v2252 = vadd.f32 %v2139, %v2251
        %v2253 = vpop.f32.mrf.mxu0
        %v2254 = vpop.f32.mrf.mxu0
        %v2255 = vadd.f32 %v2142, %v2254
        %v2256 = vpop.f32.mrf.mxu0
        %2257 = vmatprep.mubr.bf16.mxu0 0
        %2258 = vmatmul.mubr.bf16.gmra.mxu0 %v1880
        %v2259 = vpop.f32.mrf.mxu0
        %v2260 = vadd.f32 %v2147, %v2259
        %v2261 = vpop.f32.mrf.mxu0
        %v2262 = vpop.f32.mrf.mxu0
        %v2263 = vadd.f32 %v2150, %v2262
        %v2264 = vpop.f32.mrf.mxu0
        %2265 = vmatprep.mubr.bf16.mxu0 0
        %2266 = vmatmul.mubr.bf16.gmra.mxu0 %v1883
        %v2267 = vpop.f32.mrf.mxu0
        %v2268 = vadd.f32 %v2155, %v2267
        %v2269 = vpop.f32.mrf.mxu0
        %v2270 = vpop.f32.mrf.mxu0
        %v2271 = vadd.f32 %v2158, %v2270
        %v2272 = vpop.f32.mrf.mxu0
        %2273 = vmatprep.mubr.bf16.mxu0 0
        %2274 = vmatmul.mubr.bf16.gmra.mxu0 %v1886
        %v2275 = vpop.f32.mrf.mxu0
        %v2276 = vadd.f32 %v2163, %v2275
        %v2277 = vpop.f32.mrf.mxu0
        %v2278 = vpop.f32.mrf.mxu0
        %v2279 = vadd.f32 %v2166, %v2278
        %v2280 = vpop.f32.mrf.mxu0
        %2281 = vmatprep.mubr.bf16.mxu0 0
        %2282 = vmatmul.mubr.bf16.gmra.mxu0 %v1889
        %v2283 = vpop.f32.mrf.mxu0
        %v2284 = vadd.f32 %v2171, %v2283
        %v2285 = vpop.f32.mrf.mxu0
        %v2286 = vpop.f32.mrf.mxu0
        %v2287 = vadd.f32 %v2174, %v2286
        %v2288 = vpop.f32.mrf.mxu0
        %2289 = vdwg.mxu0
        %s2290 = scalar_lea.vmem [#allocation4], 48
        %v2291 = vld [vmem:[%s2290] sm:$0xff]
        %v2292 = vld [vmem:[%s2290 + $0x8] sm:$0xf]
        %v2293 = vld [vmem:[%s2290 + $0xc] sm:$0xff]
        %v2294 = vld [vmem:[%s2290 + $0x14] sm:$0xf]
        %v2295 = vld [vmem:[%s2290 + $0x18] sm:$0xff]
        %v2296 = vld [vmem:[%s2290 + $0x20] sm:$0xf]
        %v2297 = vld [vmem:[%s2290 + $0x24] sm:$0xff]
        %v2298 = vld [vmem:[%s2290 + $0x2c] sm:$0xf]
        %v2299 = vld [vmem:[%s2290 + $0x30] sm:$0xff]
        %v2300 = vld [vmem:[%s2290 + $0x38] sm:$0xf]
        %v2301 = vld [vmem:[%s2290 + $0x3c] sm:$0xff]
        %v2302 = vld [vmem:[%s2290 + $0x44] sm:$0xf]
        %v2303 = vld [vmem:[%s2290 + $0x48] sm:$0xff]
        %v2304 = vld [vmem:[%s2290 + $0x50] sm:$0xf]
        %v2305 = vld [vmem:[%s2290 + $0x54] sm:$0xff]
        %v2306 = vld [vmem:[%s2290 + $0x5c] sm:$0xf]
        %v2307 = vld [vmem:[%s2290 + $0x60] sm:$0xff]
        %v2308 = vld [vmem:[%s2290 + $0x68] sm:$0xf]
        %v2309 = vld [vmem:[%s2290 + $0x6c] sm:$0xff]
        %v2310 = vld [vmem:[%s2290 + $0x74] sm:$0xf]
        %v2311 = vld [vmem:[%s2290 + $0x78] sm:$0xff]
        %v2312 = vld [vmem:[%s2290 + $0x80] sm:$0xf]
        %v2313 = vld [vmem:[%s2290 + $0x84] sm:$0xff]
        %v2314 = vld [vmem:[%s2290 + $0x8c] sm:$0xf]
        %v2315 = vld [vmem:[%s2290 + $0x90] sm:$0xff]
        %v2316 = vld [vmem:[%s2290 + $0x98] sm:$0xf]
        %v2317 = vld [vmem:[%s2290 + $0x9c] sm:$0xff]
        %v2318 = vld [vmem:[%s2290 + $0xa4] sm:$0xf]
        %v2319 = vld [vmem:[%s2290 + $0xa8] sm:$0xff]
        %v2320 = vld [vmem:[%s2290 + $0xb0] sm:$0xf]
        %v2321 = vld [vmem:[%s2290 + $0xb4] sm:$0xff]
        %v2322 = vld [vmem:[%s2290 + $0xbc] sm:$0xf]
        %v2323 = vld [vmem:[%s2290 + $0xc0] sm:$0xff]
        %v2324 = vld [vmem:[%s2290 + $0xc8] sm:$0xf]
        %v2325 = vld [vmem:[%s2290 + $0xcc] sm:$0xff]
        %v2326 = vld [vmem:[%s2290 + $0xd4] sm:$0xf]
        %v2327 = vld [vmem:[%s2290 + $0xd8] sm:$0xff]
        %v2328 = vld [vmem:[%s2290 + $0xe0] sm:$0xf]
        %v2329 = vld [vmem:[%s2290 + $0xe4] sm:$0xff]
        %v2330 = vld [vmem:[%s2290 + $0xec] sm:$0xf]
        %s2331 = scalar_lea.vmem %s1, 384
        %v2332 = vld [vmem:[%s2331] sm:$0xf]
        %v2333 = vld [vmem:[%s2331 + $0x4] sm:$0xf]
        %v2334 = vld [vmem:[%s2331 + $0x8] sm:$0xf]
        %v2335 = vld [vmem:[%s2331 + $0xc] sm:$0xf]
        %v2336 = vld [vmem:[%s2331 + $0x10] sm:$0xf]
        %v2337 = vld [vmem:[%s2331 + $0x14] sm:$0xf]
        %v2338 = vld [vmem:[%s2331 + $0x18] sm:$0xf]
        %v2339 = vld [vmem:[%s2331 + $0x1c] sm:$0xf]
        %v2340 = vld [vmem:[%s2331 + $0x20] sm:$0xf]
        %v2341 = vld [vmem:[%s2331 + $0x24] sm:$0xf]
        %v2342 = vld [vmem:[%s2331 + $0x28] sm:$0xf]
        %v2343 = vld [vmem:[%s2331 + $0x2c] sm:$0xf]
        %v2344 = vld [vmem:[%s2331 + $0x30] sm:$0xf]
        %v2345 = vld [vmem:[%s2331 + $0x34] sm:$0xf]
        %v2346 = vld [vmem:[%s2331 + $0x38] sm:$0xf]
        %v2347 = vld [vmem:[%s2331 + $0x3c] sm:$0xf]
        %v2348 = vld [vmem:[%s2331 + $0x40] sm:$0xf]
        %v2349 = vld [vmem:[%s2331 + $0x44] sm:$0xf]
        %v2350 = vld [vmem:[%s2331 + $0x48] sm:$0xf]
        %v2351 = vld [vmem:[%s2331 + $0x4c] sm:$0xf]
        %v2352 = vld [vmem:[%s2331 + $0x50] sm:$0xf]
        %v2353 = vld [vmem:[%s2331 + $0x54] sm:$0xf]
        %v2354 = vld [vmem:[%s2331 + $0x58] sm:$0xf]
        %v2355 = vld [vmem:[%s2331 + $0x5c] sm:$0xf]
        %v2356 = vld [vmem:[%s2331 + $0x60] sm:$0xf]
        %v2357 = vld [vmem:[%s2331 + $0x64] sm:$0xf]
        %v2358 = vld [vmem:[%s2331 + $0x68] sm:$0xf]
        %v2359 = vld [vmem:[%s2331 + $0x6c] sm:$0xf]
        %v2360 = vld [vmem:[%s2331 + $0x70] sm:$0xf]
        %v2361 = vld [vmem:[%s2331 + $0x74] sm:$0xf]
        %v2362 = vld [vmem:[%s2331 + $0x78] sm:$0xf]
        %v2363 = vld [vmem:[%s2331 + $0x7c] sm:$0xf]
        %v2364 = vld [vmem:[%s2331 + $0x80] sm:$0xf]
        %v2365 = vld [vmem:[%s2331 + $0x84] sm:$0xf]
        %v2366 = vld [vmem:[%s2331 + $0x88] sm:$0xf]
        %v2367 = vld [vmem:[%s2331 + $0x8c] sm:$0xf]
        %v2368 = vld [vmem:[%s2331 + $0x90] sm:$0xf]
        %v2369 = vld [vmem:[%s2331 + $0x94] sm:$0xf]
        %v2370 = vld [vmem:[%s2331 + $0x98] sm:$0xf]
        %v2371 = vld [vmem:[%s2331 + $0x9c] sm:$0xf]
        %v2372 = vld [vmem:[%s2331 + $0xa0] sm:$0xf]
        %v2373 = vld [vmem:[%s2331 + $0xa4] sm:$0xf]
        %v2374 = vld [vmem:[%s2331 + $0xa8] sm:$0xf]
        %v2375 = vld [vmem:[%s2331 + $0xac] sm:$0xf]
        %v2376 = vld [vmem:[%s2331 + $0xb0] sm:$0xf]
        %v2377 = vld [vmem:[%s2331 + $0xb4] sm:$0xf]
        %v2378 = vld [vmem:[%s2331 + $0xb8] sm:$0xf]
        %v2379 = vld [vmem:[%s2331 + $0xbc] sm:$0xf]
        %v2420 = vunpack.c.l.b16 %v2291
        %v2421 = vunpack.c.h.b16 %v2291
        %v2422 = vunpack.c.l.b16 %v2292
        %v2423 = vunpack.c.l.b16 %v2293
        %v2424 = vunpack.c.h.b16 %v2293
        %v2425 = vunpack.c.l.b16 %v2294
        %v2426 = vunpack.c.l.b16 %v2295
        %v2427 = vunpack.c.h.b16 %v2295
        %v2428 = vunpack.c.l.b16 %v2296
        %v2429 = vunpack.c.l.b16 %v2297
        %v2430 = vunpack.c.h.b16 %v2297
        %v2431 = vunpack.c.l.b16 %v2298
        %v2432 = vunpack.c.l.b16 %v2299
        %v2433 = vunpack.c.h.b16 %v2299
        %v2434 = vunpack.c.l.b16 %v2300
        %v2435 = vunpack.c.l.b16 %v2301
        %v2436 = vunpack.c.h.b16 %v2301
        %v2437 = vunpack.c.l.b16 %v2302
        %v2438 = vunpack.c.l.b16 %v2303
        %v2439 = vunpack.c.h.b16 %v2303
        %v2440 = vunpack.c.l.b16 %v2304
        %v2441 = vunpack.c.l.b16 %v2305
        %v2442 = vunpack.c.h.b16 %v2305
        %v2443 = vunpack.c.l.b16 %v2306
        %v2444 = vunpack.c.l.b16 %v2307
        %v2445 = vunpack.c.h.b16 %v2307
        %v2446 = vunpack.c.l.b16 %v2308
        %v2447 = vunpack.c.l.b16 %v2309
        %v2448 = vunpack.c.h.b16 %v2309
        %v2449 = vunpack.c.l.b16 %v2310
        %v2450 = vunpack.c.l.b16 %v2311
        %v2451 = vunpack.c.h.b16 %v2311
        %v2452 = vunpack.c.l.b16 %v2312
        %v2453 = vunpack.c.l.b16 %v2313
        %v2454 = vunpack.c.h.b16 %v2313
        %v2455 = vunpack.c.l.b16 %v2314
        %v2456 = vunpack.c.l.b16 %v2315
        %v2457 = vunpack.c.h.b16 %v2315
        %v2458 = vunpack.c.l.b16 %v2316
        %v2459 = vunpack.c.l.b16 %v2317
        %v2460 = vunpack.c.h.b16 %v2317
        %v2461 = vunpack.c.l.b16 %v2318
        %v2462 = vunpack.c.l.b16 %v2319
        %v2463 = vunpack.c.h.b16 %v2319
        %v2464 = vunpack.c.l.b16 %v2320
        %v2465 = vunpack.c.l.b16 %v2321
        %v2466 = vunpack.c.h.b16 %v2321
        %v2467 = vunpack.c.l.b16 %v2322
        %v2468 = vunpack.c.l.b16 %v2323
        %v2469 = vunpack.c.h.b16 %v2323
        %v2470 = vunpack.c.l.b16 %v2324
        %v2471 = vunpack.c.l.b16 %v2325
        %v2472 = vunpack.c.h.b16 %v2325
        %v2473 = vunpack.c.l.b16 %v2326
        %v2474 = vunpack.c.l.b16 %v2327
        %v2475 = vunpack.c.h.b16 %v2327
        %v2476 = vunpack.c.l.b16 %v2328
        %v2477 = vunpack.c.l.b16 %v2329
        %v2478 = vunpack.c.h.b16 %v2329
        %v2479 = vunpack.c.l.b16 %v2330
        %v2480 = vpack.c.b16 %v2423, %v2420
        %v2481 = vpack.c.b16 %v2424, %v2421
        %v2482 = vpack.c.b16 %v2425, %v2422
        %v2483 = vpack.c.b16 %v2429, %v2426
        %v2484 = vpack.c.b16 %v2430, %v2427
        %v2485 = vpack.c.b16 %v2431, %v2428
        %v2486 = vpack.c.b16 %v2435, %v2432
        %v2487 = vpack.c.b16 %v2436, %v2433
        %v2488 = vpack.c.b16 %v2437, %v2434
        %v2489 = vpack.c.b16 %v2441, %v2438
        %v2490 = vpack.c.b16 %v2442, %v2439
        %v2491 = vpack.c.b16 %v2443, %v2440
        %v2492 = vpack.c.b16 %v2447, %v2444
        %v2493 = vpack.c.b16 %v2448, %v2445
        %v2494 = vpack.c.b16 %v2449, %v2446
        %v2495 = vpack.c.b16 %v2453, %v2450
        %v2496 = vpack.c.b16 %v2454, %v2451
        %v2497 = vpack.c.b16 %v2455, %v2452
        %v2498 = vpack.c.b16 %v2459, %v2456
        %v2499 = vpack.c.b16 %v2460, %v2457
        %v2500 = vpack.c.b16 %v2461, %v2458
        %v2501 = vpack.c.b16 %v2465, %v2462
        %v2502 = vpack.c.b16 %v2466, %v2463
        %v2503 = vpack.c.b16 %v2467, %v2464
        %v2504 = vpack.c.b16 %v2471, %v2468
        %v2505 = vpack.c.b16 %v2472, %v2469
        %v2506 = vpack.c.b16 %v2473, %v2470
        %v2507 = vpack.c.b16 %v2477, %v2474
        %v2508 = vpack.c.b16 %v2478, %v2475
        %v2509 = vpack.c.b16 %v2479, %v2476
        %v2588 = vunpack.c.l.b16 %v2332
        %v2589 = vunpack.c.l.b16 %v2333
        %v2590 = vunpack.c.l.b16 %v2334
        %v2591 = vunpack.c.l.b16 %v2335
        %v2592 = vunpack.c.l.b16 %v2336
        %v2593 = vunpack.c.l.b16 %v2337
        %v2594 = vunpack.c.l.b16 %v2338
        %v2595 = vunpack.c.l.b16 %v2339
        %v2596 = vunpack.c.l.b16 %v2340
        %v2597 = vunpack.c.l.b16 %v2341
        %v2598 = vunpack.c.l.b16 %v2342
        %v2599 = vunpack.c.l.b16 %v2343
        %v2600 = vunpack.c.l.b16 %v2344
        %v2601 = vunpack.c.l.b16 %v2345
        %v2602 = vunpack.c.l.b16 %v2346
        %v2603 = vunpack.c.l.b16 %v2347
        %v2604 = vunpack.c.l.b16 %v2348
        %v2605 = vunpack.c.l.b16 %v2349
        %v2606 = vunpack.c.l.b16 %v2350
        %v2607 = vunpack.c.l.b16 %v2351
        %v2608 = vunpack.c.l.b16 %v2352
        %v2609 = vunpack.c.l.b16 %v2353
        %v2610 = vunpack.c.l.b16 %v2354
        %v2611 = vunpack.c.l.b16 %v2355
        %v2612 = vunpack.c.l.b16 %v2356
        %v2613 = vunpack.c.l.b16 %v2357
        %v2614 = vunpack.c.l.b16 %v2358
        %v2615 = vunpack.c.l.b16 %v2359
        %v2616 = vunpack.c.l.b16 %v2360
        %v2617 = vunpack.c.l.b16 %v2361
        %v2618 = vunpack.c.l.b16 %v2362
        %v2619 = vunpack.c.l.b16 %v2363
        %v2620 = vunpack.c.l.b16 %v2364
        %v2621 = vunpack.c.l.b16 %v2365
        %v2622 = vunpack.c.l.b16 %v2366
        %v2623 = vunpack.c.l.b16 %v2367
        %v2624 = vunpack.c.l.b16 %v2368
        %v2625 = vunpack.c.l.b16 %v2369
        %v2626 = vunpack.c.l.b16 %v2370
        %v2627 = vunpack.c.l.b16 %v2371
        %v2628 = vunpack.c.l.b16 %v2372
        %v2629 = vunpack.c.l.b16 %v2373
        %v2630 = vunpack.c.l.b16 %v2374
        %v2631 = vunpack.c.l.b16 %v2375
        %v2632 = vunpack.c.l.b16 %v2376
        %v2633 = vunpack.c.l.b16 %v2377
        %v2634 = vunpack.c.l.b16 %v2378
        %v2635 = vunpack.c.l.b16 %v2379
        %v2636 = vpack.c.b16 %v2589, %v2588
        %v2637 = vpack.c.b16 %v2591, %v2590
        %v2638 = vpack.c.b16 %v2593, %v2592
        %v2639 = vpack.c.b16 %v2595, %v2594
        %v2640 = vpack.c.b16 %v2597, %v2596
        %v2641 = vpack.c.b16 %v2599, %v2598
        %v2642 = vpack.c.b16 %v2601, %v2600
        %v2643 = vpack.c.b16 %v2603, %v2602
        %v2644 = vpack.c.b16 %v2605, %v2604
        %v2645 = vpack.c.b16 %v2607, %v2606
        %v2646 = vpack.c.b16 %v2609, %v2608
        %v2647 = vpack.c.b16 %v2611, %v2610
        %v2648 = vpack.c.b16 %v2613, %v2612
        %v2649 = vpack.c.b16 %v2615, %v2614
        %v2650 = vpack.c.b16 %v2617, %v2616
        %v2651 = vpack.c.b16 %v2619, %v2618
        %v2652 = vpack.c.b16 %v2621, %v2620
        %v2653 = vpack.c.b16 %v2623, %v2622
        %v2654 = vpack.c.b16 %v2625, %v2624
        %v2655 = vpack.c.b16 %v2627, %v2626
        %v2656 = vpack.c.b16 %v2629, %v2628
        %v2657 = vpack.c.b16 %v2631, %v2630
        %v2658 = vpack.c.b16 %v2633, %v2632
        %v2659 = vpack.c.b16 %v2635, %v2634
        %2684 = vmatprep.subr.bf16.mxu0 0
        %2685 = vmatpush1.bf16.msra.mxu0 %v2643
        %2686 = vmatprep.subr.bf16.mxu0 0
        %2687 = vmatpush1.bf16.msra.mxu0 %v2642
        %2688 = vmatprep.subr.bf16.mxu0 0
        %2689 = vmatpush1.bf16.msra.mxu0 %v2641
        %2690 = vmatprep.subr.bf16.mxu0 0
        %2691 = vmatpush1.bf16.msra.mxu0 %v2640
        %2692 = vmatprep.subr.bf16.mxu0 0
        %2693 = vmatpush1.bf16.msra.mxu0 %v2639
        %2694 = vmatprep.subr.bf16.mxu0 0
        %2695 = vmatpush1.bf16.msra.mxu0 %v2638
        %2696 = vmatprep.subr.bf16.mxu0 0
        %2697 = vmatpush1.bf16.msra.mxu0 %v2637
        %2698 = vmatprep.subr.bf16.mxu0 0
        %2699 = vmatpush1.bf16.msra.mxu0 %v2636
        %2700 = vmatprep.subr.bf16.mxu0 0
        %2701 = vmatpush2.bf16.msra.mxu0 %v2651
        %2702 = vmatprep.subr.bf16.mxu0 0
        %2703 = vmatpush2.bf16.msra.mxu0 %v2650
        %2704 = vmatprep.subr.bf16.mxu0 0
        %2705 = vmatpush2.bf16.msra.mxu0 %v2649
        %2706 = vmatprep.subr.bf16.mxu0 0
        %2707 = vmatpush2.bf16.msra.mxu0 %v2648
        %2708 = vmatprep.subr.bf16.mxu0 0
        %2709 = vmatpush2.bf16.msra.mxu0 %v2647
        %2710 = vmatprep.subr.bf16.mxu0 0
        %2711 = vmatpush2.bf16.msra.mxu0 %v2646
        %2712 = vmatprep.subr.bf16.mxu0 0
        %2713 = vmatpush2.bf16.msra.mxu0 %v2645
        %2714 = vmatprep.subr.bf16.mxu0 0
        %2715 = vmatpush2.bf16.msra.mxu0 %v2644
        %2716 = vmatprep.mubr.bf16.mxu0 %v2481
        %2717 = vmatmul.mubr.bf16.gmra.mxu0 %v2480
        %v2718 = vpop.f32.mrf.mxu0
        %v2719 = vadd.f32 0.0, %v2718
        %v2720 = vpop.f32.mrf.mxu0
        %v2721 = vpop.f32.mrf.mxu0
        %v2722 = vadd.f32 0.0, %v2721
        %v2723 = vpop.f32.mrf.mxu0
        %2724 = vmatprep.mubr.bf16.mxu0 %v2484
        %2725 = vmatmul.mubr.bf16.gmra.mxu0 %v2483
        %v2726 = vpop.f32.mrf.mxu0
        %v2727 = vadd.f32 0.0, %v2726
        %v2728 = vpop.f32.mrf.mxu0
        %v2729 = vpop.f32.mrf.mxu0
        %v2730 = vadd.f32 0.0, %v2729
        %v2731 = vpop.f32.mrf.mxu0
        %2732 = vmatprep.mubr.bf16.mxu0 %v2487
        %2733 = vmatmul.mubr.bf16.gmra.mxu0 %v2486
        %v2734 = vpop.f32.mrf.mxu0
        %v2735 = vadd.f32 0.0, %v2734
        %v2736 = vpop.f32.mrf.mxu0
        %v2737 = vpop.f32.mrf.mxu0
        %v2738 = vadd.f32 0.0, %v2737
        %v2739 = vpop.f32.mrf.mxu0
        %2740 = vmatprep.mubr.bf16.mxu0 %v2490
        %2741 = vmatmul.mubr.bf16.gmra.mxu0 %v2489
        %v2742 = vpop.f32.mrf.mxu0
        %v2743 = vadd.f32 0.0, %v2742
        %v2744 = vpop.f32.mrf.mxu0
        %v2745 = vpop.f32.mrf.mxu0
        %v2746 = vadd.f32 0.0, %v2745
        %v2747 = vpop.f32.mrf.mxu0
        %2748 = vmatprep.mubr.bf16.mxu0 %v2493
        %2749 = vmatmul.mubr.bf16.gmra.mxu0 %v2492
        %v2750 = vpop.f32.mrf.mxu0
        %v2751 = vadd.f32 0.0, %v2750
        %v2752 = vpop.f32.mrf.mxu0
        %v2753 = vpop.f32.mrf.mxu0
        %v2754 = vadd.f32 0.0, %v2753
        %v2755 = vpop.f32.mrf.mxu0
        %2756 = vmatprep.mubr.bf16.mxu0 %v2496
        %2757 = vmatmul.mubr.bf16.gmra.mxu0 %v2495
        %v2758 = vpop.f32.mrf.mxu0
        %v2759 = vadd.f32 0.0, %v2758
        %v2760 = vpop.f32.mrf.mxu0
        %v2761 = vpop.f32.mrf.mxu0
        %v2762 = vadd.f32 0.0, %v2761
        %v2763 = vpop.f32.mrf.mxu0
        %2764 = vmatprep.mubr.bf16.mxu0 %v2499
        %2765 = vmatmul.mubr.bf16.gmra.mxu0 %v2498
        %v2766 = vpop.f32.mrf.mxu0
        %v2767 = vadd.f32 0.0, %v2766
        %v2768 = vpop.f32.mrf.mxu0
        %v2769 = vpop.f32.mrf.mxu0
        %v2770 = vadd.f32 0.0, %v2769
        %v2771 = vpop.f32.mrf.mxu0
        %2772 = vmatprep.mubr.bf16.mxu0 %v2502
        %2773 = vmatmul.mubr.bf16.gmra.mxu0 %v2501
        %v2774 = vpop.f32.mrf.mxu0
        %v2775 = vadd.f32 0.0, %v2774
        %v2776 = vpop.f32.mrf.mxu0
        %v2777 = vpop.f32.mrf.mxu0
        %v2778 = vadd.f32 0.0, %v2777
        %v2779 = vpop.f32.mrf.mxu0
        %2780 = vmatprep.mubr.bf16.mxu0 %v2505
        %2781 = vmatmul.mubr.bf16.gmra.mxu0 %v2504
        %v2782 = vpop.f32.mrf.mxu0
        %v2783 = vadd.f32 0.0, %v2782
        %v2784 = vpop.f32.mrf.mxu0
        %v2785 = vpop.f32.mrf.mxu0
        %v2786 = vadd.f32 0.0, %v2785
        %v2787 = vpop.f32.mrf.mxu0
        %2788 = vmatprep.mubr.bf16.mxu0 %v2508
        %2789 = vmatmul.mubr.bf16.gmra.mxu0 %v2507
        %v2790 = vpop.f32.mrf.mxu0
        %v2791 = vadd.f32 0.0, %v2790
        %v2792 = vpop.f32.mrf.mxu0
        %v2793 = vpop.f32.mrf.mxu0
        %v2794 = vadd.f32 0.0, %v2793
        %v2795 = vpop.f32.mrf.mxu0
        %2796 = vdwg.mxu0
        %2797 = vmatprep.subr.bf16.mxu0 0
        %2798 = vmatpush1.bf16.msra.mxu0 %v2659
        %2799 = vmatprep.subr.bf16.mxu0 0
        %2800 = vmatpush1.bf16.msra.mxu0 %v2658
        %2801 = vmatprep.subr.bf16.mxu0 0
        %2802 = vmatpush1.bf16.msra.mxu0 %v2657
        %2803 = vmatprep.subr.bf16.mxu0 0
        %2804 = vmatpush1.bf16.msra.mxu0 %v2656
        %2805 = vmatprep.subr.bf16.mxu0 0
        %2806 = vmatpush1.bf16.msra.mxu0 %v2655
        %2807 = vmatprep.subr.bf16.mxu0 0
        %2808 = vmatpush1.bf16.msra.mxu0 %v2654
        %2809 = vmatprep.subr.bf16.mxu0 0
        %2810 = vmatpush1.bf16.msra.mxu0 %v2653
        %2811 = vmatprep.subr.bf16.mxu0 0
        %2812 = vmatpush1.bf16.msra.mxu0 %v2652
        %2813 = vmatprep.subr.bf16.mxu0 0
        %2814 = vmatpush2.bf16.msra.mxu0 0
        %2815 = vmatprep.subr.bf16.mxu0 0
        %2816 = vmatpush2.bf16.msra.mxu0 0
        %2817 = vmatprep.subr.bf16.mxu0 0
        %2818 = vmatpush2.bf16.msra.mxu0 0
        %2819 = vmatprep.subr.bf16.mxu0 0
        %2820 = vmatpush2.bf16.msra.mxu0 0
        %2821 = vmatprep.subr.bf16.mxu0 0
        %2822 = vmatpush2.bf16.msra.mxu0 0
        %2823 = vmatprep.subr.bf16.mxu0 0
        %2824 = vmatpush2.bf16.msra.mxu0 0
        %2825 = vmatprep.subr.bf16.mxu0 0
        %2826 = vmatpush2.bf16.msra.mxu0 0
        %2827 = vmatprep.subr.bf16.mxu0 0
        %2828 = vmatpush2.bf16.msra.mxu0 0
        %2829 = vmatprep.mubr.bf16.mxu0 0
        %2830 = vmatmul.mubr.bf16.gmra.mxu0 %v2482
        %v2831 = vpop.f32.mrf.mxu0
        %v2832 = vadd.f32 %v2719, %v2831
        %v2833 = vpop.f32.mrf.mxu0
        %v2834 = vpop.f32.mrf.mxu0
        %v2835 = vadd.f32 %v2722, %v2834
        %v2836 = vpop.f32.mrf.mxu0
        %2837 = vmatprep.mubr.bf16.mxu0 0
        %2838 = vmatmul.mubr.bf16.gmra.mxu0 %v2485
        %v2839 = vpop.f32.mrf.mxu0
        %v2840 = vadd.f32 %v2727, %v2839
        %v2841 = vpop.f32.mrf.mxu0
        %v2842 = vpop.f32.mrf.mxu0
        %v2843 = vadd.f32 %v2730, %v2842
        %v2844 = vpop.f32.mrf.mxu0
        %2845 = vmatprep.mubr.bf16.mxu0 0
        %2846 = vmatmul.mubr.bf16.gmra.mxu0 %v2488
        %v2847 = vpop.f32.mrf.mxu0
        %v2848 = vadd.f32 %v2735, %v2847
        %v2849 = vpop.f32.mrf.mxu0
        %v2850 = vpop.f32.mrf.mxu0
        %v2851 = vadd.f32 %v2738, %v2850
        %v2852 = vpop.f32.mrf.mxu0
        %2853 = vmatprep.mubr.bf16.mxu0 0
        %2854 = vmatmul.mubr.bf16.gmra.mxu0 %v2491
        %v2855 = vpop.f32.mrf.mxu0
        %v2856 = vadd.f32 %v2743, %v2855
        %v2857 = vpop.f32.mrf.mxu0
        %v2858 = vpop.f32.mrf.mxu0
        %v2859 = vadd.f32 %v2746, %v2858
        %v2860 = vpop.f32.mrf.mxu0
        %2861 = vmatprep.mubr.bf16.mxu0 0
        %2862 = vmatmul.mubr.bf16.gmra.mxu0 %v2494
        %v2863 = vpop.f32.mrf.mxu0
        %v2864 = vadd.f32 %v2751, %v2863
        %v2865 = vpop.f32.mrf.mxu0
        %v2866 = vpop.f32.mrf.mxu0
        %v2867 = vadd.f32 %v2754, %v2866
        %v2868 = vpop.f32.mrf.mxu0
        %2869 = vmatprep.mubr.bf16.mxu0 0
        %2870 = vmatmul.mubr.bf16.gmra.mxu0 %v2497
        %v2871 = vpop.f32.mrf.mxu0
        %v2872 = vadd.f32 %v2759, %v2871
        %v2873 = vpop.f32.mrf.mxu0
        %v2874 = vpop.f32.mrf.mxu0
        %v2875 = vadd.f32 %v2762, %v2874
        %v2876 = vpop.f32.mrf.mxu0
        %2877 = vmatprep.mubr.bf16.mxu0 0
        %2878 = vmatmul.mubr.bf16.gmra.mxu0 %v2500
        %v2879 = vpop.f32.mrf.mxu0
        %v2880 = vadd.f32 %v2767, %v2879
        %v2881 = vpop.f32.mrf.mxu0
        %v2882 = vpop.f32.mrf.mxu0
        %v2883 = vadd.f32 %v2770, %v2882
        %v2884 = vpop.f32.mrf.mxu0
        %2885 = vmatprep.mubr.bf16.mxu0 0
        %2886 = vmatmul.mubr.bf16.gmra.mxu0 %v2503
        %v2887 = vpop.f32.mrf.mxu0
        %v2888 = vadd.f32 %v2775, %v2887
        %v2889 = vpop.f32.mrf.mxu0
        %v2890 = vpop.f32.mrf.mxu0
        %v2891 = vadd.f32 %v2778, %v2890
        %v2892 = vpop.f32.mrf.mxu0
        %2893 = vmatprep.mubr.bf16.mxu0 0
        %2894 = vmatmul.mubr.bf16.gmra.mxu0 %v2506
        %v2895 = vpop.f32.mrf.mxu0
        %v2896 = vadd.f32 %v2783, %v2895
        %v2897 = vpop.f32.mrf.mxu0
        %v2898 = vpop.f32.mrf.mxu0
        %v2899 = vadd.f32 %v2786, %v2898
        %v2900 = vpop.f32.mrf.mxu0
        %2901 = vmatprep.mubr.bf16.mxu0 0
        %2902 = vmatmul.mubr.bf16.gmra.mxu0 %v2509
        %v2903 = vpop.f32.mrf.mxu0
        %v2904 = vadd.f32 %v2791, %v2903
        %v2905 = vpop.f32.mrf.mxu0
        %v2906 = vpop.f32.mrf.mxu0
        %v2907 = vadd.f32 %v2794, %v2906
        %v2908 = vpop.f32.mrf.mxu0
        %2909 = vdwg.mxu0
        %v2910 = vadd.f32 %v2212, %v2832
        %v2911 = vadd.f32 %v2215, %v2835
        %v2912 = vadd.f32 %v2220, %v2840
        %v2913 = vadd.f32 %v2223, %v2843
        %v2914 = vadd.f32 %v2228, %v2848
        %v2915 = vadd.f32 %v2231, %v2851
        %v2916 = vadd.f32 %v2236, %v2856
        %v2917 = vadd.f32 %v2239, %v2859
        %v2918 = vadd.f32 %v2244, %v2864
        %v2919 = vadd.f32 %v2247, %v2867
        %v2920 = vadd.f32 %v2252, %v2872
        %v2921 = vadd.f32 %v2255, %v2875
        %v2922 = vadd.f32 %v2260, %v2880
        %v2923 = vadd.f32 %v2263, %v2883
        %v2924 = vadd.f32 %v2268, %v2888
        %v2925 = vadd.f32 %v2271, %v2891
        %v2926 = vadd.f32 %v2276, %v2896
        %v2927 = vadd.f32 %v2279, %v2899
        %v2928 = vadd.f32 %v2284, %v2904
        %v2929 = vadd.f32 %v2287, %v2907
        %v2930 = vld [vmem:[%s3] sm:$0x1]
        %v2932 = vlaneseq
        %v2933 = vshrl.u32 %v2932, 7
        %v2934 = vsub.s32 0, %v2933
        %v2935 = vrot.slane %v2930, %v2934
        %v2937 = vmul.f32 %v2910, %v2935
        %v2938 = vmul.f32 %v2911, %v2935
        %v2939 = vmul.f32 %v2912, %v2935
        %v2940 = vmul.f32 %v2913, %v2935
        %v2941 = vmul.f32 %v2914, %v2935
        %v2942 = vmul.f32 %v2915, %v2935
        %v2943 = vmul.f32 %v2916, %v2935
        %v2944 = vmul.f32 %v2917, %v2935
        %v2945 = vmul.f32 %v2918, %v2935
        %v2946 = vmul.f32 %v2919, %v2935
        %v2947 = vmul.f32 %v2920, %v2935
        %v2948 = vmul.f32 %v2921, %v2935
        %v2949 = vmul.f32 %v2922, %v2935
        %v2950 = vmul.f32 %v2923, %v2935
        %v2951 = vmul.f32 %v2924, %v2935
        %v2952 = vmul.f32 %v2925, %v2935
        %v2953 = vmul.f32 %v2926, %v2935
        %v2954 = vmul.f32 %v2927, %v2935
        %v2955 = vmul.f32 %v2928, %v2935
        %v2956 = vmul.f32 %v2929, %v2935
        %v2957 = vld [vmem:[%s4] sm:$0x1]
        %v2959 = vlaneseq
        %v2960 = vshrl.u32 %v2959, 7
        %v2961 = vsub.s32 0, %v2960
        %v2962 = vrot.slane %v2957, %v2961
        %v2964 = vadd.f32 %v2937, %v2962
        %v2965 = vadd.f32 %v2938, %v2962
        %v2966 = vadd.f32 %v2939, %v2962
        %v2967 = vadd.f32 %v2940, %v2962
        %v2968 = vadd.f32 %v2941, %v2962
        %v2969 = vadd.f32 %v2942, %v2962
        %v2970 = vadd.f32 %v2943, %v2962
        %v2971 = vadd.f32 %v2944, %v2962
        %v2972 = vadd.f32 %v2945, %v2962
        %v2973 = vadd.f32 %v2946, %v2962
        %v2974 = vadd.f32 %v2947, %v2962
        %v2975 = vadd.f32 %v2948, %v2962
        %v2976 = vadd.f32 %v2949, %v2962
        %v2977 = vadd.f32 %v2950, %v2962
        %v2978 = vadd.f32 %v2951, %v2962
        %v2979 = vadd.f32 %v2952, %v2962
        %v2980 = vadd.f32 %v2953, %v2962
        %v2981 = vadd.f32 %v2954, %v2962
        %v2982 = vadd.f32 %v2955, %v2962
        %v2983 = vadd.f32 %v2956, %v2962
        %v2984 = vmax.f32 %v2964, 0.0
        %v2985 = vmax.f32 %v2965, 0.0
        %v2986 = vmax.f32 %v2966, 0.0
        %v2987 = vmax.f32 %v2967, 0.0
        %v2988 = vmax.f32 %v2968, 0.0
        %v2989 = vmax.f32 %v2969, 0.0
        %v2990 = vmax.f32 %v2970, 0.0
        %v2991 = vmax.f32 %v2971, 0.0
        %v2992 = vmax.f32 %v2972, 0.0
        %v2993 = vmax.f32 %v2973, 0.0
        %v2994 = vmax.f32 %v2974, 0.0
        %v2995 = vmax.f32 %v2975, 0.0
        %v2996 = vmax.f32 %v2976, 0.0
        %v2997 = vmax.f32 %v2977, 0.0
        %v2998 = vmax.f32 %v2978, 0.0
        %v2999 = vmax.f32 %v2979, 0.0
        %v3000 = vmax.f32 %v2980, 0.0
        %v3001 = vmax.f32 %v2981, 0.0
        %v3002 = vmax.f32 %v2982, 0.0
        %v3003 = vmax.f32 %v2983, 0.0
        %v3004 = vpack.c.bf16 %v2985, %v2984
        %v3005 = vpack.c.bf16 %v2987, %v2986
        %v3006 = vpack.c.bf16 %v2989, %v2988
        %v3007 = vpack.c.bf16 %v2991, %v2990
        %v3008 = vpack.c.bf16 %v2993, %v2992
        %v3009 = vpack.c.bf16 %v2995, %v2994
        %v3010 = vpack.c.bf16 %v2997, %v2996
        %v3011 = vpack.c.bf16 %v2999, %v2998
        %v3012 = vpack.c.bf16 %v3001, %v3000
        %v3013 = vpack.c.bf16 %v3003, %v3002
        %v3024 = vunpack.c.l.b16 %v3004
        %v3025 = vunpack.c.h.b16 %v3004
        %v3026 = vunpack.c.l.b16 %v3005
        %v3027 = vunpack.c.h.b16 %v3005
        %v3028 = vunpack.c.l.b16 %v3006
        %v3029 = vunpack.c.h.b16 %v3006
        %v3030 = vunpack.c.l.b16 %v3007
        %v3031 = vunpack.c.h.b16 %v3007
        %v3032 = vunpack.c.l.b16 %v3008
        %v3033 = vunpack.c.h.b16 %v3008
        %v3034 = vunpack.c.l.b16 %v3009
        %v3035 = vunpack.c.h.b16 %v3009
        %v3036 = vunpack.c.l.b16 %v3010
        %v3037 = vunpack.c.h.b16 %v3010
        %v3038 = vunpack.c.l.b16 %v3011
        %v3039 = vunpack.c.h.b16 %v3011
        %v3040 = vunpack.c.l.b16 %v3012
        %v3041 = vunpack.c.h.b16 %v3012
        %v3042 = vunpack.c.l.b16 %v3013
        %v3043 = vunpack.c.h.b16 %v3013
        %v3044 = vpack.c.b16 %v3024, %v3024
        %v3045 = vpack.c.b16 %v3025, %v3025
        %v3046 = vpack.c.b16 %v3026, %v3026
        %v3047 = vpack.c.b16 %v3027, %v3027
        %v3048 = vpack.c.b16 %v3028, %v3028
        %v3049 = vpack.c.b16 %v3029, %v3029
        %v3050 = vpack.c.b16 %v3030, %v3030
        %v3051 = vpack.c.b16 %v3031, %v3031
        %v3052 = vpack.c.b16 %v3032, %v3032
        %v3053 = vpack.c.b16 %v3033, %v3033
        %v3054 = vpack.c.b16 %v3034, %v3034
        %v3055 = vpack.c.b16 %v3035, %v3035
        %v3056 = vpack.c.b16 %v3036, %v3036
        %v3057 = vpack.c.b16 %v3037, %v3037
        %v3058 = vpack.c.b16 %v3038, %v3038
        %v3059 = vpack.c.b16 %v3039, %v3039
        %v3060 = vpack.c.b16 %v3040, %v3040
        %v3061 = vpack.c.b16 %v3041, %v3041
        %v3062 = vpack.c.b16 %v3042, %v3042
        %v3063 = vpack.c.b16 %v3043, %v3043
        %3084 = vst [vmem:[#allocation3] sm:$0xf] %v3044
        %3085 = vst [vmem:[#allocation3 + $0x4] sm:$0xf] %v3045
        %3086 = vst [vmem:[#allocation3 + $0x8] sm:$0xf] %v3046
        %3087 = vst [vmem:[#allocation3 + $0xc] sm:$0xf] %v3047
        %3088 = vst [vmem:[#allocation3 + $0x10] sm:$0xf] %v3048
        %3089 = vst [vmem:[#allocation3 + $0x14] sm:$0xf] %v3049
        %3090 = vst [vmem:[#allocation3 + $0x18] sm:$0xf] %v3050
        %3091 = vst [vmem:[#allocation3 + $0x1c] sm:$0xf] %v3051
        %3092 = vst [vmem:[#allocation3 + $0x20] sm:$0xf] %v3052
        %3093 = vst [vmem:[#allocation3 + $0x24] sm:$0xf] %v3053
        %3094 = vst [vmem:[#allocation3 + $0x28] sm:$0xf] %v3054
        %3095 = vst [vmem:[#allocation3 + $0x2c] sm:$0xf] %v3055
        %3096 = vst [vmem:[#allocation3 + $0x30] sm:$0xf] %v3056
        %3097 = vst [vmem:[#allocation3 + $0x34] sm:$0xf] %v3057
        %3098 = vst [vmem:[#allocation3 + $0x38] sm:$0xf] %v3058
        %3099 = vst [vmem:[#allocation3 + $0x3c] sm:$0xf] %v3059
        %3100 = vst [vmem:[#allocation3 + $0x40] sm:$0xf] %v3060
        %3101 = vst [vmem:[#allocation3 + $0x44] sm:$0xf] %v3061
        %3102 = vst [vmem:[#allocation3 + $0x48] sm:$0xf] %v3062
        %3103 = vst [vmem:[#allocation3 + $0x4c] sm:$0xf] %v3063
        // Predicated region
        $region65: #{basic_block_forward.1} parent=47 // pred_check
          %p3104 = pneg %p424
        $region66: #{basic_block_forward.1} parent=47 // pred_check_branch
          %3106 = sbr.rel (%p3104) target = $region68
        $region67: #{basic_block_forward.1} parent=47 // pred_region
          %3107 = vst [vmem:[#allocation3] sm:$0xf] 0
          %3108 = vst [vmem:[#allocation3 + $0x4] sm:$0xf] 0
        $region68: #{basic_block_forward.1} parent=47 // pred_fallthru
          _
        // Predicated region
        $region69: #{basic_block_forward.1} parent=47 // pred_check
          %p3109 = pneg %p464
        $region70: #{basic_block_forward.1} parent=47 // pred_check_branch
          %3111 = sbr.rel (%p3109) target = $region72
        $region71: #{basic_block_forward.1} parent=47 // pred_region
          %s3112 = scalar_lea.vmem [#allocation3], 72
          %3113 = vst [vmem:[%s3112] sm:$0xf] 0
          %3114 = vst [vmem:[%s3112 + $0x4] sm:$0xf] 0
        $region72: #{basic_block_forward.1} parent=47 // pred_fallthru
          _
        %v3115 = vld [vmem:[#allocation3] sm:$0xf]
        %v3116 = vld [vmem:[#allocation3 + $0x4] sm:$0xf]
        %v3117 = vld [vmem:[#allocation3 + $0x8] sm:$0xf]
        %v3118 = vld [vmem:[#allocation3 + $0xc] sm:$0xf]
        %v3119 = vld [vmem:[#allocation3 + $0x10] sm:$0xf]
        %v3120 = vld [vmem:[#allocation3 + $0x14] sm:$0xf]
        %v3121 = vld [vmem:[#allocation3 + $0x18] sm:$0xf]
        %v3122 = vld [vmem:[#allocation3 + $0x1c] sm:$0xf]
        %v3123 = vld [vmem:[#allocation3 + $0x20] sm:$0xf]
        %v3124 = vld [vmem:[#allocation3 + $0x24] sm:$0xf]
        %v3125 = vld [vmem:[#allocation3 + $0x28] sm:$0xf]
        %v3126 = vld [vmem:[#allocation3 + $0x2c] sm:$0xf]
        %v3127 = vld [vmem:[#allocation3 + $0x30] sm:$0xf]
        %v3128 = vld [vmem:[#allocation3 + $0x34] sm:$0xf]
        %v3129 = vld [vmem:[#allocation3 + $0x38] sm:$0xf]
        %v3130 = vld [vmem:[#allocation3 + $0x3c] sm:$0xf]
        %v3131 = vld [vmem:[#allocation3 + $0x40] sm:$0xf]
        %v3132 = vld [vmem:[#allocation3 + $0x44] sm:$0xf]
        %v3133 = vld [vmem:[#allocation3 + $0x48] sm:$0xf]
        %v3134 = vld [vmem:[#allocation3 + $0x4c] sm:$0xf]
        %3135 = vst [vmem:[#allocation4 + $0x4] sm:$0xf] %v3115
        %3136 = vst [vmem:[#allocation4 + $0x10] sm:$0xf] %v3116
        %3137 = vst [vmem:[#allocation4 + $0x1c] sm:$0xf] %v3117
        %3138 = vst [vmem:[#allocation4 + $0x28] sm:$0xf] %v3118
        %3139 = vst [vmem:[#allocation4 + $0x34] sm:$0xf] %v3119
        %3140 = vst [vmem:[#allocation4 + $0x40] sm:$0xf] %v3120
        %3141 = vst [vmem:[#allocation4 + $0x4c] sm:$0xf] %v3121
        %3142 = vst [vmem:[#allocation4 + $0x58] sm:$0xf] %v3122
        %3143 = vst [vmem:[#allocation4 + $0x64] sm:$0xf] %v3123
        %3144 = vst [vmem:[#allocation4 + $0x70] sm:$0xf] %v3124
        %3145 = vst [vmem:[#allocation4 + $0x7c] sm:$0xf] %v3125
        %3146 = vst [vmem:[#allocation4 + $0x88] sm:$0xf] %v3126
        %3147 = vst [vmem:[#allocation4 + $0x94] sm:$0xf] %v3127
        %3148 = vst [vmem:[#allocation4 + $0xa0] sm:$0xf] %v3128
        %3149 = vst [vmem:[#allocation4 + $0xac] sm:$0xf] %v3129
        %3150 = vst [vmem:[#allocation4 + $0xb8] sm:$0xf] %v3130
        %3151 = vst [vmem:[#allocation4 + $0xc4] sm:$0xf] %v3131
        %3152 = vst [vmem:[#allocation4 + $0xd0] sm:$0xf] %v3132
        %3153 = vst [vmem:[#allocation4 + $0xdc] sm:$0xf] %v3133
        %3154 = vst [vmem:[#allocation4 + $0xe8] sm:$0xf] %v3134
        %v3156 = vshrl.u32 %v3115, 16
        %v3158 = vrot.slane %v3156, 7
        %v3159 = vshll.u32 %v3115, 16
        %v3161 = vor.u32 %v3158, %v3159
        %v3162 = vrot.slane %v3158, 4
        %v3164 = vshrl.u32 %v3116, 16
        %v3166 = vrot.slane %v3164, 7
        %v3167 = vshll.u32 %v3116, 16
        %v3169 = vor.u32 %v3166, %v3167
        %v3170 = vsel %vm523, %v3162, %v3169
        %v3172 = vshrl.u32 %v3117, 16
        %v3174 = vrot.slane %v3172, 7
        %v3175 = vshll.u32 %v3117, 16
        %v3177 = vor.u32 %v3174, %v3175
        %v3178 = vrot.slane %v3174, 4
        %v3180 = vshrl.u32 %v3118, 16
        %v3182 = vrot.slane %v3180, 7
        %v3183 = vshll.u32 %v3118, 16
        %v3185 = vor.u32 %v3182, %v3183
        %v3186 = vsel %vm523, %v3178, %v3185
        %v3188 = vshrl.u32 %v3119, 16
        %v3190 = vrot.slane %v3188, 7
        %v3191 = vshll.u32 %v3119, 16
        %v3193 = vor.u32 %v3190, %v3191
        %v3194 = vrot.slane %v3190, 4
        %v3196 = vshrl.u32 %v3120, 16
        %v3198 = vrot.slane %v3196, 7
        %v3199 = vshll.u32 %v3120, 16
        %v3201 = vor.u32 %v3198, %v3199
        %v3202 = vsel %vm523, %v3194, %v3201
        %v3204 = vshrl.u32 %v3121, 16
        %v3206 = vrot.slane %v3204, 7
        %v3207 = vshll.u32 %v3121, 16
        %v3209 = vor.u32 %v3206, %v3207
        %v3210 = vrot.slane %v3206, 4
        %v3212 = vshrl.u32 %v3122, 16
        %v3214 = vrot.slane %v3212, 7
        %v3215 = vshll.u32 %v3122, 16
        %v3217 = vor.u32 %v3214, %v3215
        %v3218 = vsel %vm523, %v3210, %v3217
        %v3220 = vshrl.u32 %v3123, 16
        %v3222 = vrot.slane %v3220, 7
        %v3223 = vshll.u32 %v3123, 16
        %v3225 = vor.u32 %v3222, %v3223
        %v3226 = vrot.slane %v3222, 4
        %v3228 = vshrl.u32 %v3124, 16
        %v3230 = vrot.slane %v3228, 7
        %v3231 = vshll.u32 %v3124, 16
        %v3233 = vor.u32 %v3230, %v3231
        %v3234 = vsel %vm523, %v3226, %v3233
        %v3236 = vshrl.u32 %v3125, 16
        %v3238 = vrot.slane %v3236, 7
        %v3239 = vshll.u32 %v3125, 16
        %v3241 = vor.u32 %v3238, %v3239
        %v3242 = vrot.slane %v3238, 4
        %v3244 = vshrl.u32 %v3126, 16
        %v3246 = vrot.slane %v3244, 7
        %v3247 = vshll.u32 %v3126, 16
        %v3249 = vor.u32 %v3246, %v3247
        %v3250 = vsel %vm523, %v3242, %v3249
        %v3252 = vshrl.u32 %v3127, 16
        %v3254 = vrot.slane %v3252, 7
        %v3255 = vshll.u32 %v3127, 16
        %v3257 = vor.u32 %v3254, %v3255
        %v3258 = vrot.slane %v3254, 4
        %v3260 = vshrl.u32 %v3128, 16
        %v3262 = vrot.slane %v3260, 7
        %v3263 = vshll.u32 %v3128, 16
        %v3265 = vor.u32 %v3262, %v3263
        %v3266 = vsel %vm523, %v3258, %v3265
        %v3268 = vshrl.u32 %v3129, 16
        %v3270 = vrot.slane %v3268, 7
        %v3271 = vshll.u32 %v3129, 16
        %v3273 = vor.u32 %v3270, %v3271
        %v3274 = vrot.slane %v3270, 4
        %v3276 = vshrl.u32 %v3130, 16
        %v3278 = vrot.slane %v3276, 7
        %v3279 = vshll.u32 %v3130, 16
        %v3281 = vor.u32 %v3278, %v3279
        %v3282 = vsel %vm523, %v3274, %v3281
        %v3284 = vshrl.u32 %v3131, 16
        %v3286 = vrot.slane %v3284, 7
        %v3287 = vshll.u32 %v3131, 16
        %v3289 = vor.u32 %v3286, %v3287
        %v3290 = vrot.slane %v3286, 4
        %v3292 = vshrl.u32 %v3132, 16
        %v3294 = vrot.slane %v3292, 7
        %v3295 = vshll.u32 %v3132, 16
        %v3297 = vor.u32 %v3294, %v3295
        %v3298 = vsel %vm523, %v3290, %v3297
        %v3300 = vshrl.u32 %v3133, 16
        %v3302 = vrot.slane %v3300, 7
        %v3303 = vshll.u32 %v3133, 16
        %v3305 = vor.u32 %v3302, %v3303
        %v3306 = vrot.slane %v3302, 4
        %v3308 = vshrl.u32 %v3134, 16
        %v3310 = vrot.slane %v3308, 7
        %v3311 = vshll.u32 %v3134, 16
        %v3313 = vor.u32 %v3310, %v3311
        %v3314 = vsel %vm523, %v3306, %v3313
        %v3335 = vld [vmem:[#allocation4] sm:$0xf]
        %v3336 = vsel %vm742, %v3161, %v3335
        %3337 = vst [vmem:[#allocation4] sm:$0xf] %v3336
        %3338 = vst [vmem:[#allocation4 + $0xc] sm:$0xf] %v3170
        %v3339 = vld [vmem:[#allocation4 + $0x18] sm:$0xf]
        %v3340 = vsel %vm742, %v3177, %v3339
        %3341 = vst [vmem:[#allocation4 + $0x18] sm:$0xf] %v3340
        %3342 = vst [vmem:[#allocation4 + $0x24] sm:$0xf] %v3186
        %v3343 = vld [vmem:[#allocation4 + $0x30] sm:$0xf]
        %v3344 = vsel %vm742, %v3193, %v3343
        %3345 = vst [vmem:[#allocation4 + $0x30] sm:$0xf] %v3344
        %3346 = vst [vmem:[#allocation4 + $0x3c] sm:$0xf] %v3202
        %v3347 = vld [vmem:[#allocation4 + $0x48] sm:$0xf]
        %v3348 = vsel %vm742, %v3209, %v3347
        %3349 = vst [vmem:[#allocation4 + $0x48] sm:$0xf] %v3348
        %3350 = vst [vmem:[#allocation4 + $0x54] sm:$0xf] %v3218
        %v3351 = vld [vmem:[#allocation4 + $0x60] sm:$0xf]
        %v3352 = vsel %vm742, %v3225, %v3351
        %3353 = vst [vmem:[#allocation4 + $0x60] sm:$0xf] %v3352
        %3354 = vst [vmem:[#allocation4 + $0x6c] sm:$0xf] %v3234
        %v3355 = vld [vmem:[#allocation4 + $0x78] sm:$0xf]
        %v3356 = vsel %vm742, %v3241, %v3355
        %3357 = vst [vmem:[#allocation4 + $0x78] sm:$0xf] %v3356
        %3358 = vst [vmem:[#allocation4 + $0x84] sm:$0xf] %v3250
        %v3359 = vld [vmem:[#allocation4 + $0x90] sm:$0xf]
        %v3360 = vsel %vm742, %v3257, %v3359
        %3361 = vst [vmem:[#allocation4 + $0x90] sm:$0xf] %v3360
        %3362 = vst [vmem:[#allocation4 + $0x9c] sm:$0xf] %v3266
        %v3363 = vld [vmem:[#allocation4 + $0xa8] sm:$0xf]
        %v3364 = vsel %vm742, %v3273, %v3363
        %3365 = vst [vmem:[#allocation4 + $0xa8] sm:$0xf] %v3364
        %3366 = vst [vmem:[#allocation4 + $0xb4] sm:$0xf] %v3282
        %v3367 = vld [vmem:[#allocation4 + $0xc0] sm:$0xf]
        %v3368 = vsel %vm742, %v3289, %v3367
        %3369 = vst [vmem:[#allocation4 + $0xc0] sm:$0xf] %v3368
        %3370 = vst [vmem:[#allocation4 + $0xcc] sm:$0xf] %v3298
        %v3371 = vld [vmem:[#allocation4 + $0xd8] sm:$0xf]
        %v3372 = vsel %vm742, %v3305, %v3371
        %3373 = vst [vmem:[#allocation4 + $0xd8] sm:$0xf] %v3372
        %3374 = vst [vmem:[#allocation4 + $0xe4] sm:$0xf] %v3314
        %v3375 = vld [vmem:[#allocation4] sm:$0x1]
        %v3376 = vsel %vm792, 0, %v3375
        %3377 = vst [vmem:[#allocation4] sm:$0x1] %v3376
        %v3378 = vld [vmem:[#allocation4 + $0x18] sm:$0x1]
        %v3379 = vsel %vm792, 0, %v3378
        %3380 = vst [vmem:[#allocation4 + $0x18] sm:$0x1] %v3379
        %v3381 = vld [vmem:[#allocation4 + $0x30] sm:$0x1]
        %v3382 = vsel %vm792, 0, %v3381
        %3383 = vst [vmem:[#allocation4 + $0x30] sm:$0x1] %v3382
        %v3384 = vld [vmem:[#allocation4 + $0x48] sm:$0x1]
        %v3385 = vsel %vm792, 0, %v3384
        %3386 = vst [vmem:[#allocation4 + $0x48] sm:$0x1] %v3385
        %v3387 = vld [vmem:[#allocation4 + $0x60] sm:$0x1]
        %v3388 = vsel %vm792, 0, %v3387
        %3389 = vst [vmem:[#allocation4 + $0x60] sm:$0x1] %v3388
        %v3390 = vld [vmem:[#allocation4 + $0x78] sm:$0x1]
        %v3391 = vsel %vm792, 0, %v3390
        %3392 = vst [vmem:[#allocation4 + $0x78] sm:$0x1] %v3391
        %v3393 = vld [vmem:[#allocation4 + $0x90] sm:$0x1]
        %v3394 = vsel %vm792, 0, %v3393
        %3395 = vst [vmem:[#allocation4 + $0x90] sm:$0x1] %v3394
        %v3396 = vld [vmem:[#allocation4 + $0xa8] sm:$0x1]
        %v3397 = vsel %vm792, 0, %v3396
        %3398 = vst [vmem:[#allocation4 + $0xa8] sm:$0x1] %v3397
        %v3399 = vld [vmem:[#allocation4 + $0xc0] sm:$0x1]
        %v3400 = vsel %vm792, 0, %v3399
        %3401 = vst [vmem:[#allocation4 + $0xc0] sm:$0x1] %v3400
        %v3402 = vld [vmem:[#allocation4 + $0xd8] sm:$0x1]
        %v3403 = vsel %vm792, 0, %v3402
        %3404 = vst [vmem:[#allocation4 + $0xd8] sm:$0x1] %v3403
        %v3405 = vrot.slane %v3156, 4
        %v3406 = vrot.slane %v3159, 5
        %v3407 = vor.u32 %v3405, %v3406
        %v3408 = vrot.slane %v3407, 4
        %v3409 = vrot.slane %v3167, 5
        %v3410 = vsel %vm831, %v3408, %v3409
        %v3411 = vrot.slane %v3164, 4
        %v3412 = vor.u32 %v3411, %v3409
        %v3413 = vrot.slane %v3412, 4
        %v3414 = vrot.slane %v3172, 4
        %v3415 = vrot.slane %v3175, 5
        %v3416 = vor.u32 %v3414, %v3415
        %v3417 = vrot.slane %v3416, 4
        %v3418 = vrot.slane %v3183, 5
        %v3419 = vsel %vm831, %v3417, %v3418
        %v3420 = vrot.slane %v3180, 4
        %v3421 = vor.u32 %v3420, %v3418
        %v3422 = vrot.slane %v3421, 4
        %v3423 = vrot.slane %v3188, 4
        %v3424 = vrot.slane %v3191, 5
        %v3425 = vor.u32 %v3423, %v3424
        %v3426 = vrot.slane %v3425, 4
        %v3427 = vrot.slane %v3199, 5
        %v3428 = vsel %vm831, %v3426, %v3427
        %v3429 = vrot.slane %v3196, 4
        %v3430 = vor.u32 %v3429, %v3427
        %v3431 = vrot.slane %v3430, 4
        %v3432 = vrot.slane %v3204, 4
        %v3433 = vrot.slane %v3207, 5
        %v3434 = vor.u32 %v3432, %v3433
        %v3435 = vrot.slane %v3434, 4
        %v3436 = vrot.slane %v3215, 5
        %v3437 = vsel %vm831, %v3435, %v3436
        %v3438 = vrot.slane %v3212, 4
        %v3439 = vor.u32 %v3438, %v3436
        %v3440 = vrot.slane %v3439, 4
        %v3441 = vrot.slane %v3220, 4
        %v3442 = vrot.slane %v3223, 5
        %v3443 = vor.u32 %v3441, %v3442
        %v3444 = vrot.slane %v3443, 4
        %v3445 = vrot.slane %v3231, 5
        %v3446 = vsel %vm831, %v3444, %v3445
        %v3447 = vrot.slane %v3228, 4
        %v3448 = vor.u32 %v3447, %v3445
        %v3449 = vrot.slane %v3448, 4
        %v3450 = vrot.slane %v3236, 4
        %v3451 = vrot.slane %v3239, 5
        %v3452 = vor.u32 %v3450, %v3451
        %v3453 = vrot.slane %v3452, 4
        %v3454 = vrot.slane %v3247, 5
        %v3455 = vsel %vm831, %v3453, %v3454
        %v3456 = vrot.slane %v3244, 4
        %v3457 = vor.u32 %v3456, %v3454
        %v3458 = vrot.slane %v3457, 4
        %v3459 = vrot.slane %v3252, 4
        %v3460 = vrot.slane %v3255, 5
        %v3461 = vor.u32 %v3459, %v3460
        %v3462 = vrot.slane %v3461, 4
        %v3463 = vrot.slane %v3263, 5
        %v3464 = vsel %vm831, %v3462, %v3463
        %v3465 = vrot.slane %v3260, 4
        %v3466 = vor.u32 %v3465, %v3463
        %v3467 = vrot.slane %v3466, 4
        %v3468 = vrot.slane %v3268, 4
        %v3469 = vrot.slane %v3271, 5
        %v3470 = vor.u32 %v3468, %v3469
        %v3471 = vrot.slane %v3470, 4
        %v3472 = vrot.slane %v3279, 5
        %v3473 = vsel %vm831, %v3471, %v3472
        %v3474 = vrot.slane %v3276, 4
        %v3475 = vor.u32 %v3474, %v3472
        %v3476 = vrot.slane %v3475, 4
        %v3477 = vrot.slane %v3284, 4
        %v3478 = vrot.slane %v3287, 5
        %v3479 = vor.u32 %v3477, %v3478
        %v3480 = vrot.slane %v3479, 4
        %v3481 = vrot.slane %v3295, 5
        %v3482 = vsel %vm831, %v3480, %v3481
        %v3483 = vrot.slane %v3292, 4
        %v3484 = vor.u32 %v3483, %v3481
        %v3485 = vrot.slane %v3484, 4
        %v3486 = vrot.slane %v3300, 4
        %v3487 = vrot.slane %v3303, 5
        %v3488 = vor.u32 %v3486, %v3487
        %v3489 = vrot.slane %v3488, 4
        %v3490 = vrot.slane %v3311, 5
        %v3491 = vsel %vm831, %v3489, %v3490
        %v3492 = vrot.slane %v3308, 4
        %v3493 = vor.u32 %v3492, %v3490
        %v3494 = vrot.slane %v3493, 4
        %3515 = vst [vmem:[#allocation4 + $0x8] sm:$0xf] %v3410
        %v3516 = vld [vmem:[#allocation4 + $0x14] sm:$0xf]
        %v3517 = vsel %vm965, %v3413, %v3516
        %3518 = vst [vmem:[#allocation4 + $0x14] sm:$0xf] %v3517
        %3519 = vst [vmem:[#allocation4 + $0x20] sm:$0xf] %v3419
        %v3520 = vld [vmem:[#allocation4 + $0x2c] sm:$0xf]
        %v3521 = vsel %vm965, %v3422, %v3520
        %3522 = vst [vmem:[#allocation4 + $0x2c] sm:$0xf] %v3521
        %3523 = vst [vmem:[#allocation4 + $0x38] sm:$0xf] %v3428
        %v3524 = vld [vmem:[#allocation4 + $0x44] sm:$0xf]
        %v3525 = vsel %vm965, %v3431, %v3524
        %3526 = vst [vmem:[#allocation4 + $0x44] sm:$0xf] %v3525
        %3527 = vst [vmem:[#allocation4 + $0x50] sm:$0xf] %v3437
        %v3528 = vld [vmem:[#allocation4 + $0x5c] sm:$0xf]
        %v3529 = vsel %vm965, %v3440, %v3528
        %3530 = vst [vmem:[#allocation4 + $0x5c] sm:$0xf] %v3529
        %3531 = vst [vmem:[#allocation4 + $0x68] sm:$0xf] %v3446
        %v3532 = vld [vmem:[#allocation4 + $0x74] sm:$0xf]
        %v3533 = vsel %vm965, %v3449, %v3532
        %3534 = vst [vmem:[#allocation4 + $0x74] sm:$0xf] %v3533
        %3535 = vst [vmem:[#allocation4 + $0x80] sm:$0xf] %v3455
        %v3536 = vld [vmem:[#allocation4 + $0x8c] sm:$0xf]
        %v3537 = vsel %vm965, %v3458, %v3536
        %3538 = vst [vmem:[#allocation4 + $0x8c] sm:$0xf] %v3537
        %3539 = vst [vmem:[#allocation4 + $0x98] sm:$0xf] %v3464
        %v3540 = vld [vmem:[#allocation4 + $0xa4] sm:$0xf]
        %v3541 = vsel %vm965, %v3467, %v3540
        %3542 = vst [vmem:[#allocation4 + $0xa4] sm:$0xf] %v3541
        %3543 = vst [vmem:[#allocation4 + $0xb0] sm:$0xf] %v3473
        %v3544 = vld [vmem:[#allocation4 + $0xbc] sm:$0xf]
        %v3545 = vsel %vm965, %v3476, %v3544
        %3546 = vst [vmem:[#allocation4 + $0xbc] sm:$0xf] %v3545
        %3547 = vst [vmem:[#allocation4 + $0xc8] sm:$0xf] %v3482
        %v3548 = vld [vmem:[#allocation4 + $0xd4] sm:$0xf]
        %v3549 = vsel %vm965, %v3485, %v3548
        %3550 = vst [vmem:[#allocation4 + $0xd4] sm:$0xf] %v3549
        %3551 = vst [vmem:[#allocation4 + $0xe0] sm:$0xf] %v3491
        %v3552 = vld [vmem:[#allocation4 + $0xec] sm:$0xf]
        %v3553 = vsel %vm965, %v3494, %v3552
        %3554 = vst [vmem:[#allocation4 + $0xec] sm:$0xf] %v3553
        %v3555 = vld [vmem:[#allocation4 + $0x14] sm:$0x8]
        %v3556 = vsel %vm1015, 0, %v3555
        %3557 = vst [vmem:[#allocation4 + $0x14] sm:$0x8] %v3556
        %v3558 = vld [vmem:[#allocation4 + $0x2c] sm:$0x8]
        %v3559 = vsel %vm1015, 0, %v3558
        %3560 = vst [vmem:[#allocation4 + $0x2c] sm:$0x8] %v3559
        %v3561 = vld [vmem:[#allocation4 + $0x44] sm:$0x8]
        %v3562 = vsel %vm1015, 0, %v3561
        %3563 = vst [vmem:[#allocation4 + $0x44] sm:$0x8] %v3562
        %v3564 = vld [vmem:[#allocation4 + $0x5c] sm:$0x8]
        %v3565 = vsel %vm1015, 0, %v3564
        %3566 = vst [vmem:[#allocation4 + $0x5c] sm:$0x8] %v3565
        %v3567 = vld [vmem:[#allocation4 + $0x74] sm:$0x8]
        %v3568 = vsel %vm1015, 0, %v3567
        %3569 = vst [vmem:[#allocation4 + $0x74] sm:$0x8] %v3568
        %v3570 = vld [vmem:[#allocation4 + $0x8c] sm:$0x8]
        %v3571 = vsel %vm1015, 0, %v3570
        %3572 = vst [vmem:[#allocation4 + $0x8c] sm:$0x8] %v3571
        %v3573 = vld [vmem:[#allocation4 + $0xa4] sm:$0x8]
        %v3574 = vsel %vm1015, 0, %v3573
        %3575 = vst [vmem:[#allocation4 + $0xa4] sm:$0x8] %v3574
        %v3576 = vld [vmem:[#allocation4 + $0xbc] sm:$0x8]
        %v3577 = vsel %vm1015, 0, %v3576
        %3578 = vst [vmem:[#allocation4 + $0xbc] sm:$0x8] %v3577
        %v3579 = vld [vmem:[#allocation4 + $0xd4] sm:$0x8]
        %v3580 = vsel %vm1015, 0, %v3579
        %3581 = vst [vmem:[#allocation4 + $0xd4] sm:$0x8] %v3580
        %v3582 = vld [vmem:[#allocation4 + $0xec] sm:$0x8]
        %v3583 = vsel %vm1015, 0, %v3582
        %3584 = vst [vmem:[#allocation4 + $0xec] sm:$0x8] %v3583
        %v3585 = vld [vmem:[#allocation4] sm:$0xff]
        %v3586 = vld [vmem:[#allocation4 + $0x8] sm:$0xf]
        %v3587 = vld [vmem:[#allocation4 + $0xc] sm:$0xff]
        %v3588 = vld [vmem:[#allocation4 + $0x14] sm:$0xf]
        %v3589 = vld [vmem:[#allocation4 + $0x18] sm:$0xff]
        %v3590 = vld [vmem:[#allocation4 + $0x20] sm:$0xf]
        %v3591 = vld [vmem:[#allocation4 + $0x24] sm:$0xff]
        %v3592 = vld [vmem:[#allocation4 + $0x2c] sm:$0xf]
        %v3593 = vld [vmem:[#allocation4 + $0x30] sm:$0xff]
        %v3594 = vld [vmem:[#allocation4 + $0x38] sm:$0xf]
        %v3595 = vld [vmem:[#allocation4 + $0x3c] sm:$0xff]
        %v3596 = vld [vmem:[#allocation4 + $0x44] sm:$0xf]
        %v3597 = vld [vmem:[#allocation4 + $0x48] sm:$0xff]
        %v3598 = vld [vmem:[#allocation4 + $0x50] sm:$0xf]
        %v3599 = vld [vmem:[#allocation4 + $0x54] sm:$0xff]
        %v3600 = vld [vmem:[#allocation4 + $0x5c] sm:$0xf]
        %v3601 = vld [vmem:[#allocation4 + $0x60] sm:$0xff]
        %v3602 = vld [vmem:[#allocation4 + $0x68] sm:$0xf]
        %v3603 = vld [vmem:[#allocation4 + $0x6c] sm:$0xff]
        %v3604 = vld [vmem:[#allocation4 + $0x74] sm:$0xf]
        %v3605 = vld [vmem:[#allocation4 + $0x78] sm:$0xff]
        %v3606 = vld [vmem:[#allocation4 + $0x80] sm:$0xf]
        %v3607 = vld [vmem:[#allocation4 + $0x84] sm:$0xff]
        %v3608 = vld [vmem:[#allocation4 + $0x8c] sm:$0xf]
        %v3609 = vld [vmem:[#allocation4 + $0x90] sm:$0xff]
        %v3610 = vld [vmem:[#allocation4 + $0x98] sm:$0xf]
        %v3611 = vld [vmem:[#allocation4 + $0x9c] sm:$0xff]
        %v3612 = vld [vmem:[#allocation4 + $0xa4] sm:$0xf]
        %v3613 = vld [vmem:[#allocation4 + $0xa8] sm:$0xff]
        %v3614 = vld [vmem:[#allocation4 + $0xb0] sm:$0xf]
        %v3615 = vld [vmem:[#allocation4 + $0xb4] sm:$0xff]
        %v3616 = vld [vmem:[#allocation4 + $0xbc] sm:$0xf]
        %v3617 = vld [vmem:[%s2] sm:$0xf]
        %v3618 = vld [vmem:[%s2 + $0x4] sm:$0xf]
        %v3619 = vld [vmem:[%s2 + $0x8] sm:$0xf]
        %v3620 = vld [vmem:[%s2 + $0xc] sm:$0xf]
        %v3621 = vld [vmem:[%s2 + $0x10] sm:$0xf]
        %v3622 = vld [vmem:[%s2 + $0x14] sm:$0xf]
        %v3623 = vld [vmem:[%s2 + $0x18] sm:$0xf]
        %v3624 = vld [vmem:[%s2 + $0x1c] sm:$0xf]
        %v3625 = vld [vmem:[%s2 + $0x20] sm:$0xf]
        %v3626 = vld [vmem:[%s2 + $0x24] sm:$0xf]
        %v3627 = vld [vmem:[%s2 + $0x28] sm:$0xf]
        %v3628 = vld [vmem:[%s2 + $0x2c] sm:$0xf]
        %v3629 = vld [vmem:[%s2 + $0x30] sm:$0xf]
        %v3630 = vld [vmem:[%s2 + $0x34] sm:$0xf]
        %v3631 = vld [vmem:[%s2 + $0x38] sm:$0xf]
        %v3632 = vld [vmem:[%s2 + $0x3c] sm:$0xf]
        %v3633 = vld [vmem:[%s2 + $0x40] sm:$0xf]
        %v3634 = vld [vmem:[%s2 + $0x44] sm:$0xf]
        %v3635 = vld [vmem:[%s2 + $0x48] sm:$0xf]
        %v3636 = vld [vmem:[%s2 + $0x4c] sm:$0xf]
        %v3637 = vld [vmem:[%s2 + $0x50] sm:$0xf]
        %v3638 = vld [vmem:[%s2 + $0x54] sm:$0xf]
        %v3639 = vld [vmem:[%s2 + $0x58] sm:$0xf]
        %v3640 = vld [vmem:[%s2 + $0x5c] sm:$0xf]
        %v3641 = vld [vmem:[%s2 + $0x60] sm:$0xf]
        %v3642 = vld [vmem:[%s2 + $0x64] sm:$0xf]
        %v3643 = vld [vmem:[%s2 + $0x68] sm:$0xf]
        %v3644 = vld [vmem:[%s2 + $0x6c] sm:$0xf]
        %v3645 = vld [vmem:[%s2 + $0x70] sm:$0xf]
        %v3646 = vld [vmem:[%s2 + $0x74] sm:$0xf]
        %v3647 = vld [vmem:[%s2 + $0x78] sm:$0xf]
        %v3648 = vld [vmem:[%s2 + $0x7c] sm:$0xf]
        %v3649 = vld [vmem:[%s2 + $0x80] sm:$0xf]
        %v3650 = vld [vmem:[%s2 + $0x84] sm:$0xf]
        %v3651 = vld [vmem:[%s2 + $0x88] sm:$0xf]
        %v3652 = vld [vmem:[%s2 + $0x8c] sm:$0xf]
        %v3653 = vld [vmem:[%s2 + $0x90] sm:$0xf]
        %v3654 = vld [vmem:[%s2 + $0x94] sm:$0xf]
        %v3655 = vld [vmem:[%s2 + $0x98] sm:$0xf]
        %v3656 = vld [vmem:[%s2 + $0x9c] sm:$0xf]
        %v3657 = vld [vmem:[%s2 + $0xa0] sm:$0xf]
        %v3658 = vld [vmem:[%s2 + $0xa4] sm:$0xf]
        %v3659 = vld [vmem:[%s2 + $0xa8] sm:$0xf]
        %v3660 = vld [vmem:[%s2 + $0xac] sm:$0xf]
        %v3661 = vld [vmem:[%s2 + $0xb0] sm:$0xf]
        %v3662 = vld [vmem:[%s2 + $0xb4] sm:$0xf]
        %v3663 = vld [vmem:[%s2 + $0xb8] sm:$0xf]
        %v3664 = vld [vmem:[%s2 + $0xbc] sm:$0xf]
        %v3665 = vld [vmem:[%s1140] sm:$0xff]
        %v3666 = vld [vmem:[%s1140 + $0x8] sm:$0xf]
        %v3667 = vld [vmem:[%s1140 + $0xc] sm:$0xff]
        %v3668 = vld [vmem:[%s1140 + $0x14] sm:$0xf]
        %v3669 = vld [vmem:[%s1140 + $0x18] sm:$0xff]
        %v3670 = vld [vmem:[%s1140 + $0x20] sm:$0xf]
        %v3671 = vld [vmem:[%s1140 + $0x24] sm:$0xff]
        %v3672 = vld [vmem:[%s1140 + $0x2c] sm:$0xf]
        %v3673 = vld [vmem:[%s1140 + $0x30] sm:$0xff]
        %v3674 = vld [vmem:[%s1140 + $0x38] sm:$0xf]
        %v3675 = vld [vmem:[%s1140 + $0x3c] sm:$0xff]
        %v3676 = vld [vmem:[%s1140 + $0x44] sm:$0xf]
        %v3677 = vld [vmem:[%s1140 + $0x48] sm:$0xff]
        %v3678 = vld [vmem:[%s1140 + $0x50] sm:$0xf]
        %v3679 = vld [vmem:[%s1140 + $0x54] sm:$0xff]
        %v3680 = vld [vmem:[%s1140 + $0x5c] sm:$0xf]
        %v3681 = vld [vmem:[%s1140 + $0x60] sm:$0xff]
        %v3682 = vld [vmem:[%s1140 + $0x68] sm:$0xf]
        %v3683 = vld [vmem:[%s1140 + $0x6c] sm:$0xff]
        %v3684 = vld [vmem:[%s1140 + $0x74] sm:$0xf]
        %v3685 = vld [vmem:[%s1140 + $0x78] sm:$0xff]
        %v3686 = vld [vmem:[%s1140 + $0x80] sm:$0xf]
        %v3687 = vld [vmem:[%s1140 + $0x84] sm:$0xff]
        %v3688 = vld [vmem:[%s1140 + $0x8c] sm:$0xf]
        %v3689 = vld [vmem:[%s1140 + $0x90] sm:$0xff]
        %v3690 = vld [vmem:[%s1140 + $0x98] sm:$0xf]
        %v3691 = vld [vmem:[%s1140 + $0x9c] sm:$0xff]
        %v3692 = vld [vmem:[%s1140 + $0xa4] sm:$0xf]
        %v3693 = vld [vmem:[%s1140 + $0xa8] sm:$0xff]
        %v3694 = vld [vmem:[%s1140 + $0xb0] sm:$0xf]
        %v3695 = vld [vmem:[%s1140 + $0xb4] sm:$0xff]
        %v3696 = vld [vmem:[%s1140 + $0xbc] sm:$0xf]
        %s3697 = scalar_lea.vmem %s2, 192
        %v3698 = vld [vmem:[%s3697] sm:$0xf]
        %v3699 = vld [vmem:[%s3697 + $0x4] sm:$0xf]
        %v3700 = vld [vmem:[%s3697 + $0x8] sm:$0xf]
        %v3701 = vld [vmem:[%s3697 + $0xc] sm:$0xf]
        %v3702 = vld [vmem:[%s3697 + $0x10] sm:$0xf]
        %v3703 = vld [vmem:[%s3697 + $0x14] sm:$0xf]
        %v3704 = vld [vmem:[%s3697 + $0x18] sm:$0xf]
        %v3705 = vld [vmem:[%s3697 + $0x1c] sm:$0xf]
        %v3706 = vld [vmem:[%s3697 + $0x20] sm:$0xf]
        %v3707 = vld [vmem:[%s3697 + $0x24] sm:$0xf]
        %v3708 = vld [vmem:[%s3697 + $0x28] sm:$0xf]
        %v3709 = vld [vmem:[%s3697 + $0x2c] sm:$0xf]
        %v3710 = vld [vmem:[%s3697 + $0x30] sm:$0xf]
        %v3711 = vld [vmem:[%s3697 + $0x34] sm:$0xf]
        %v3712 = vld [vmem:[%s3697 + $0x38] sm:$0xf]
        %v3713 = vld [vmem:[%s3697 + $0x3c] sm:$0xf]
        %v3714 = vld [vmem:[%s3697 + $0x40] sm:$0xf]
        %v3715 = vld [vmem:[%s3697 + $0x44] sm:$0xf]
        %v3716 = vld [vmem:[%s3697 + $0x48] sm:$0xf]
        %v3717 = vld [vmem:[%s3697 + $0x4c] sm:$0xf]
        %v3718 = vld [vmem:[%s3697 + $0x50] sm:$0xf]
        %v3719 = vld [vmem:[%s3697 + $0x54] sm:$0xf]
        %v3720 = vld [vmem:[%s3697 + $0x58] sm:$0xf]
        %v3721 = vld [vmem:[%s3697 + $0x5c] sm:$0xf]
        %v3722 = vld [vmem:[%s3697 + $0x60] sm:$0xf]
        %v3723 = vld [vmem:[%s3697 + $0x64] sm:$0xf]
        %v3724 = vld [vmem:[%s3697 + $0x68] sm:$0xf]
        %v3725 = vld [vmem:[%s3697 + $0x6c] sm:$0xf]
        %v3726 = vld [vmem:[%s3697 + $0x70] sm:$0xf]
        %v3727 = vld [vmem:[%s3697 + $0x74] sm:$0xf]
        %v3728 = vld [vmem:[%s3697 + $0x78] sm:$0xf]
        %v3729 = vld [vmem:[%s3697 + $0x7c] sm:$0xf]
        %v3730 = vld [vmem:[%s3697 + $0x80] sm:$0xf]
        %v3731 = vld [vmem:[%s3697 + $0x84] sm:$0xf]
        %v3732 = vld [vmem:[%s3697 + $0x88] sm:$0xf]
        %v3733 = vld [vmem:[%s3697 + $0x8c] sm:$0xf]
        %v3734 = vld [vmem:[%s3697 + $0x90] sm:$0xf]
        %v3735 = vld [vmem:[%s3697 + $0x94] sm:$0xf]
        %v3736 = vld [vmem:[%s3697 + $0x98] sm:$0xf]
        %v3737 = vld [vmem:[%s3697 + $0x9c] sm:$0xf]
        %v3738 = vld [vmem:[%s3697 + $0xa0] sm:$0xf]
        %v3739 = vld [vmem:[%s3697 + $0xa4] sm:$0xf]
        %v3740 = vld [vmem:[%s3697 + $0xa8] sm:$0xf]
        %v3741 = vld [vmem:[%s3697 + $0xac] sm:$0xf]
        %v3742 = vld [vmem:[%s3697 + $0xb0] sm:$0xf]
        %v3743 = vld [vmem:[%s3697 + $0xb4] sm:$0xf]
        %v3744 = vld [vmem:[%s3697 + $0xb8] sm:$0xf]
        %v3745 = vld [vmem:[%s3697 + $0xbc] sm:$0xf]
        %v3778 = vunpack.c.l.b16 %v3665
        %v3779 = vunpack.c.h.b16 %v3665
        %v3780 = vunpack.c.l.b16 %v3666
        %v3781 = vunpack.c.l.b16 %v3667
        %v3782 = vunpack.c.h.b16 %v3667
        %v3783 = vunpack.c.l.b16 %v3668
        %v3784 = vunpack.c.l.b16 %v3669
        %v3785 = vunpack.c.h.b16 %v3669
        %v3786 = vunpack.c.l.b16 %v3670
        %v3787 = vunpack.c.l.b16 %v3671
        %v3788 = vunpack.c.h.b16 %v3671
        %v3789 = vunpack.c.l.b16 %v3672
        %v3790 = vunpack.c.l.b16 %v3673
        %v3791 = vunpack.c.h.b16 %v3673
        %v3792 = vunpack.c.l.b16 %v3674
        %v3793 = vunpack.c.l.b16 %v3675
        %v3794 = vunpack.c.h.b16 %v3675
        %v3795 = vunpack.c.l.b16 %v3676
        %v3796 = vunpack.c.l.b16 %v3677
        %v3797 = vunpack.c.h.b16 %v3677
        %v3798 = vunpack.c.l.b16 %v3678
        %v3799 = vunpack.c.l.b16 %v3679
        %v3800 = vunpack.c.h.b16 %v3679
        %v3801 = vunpack.c.l.b16 %v3680
        %v3802 = vunpack.c.l.b16 %v3681
        %v3803 = vunpack.c.h.b16 %v3681
        %v3804 = vunpack.c.l.b16 %v3682
        %v3805 = vunpack.c.l.b16 %v3683
        %v3806 = vunpack.c.h.b16 %v3683
        %v3807 = vunpack.c.l.b16 %v3684
        %v3808 = vunpack.c.l.b16 %v3685
        %v3809 = vunpack.c.h.b16 %v3685
        %v3810 = vunpack.c.l.b16 %v3686
        %v3811 = vunpack.c.l.b16 %v3687
        %v3812 = vunpack.c.h.b16 %v3687
        %v3813 = vunpack.c.l.b16 %v3688
        %v3814 = vunpack.c.l.b16 %v3689
        %v3815 = vunpack.c.h.b16 %v3689
        %v3816 = vunpack.c.l.b16 %v3690
        %v3817 = vunpack.c.l.b16 %v3691
        %v3818 = vunpack.c.h.b16 %v3691
        %v3819 = vunpack.c.l.b16 %v3692
        %v3820 = vunpack.c.l.b16 %v3693
        %v3821 = vunpack.c.h.b16 %v3693
        %v3822 = vunpack.c.l.b16 %v3694
        %v3823 = vunpack.c.l.b16 %v3695
        %v3824 = vunpack.c.h.b16 %v3695
        %v3825 = vunpack.c.l.b16 %v3696
        %v3826 = vpack.c.b16 %v3781, %v3778
        %v3827 = vpack.c.b16 %v3782, %v3779
        %v3828 = vpack.c.b16 %v3783, %v3780
        %v3829 = vpack.c.b16 %v3787, %v3784
        %v3830 = vpack.c.b16 %v3788, %v3785
        %v3831 = vpack.c.b16 %v3789, %v3786
        %v3832 = vpack.c.b16 %v3793, %v3790
        %v3833 = vpack.c.b16 %v3794, %v3791
        %v3834 = vpack.c.b16 %v3795, %v3792
        %v3835 = vpack.c.b16 %v3799, %v3796
        %v3836 = vpack.c.b16 %v3800, %v3797
        %v3837 = vpack.c.b16 %v3801, %v3798
        %v3838 = vpack.c.b16 %v3805, %v3802
        %v3839 = vpack.c.b16 %v3806, %v3803
        %v3840 = vpack.c.b16 %v3807, %v3804
        %v3841 = vpack.c.b16 %v3811, %v3808
        %v3842 = vpack.c.b16 %v3812, %v3809
        %v3843 = vpack.c.b16 %v3813, %v3810
        %v3844 = vpack.c.b16 %v3817, %v3814
        %v3845 = vpack.c.b16 %v3818, %v3815
        %v3846 = vpack.c.b16 %v3819, %v3816
        %v3847 = vpack.c.b16 %v3823, %v3820
        %v3848 = vpack.c.b16 %v3824, %v3821
        %v3849 = vpack.c.b16 %v3825, %v3822
        %v3922 = vunpack.c.l.b16 %v3698
        %v3923 = vunpack.c.l.b16 %v3699
        %v3924 = vunpack.c.l.b16 %v3700
        %v3925 = vunpack.c.l.b16 %v3701
        %v3926 = vunpack.c.l.b16 %v3702
        %v3927 = vunpack.c.l.b16 %v3703
        %v3928 = vunpack.c.l.b16 %v3704
        %v3929 = vunpack.c.l.b16 %v3705
        %v3930 = vunpack.c.l.b16 %v3706
        %v3931 = vunpack.c.l.b16 %v3707
        %v3932 = vunpack.c.l.b16 %v3708
        %v3933 = vunpack.c.l.b16 %v3709
        %v3934 = vunpack.c.l.b16 %v3710
        %v3935 = vunpack.c.l.b16 %v3711
        %v3936 = vunpack.c.l.b16 %v3712
        %v3937 = vunpack.c.l.b16 %v3713
        %v3938 = vunpack.c.l.b16 %v3714
        %v3939 = vunpack.c.l.b16 %v3715
        %v3940 = vunpack.c.l.b16 %v3716
        %v3941 = vunpack.c.l.b16 %v3717
        %v3942 = vunpack.c.l.b16 %v3718
        %v3943 = vunpack.c.l.b16 %v3719
        %v3944 = vunpack.c.l.b16 %v3720
        %v3945 = vunpack.c.l.b16 %v3721
        %v3946 = vunpack.c.l.b16 %v3722
        %v3947 = vunpack.c.l.b16 %v3723
        %v3948 = vunpack.c.l.b16 %v3724
        %v3949 = vunpack.c.l.b16 %v3725
        %v3950 = vunpack.c.l.b16 %v3726
        %v3951 = vunpack.c.l.b16 %v3727
        %v3952 = vunpack.c.l.b16 %v3728
        %v3953 = vunpack.c.l.b16 %v3729
        %v3954 = vunpack.c.l.b16 %v3730
        %v3955 = vunpack.c.l.b16 %v3731
        %v3956 = vunpack.c.l.b16 %v3732
        %v3957 = vunpack.c.l.b16 %v3733
        %v3958 = vunpack.c.l.b16 %v3734
        %v3959 = vunpack.c.l.b16 %v3735
        %v3960 = vunpack.c.l.b16 %v3736
        %v3961 = vunpack.c.l.b16 %v3737
        %v3962 = vunpack.c.l.b16 %v3738
        %v3963 = vunpack.c.l.b16 %v3739
        %v3964 = vunpack.c.l.b16 %v3740
        %v3965 = vunpack.c.l.b16 %v3741
        %v3966 = vunpack.c.l.b16 %v3742
        %v3967 = vunpack.c.l.b16 %v3743
        %v3968 = vunpack.c.l.b16 %v3744
        %v3969 = vunpack.c.l.b16 %v3745
        %v3970 = vpack.c.b16 %v3923, %v3922
        %v3971 = vpack.c.b16 %v3925, %v3924
        %v3972 = vpack.c.b16 %v3927, %v3926
        %v3973 = vpack.c.b16 %v3929, %v3928
        %v3974 = vpack.c.b16 %v3931, %v3930
        %v3975 = vpack.c.b16 %v3933, %v3932
        %v3976 = vpack.c.b16 %v3935, %v3934
        %v3977 = vpack.c.b16 %v3937, %v3936
        %v3978 = vpack.c.b16 %v3939, %v3938
        %v3979 = vpack.c.b16 %v3941, %v3940
        %v3980 = vpack.c.b16 %v3943, %v3942
        %v3981 = vpack.c.b16 %v3945, %v3944
        %v3982 = vpack.c.b16 %v3947, %v3946
        %v3983 = vpack.c.b16 %v3949, %v3948
        %v3984 = vpack.c.b16 %v3951, %v3950
        %v3985 = vpack.c.b16 %v3953, %v3952
        %v3986 = vpack.c.b16 %v3955, %v3954
        %v3987 = vpack.c.b16 %v3957, %v3956
        %v3988 = vpack.c.b16 %v3959, %v3958
        %v3989 = vpack.c.b16 %v3961, %v3960
        %v3990 = vpack.c.b16 %v3963, %v3962
        %v3991 = vpack.c.b16 %v3965, %v3964
        %v3992 = vpack.c.b16 %v3967, %v3966
        %v3993 = vpack.c.b16 %v3969, %v3968
        %4018 = vmatprep.subr.bf16.mxu0 0
        %4019 = vmatpush1.bf16.msra.mxu0 %v3977
        %4020 = vmatprep.subr.bf16.mxu0 0
        %4021 = vmatpush1.bf16.msra.mxu0 %v3976
        %4022 = vmatprep.subr.bf16.mxu0 0
        %4023 = vmatpush1.bf16.msra.mxu0 %v3975
        %4024 = vmatprep.subr.bf16.mxu0 0
        %4025 = vmatpush1.bf16.msra.mxu0 %v3974
        %4026 = vmatprep.subr.bf16.mxu0 0
        %4027 = vmatpush1.bf16.msra.mxu0 %v3973
        %4028 = vmatprep.subr.bf16.mxu0 0
        %4029 = vmatpush1.bf16.msra.mxu0 %v3972
        %4030 = vmatprep.subr.bf16.mxu0 0
        %4031 = vmatpush1.bf16.msra.mxu0 %v3971
        %4032 = vmatprep.subr.bf16.mxu0 0
        %4033 = vmatpush1.bf16.msra.mxu0 %v3970
        %4034 = vmatprep.subr.bf16.mxu0 0
        %4035 = vmatpush2.bf16.msra.mxu0 %v3985
        %4036 = vmatprep.subr.bf16.mxu0 0
        %4037 = vmatpush2.bf16.msra.mxu0 %v3984
        %4038 = vmatprep.subr.bf16.mxu0 0
        %4039 = vmatpush2.bf16.msra.mxu0 %v3983
        %4040 = vmatprep.subr.bf16.mxu0 0
        %4041 = vmatpush2.bf16.msra.mxu0 %v3982
        %4042 = vmatprep.subr.bf16.mxu0 0
        %4043 = vmatpush2.bf16.msra.mxu0 %v3981
        %4044 = vmatprep.subr.bf16.mxu0 0
        %4045 = vmatpush2.bf16.msra.mxu0 %v3980
        %4046 = vmatprep.subr.bf16.mxu0 0
        %4047 = vmatpush2.bf16.msra.mxu0 %v3979
        %4048 = vmatprep.subr.bf16.mxu0 0
        %4049 = vmatpush2.bf16.msra.mxu0 %v3978
        %4050 = vmatprep.mubr.bf16.mxu0 %v3827
        %4051 = vmatmul.mubr.bf16.gmra.mxu0 %v3826
        %v4052 = vpop.f32.mrf.mxu0
        %v4053 = vadd.f32 0.0, %v4052
        %v4054 = vpop.f32.mrf.mxu0
        %v4055 = vpop.f32.mrf.mxu0
        %v4056 = vadd.f32 0.0, %v4055
        %v4057 = vpop.f32.mrf.mxu0
        %4058 = vmatprep.mubr.bf16.mxu0 %v3830
        %4059 = vmatmul.mubr.bf16.gmra.mxu0 %v3829
        %v4060 = vpop.f32.mrf.mxu0
        %v4061 = vadd.f32 0.0, %v4060
        %v4062 = vpop.f32.mrf.mxu0
        %v4063 = vpop.f32.mrf.mxu0
        %v4064 = vadd.f32 0.0, %v4063
        %v4065 = vpop.f32.mrf.mxu0
        %4066 = vmatprep.mubr.bf16.mxu0 %v3833
        %4067 = vmatmul.mubr.bf16.gmra.mxu0 %v3832
        %v4068 = vpop.f32.mrf.mxu0
        %v4069 = vadd.f32 0.0, %v4068
        %v4070 = vpop.f32.mrf.mxu0
        %v4071 = vpop.f32.mrf.mxu0
        %v4072 = vadd.f32 0.0, %v4071
        %v4073 = vpop.f32.mrf.mxu0
        %4074 = vmatprep.mubr.bf16.mxu0 %v3836
        %4075 = vmatmul.mubr.bf16.gmra.mxu0 %v3835
        %v4076 = vpop.f32.mrf.mxu0
        %v4077 = vadd.f32 0.0, %v4076
        %v4078 = vpop.f32.mrf.mxu0
        %v4079 = vpop.f32.mrf.mxu0
        %v4080 = vadd.f32 0.0, %v4079
        %v4081 = vpop.f32.mrf.mxu0
        %4082 = vmatprep.mubr.bf16.mxu0 %v3839
        %4083 = vmatmul.mubr.bf16.gmra.mxu0 %v3838
        %v4084 = vpop.f32.mrf.mxu0
        %v4085 = vadd.f32 0.0, %v4084
        %v4086 = vpop.f32.mrf.mxu0
        %v4087 = vpop.f32.mrf.mxu0
        %v4088 = vadd.f32 0.0, %v4087
        %v4089 = vpop.f32.mrf.mxu0
        %4090 = vmatprep.mubr.bf16.mxu0 %v3842
        %4091 = vmatmul.mubr.bf16.gmra.mxu0 %v3841
        %v4092 = vpop.f32.mrf.mxu0
        %v4093 = vadd.f32 0.0, %v4092
        %v4094 = vpop.f32.mrf.mxu0
        %v4095 = vpop.f32.mrf.mxu0
        %v4096 = vadd.f32 0.0, %v4095
        %v4097 = vpop.f32.mrf.mxu0
        %4098 = vmatprep.mubr.bf16.mxu0 %v3845
        %4099 = vmatmul.mubr.bf16.gmra.mxu0 %v3844
        %v4100 = vpop.f32.mrf.mxu0
        %v4101 = vadd.f32 0.0, %v4100
        %v4102 = vpop.f32.mrf.mxu0
        %v4103 = vpop.f32.mrf.mxu0
        %v4104 = vadd.f32 0.0, %v4103
        %v4105 = vpop.f32.mrf.mxu0
        %4106 = vmatprep.mubr.bf16.mxu0 %v3848
        %4107 = vmatmul.mubr.bf16.gmra.mxu0 %v3847
        %v4108 = vpop.f32.mrf.mxu0
        %v4109 = vadd.f32 0.0, %v4108
        %v4110 = vpop.f32.mrf.mxu0
        %v4111 = vpop.f32.mrf.mxu0
        %v4112 = vadd.f32 0.0, %v4111
        %v4113 = vpop.f32.mrf.mxu0
        %4114 = vdwg.mxu0
        %4115 = vmatprep.subr.bf16.mxu0 0
        %4116 = vmatpush1.bf16.msra.mxu0 %v3993
        %4117 = vmatprep.subr.bf16.mxu0 0
        %4118 = vmatpush1.bf16.msra.mxu0 %v3992
        %4119 = vmatprep.subr.bf16.mxu0 0
        %4120 = vmatpush1.bf16.msra.mxu0 %v3991
        %4121 = vmatprep.subr.bf16.mxu0 0
        %4122 = vmatpush1.bf16.msra.mxu0 %v3990
        %4123 = vmatprep.subr.bf16.mxu0 0
        %4124 = vmatpush1.bf16.msra.mxu0 %v3989
        %4125 = vmatprep.subr.bf16.mxu0 0
        %4126 = vmatpush1.bf16.msra.mxu0 %v3988
        %4127 = vmatprep.subr.bf16.mxu0 0
        %4128 = vmatpush1.bf16.msra.mxu0 %v3987
        %4129 = vmatprep.subr.bf16.mxu0 0
        %4130 = vmatpush1.bf16.msra.mxu0 %v3986
        %4131 = vmatprep.subr.bf16.mxu0 0
        %4132 = vmatpush2.bf16.msra.mxu0 0
        %4133 = vmatprep.subr.bf16.mxu0 0
        %4134 = vmatpush2.bf16.msra.mxu0 0
        %4135 = vmatprep.subr.bf16.mxu0 0
        %4136 = vmatpush2.bf16.msra.mxu0 0
        %4137 = vmatprep.subr.bf16.mxu0 0
        %4138 = vmatpush2.bf16.msra.mxu0 0
        %4139 = vmatprep.subr.bf16.mxu0 0
        %4140 = vmatpush2.bf16.msra.mxu0 0
        %4141 = vmatprep.subr.bf16.mxu0 0
        %4142 = vmatpush2.bf16.msra.mxu0 0
        %4143 = vmatprep.subr.bf16.mxu0 0
        %4144 = vmatpush2.bf16.msra.mxu0 0
        %4145 = vmatprep.subr.bf16.mxu0 0
        %4146 = vmatpush2.bf16.msra.mxu0 0
        %4147 = vmatprep.mubr.bf16.mxu0 0
        %4148 = vmatmul.mubr.bf16.gmra.mxu0 %v3828
        %v4149 = vpop.f32.mrf.mxu0
        %v4150 = vadd.f32 %v4053, %v4149
        %v4151 = vpop.f32.mrf.mxu0
        %v4152 = vpop.f32.mrf.mxu0
        %v4153 = vadd.f32 %v4056, %v4152
        %v4154 = vpop.f32.mrf.mxu0
        %4155 = vmatprep.mubr.bf16.mxu0 0
        %4156 = vmatmul.mubr.bf16.gmra.mxu0 %v3831
        %v4157 = vpop.f32.mrf.mxu0
        %v4158 = vadd.f32 %v4061, %v4157
        %v4159 = vpop.f32.mrf.mxu0
        %v4160 = vpop.f32.mrf.mxu0
        %v4161 = vadd.f32 %v4064, %v4160
        %v4162 = vpop.f32.mrf.mxu0
        %4163 = vmatprep.mubr.bf16.mxu0 0
        %4164 = vmatmul.mubr.bf16.gmra.mxu0 %v3834
        %v4165 = vpop.f32.mrf.mxu0
        %v4166 = vadd.f32 %v4069, %v4165
        %v4167 = vpop.f32.mrf.mxu0
        %v4168 = vpop.f32.mrf.mxu0
        %v4169 = vadd.f32 %v4072, %v4168
        %v4170 = vpop.f32.mrf.mxu0
        %4171 = vmatprep.mubr.bf16.mxu0 0
        %4172 = vmatmul.mubr.bf16.gmra.mxu0 %v3837
        %v4173 = vpop.f32.mrf.mxu0
        %v4174 = vadd.f32 %v4077, %v4173
        %v4175 = vpop.f32.mrf.mxu0
        %v4176 = vpop.f32.mrf.mxu0
        %v4177 = vadd.f32 %v4080, %v4176
        %v4178 = vpop.f32.mrf.mxu0
        %4179 = vmatprep.mubr.bf16.mxu0 0
        %4180 = vmatmul.mubr.bf16.gmra.mxu0 %v3840
        %v4181 = vpop.f32.mrf.mxu0
        %v4182 = vadd.f32 %v4085, %v4181
        %v4183 = vpop.f32.mrf.mxu0
        %v4184 = vpop.f32.mrf.mxu0
        %v4185 = vadd.f32 %v4088, %v4184
        %v4186 = vpop.f32.mrf.mxu0
        %4187 = vmatprep.mubr.bf16.mxu0 0
        %4188 = vmatmul.mubr.bf16.gmra.mxu0 %v3843
        %v4189 = vpop.f32.mrf.mxu0
        %v4190 = vadd.f32 %v4093, %v4189
        %v4191 = vpop.f32.mrf.mxu0
        %v4192 = vpop.f32.mrf.mxu0
        %v4193 = vadd.f32 %v4096, %v4192
        %v4194 = vpop.f32.mrf.mxu0
        %4195 = vmatprep.mubr.bf16.mxu0 0
        %4196 = vmatmul.mubr.bf16.gmra.mxu0 %v3846
        %v4197 = vpop.f32.mrf.mxu0
        %v4198 = vadd.f32 %v4101, %v4197
        %v4199 = vpop.f32.mrf.mxu0
        %v4200 = vpop.f32.mrf.mxu0
        %v4201 = vadd.f32 %v4104, %v4200
        %v4202 = vpop.f32.mrf.mxu0
        %4203 = vmatprep.mubr.bf16.mxu0 0
        %4204 = vmatmul.mubr.bf16.gmra.mxu0 %v3849
        %v4205 = vpop.f32.mrf.mxu0
        %v4206 = vadd.f32 %v4109, %v4205
        %v4207 = vpop.f32.mrf.mxu0
        %v4208 = vpop.f32.mrf.mxu0
        %v4209 = vadd.f32 %v4112, %v4208
        %v4210 = vpop.f32.mrf.mxu0
        %4211 = vdwg.mxu0
        %v4244 = vunpack.c.l.b16 %v3585
        %v4245 = vunpack.c.h.b16 %v3585
        %v4246 = vunpack.c.l.b16 %v3586
        %v4247 = vunpack.c.l.b16 %v3587
        %v4248 = vunpack.c.h.b16 %v3587
        %v4249 = vunpack.c.l.b16 %v3588
        %v4250 = vunpack.c.l.b16 %v3589
        %v4251 = vunpack.c.h.b16 %v3589
        %v4252 = vunpack.c.l.b16 %v3590
        %v4253 = vunpack.c.l.b16 %v3591
        %v4254 = vunpack.c.h.b16 %v3591
        %v4255 = vunpack.c.l.b16 %v3592
        %v4256 = vunpack.c.l.b16 %v3593
        %v4257 = vunpack.c.h.b16 %v3593
        %v4258 = vunpack.c.l.b16 %v3594
        %v4259 = vunpack.c.l.b16 %v3595
        %v4260 = vunpack.c.h.b16 %v3595
        %v4261 = vunpack.c.l.b16 %v3596
        %v4262 = vunpack.c.l.b16 %v3597
        %v4263 = vunpack.c.h.b16 %v3597
        %v4264 = vunpack.c.l.b16 %v3598
        %v4265 = vunpack.c.l.b16 %v3599
        %v4266 = vunpack.c.h.b16 %v3599
        %v4267 = vunpack.c.l.b16 %v3600
        %v4268 = vunpack.c.l.b16 %v3601
        %v4269 = vunpack.c.h.b16 %v3601
        %v4270 = vunpack.c.l.b16 %v3602
        %v4271 = vunpack.c.l.b16 %v3603
        %v4272 = vunpack.c.h.b16 %v3603
        %v4273 = vunpack.c.l.b16 %v3604
        %v4274 = vunpack.c.l.b16 %v3605
        %v4275 = vunpack.c.h.b16 %v3605
        %v4276 = vunpack.c.l.b16 %v3606
        %v4277 = vunpack.c.l.b16 %v3607
        %v4278 = vunpack.c.h.b16 %v3607
        %v4279 = vunpack.c.l.b16 %v3608
        %v4280 = vunpack.c.l.b16 %v3609
        %v4281 = vunpack.c.h.b16 %v3609
        %v4282 = vunpack.c.l.b16 %v3610
        %v4283 = vunpack.c.l.b16 %v3611
        %v4284 = vunpack.c.h.b16 %v3611
        %v4285 = vunpack.c.l.b16 %v3612
        %v4286 = vunpack.c.l.b16 %v3613
        %v4287 = vunpack.c.h.b16 %v3613
        %v4288 = vunpack.c.l.b16 %v3614
        %v4289 = vunpack.c.l.b16 %v3615
        %v4290 = vunpack.c.h.b16 %v3615
        %v4291 = vunpack.c.l.b16 %v3616
        %v4292 = vpack.c.b16 %v4247, %v4244
        %v4293 = vpack.c.b16 %v4248, %v4245
        %v4294 = vpack.c.b16 %v4249, %v4246
        %v4295 = vpack.c.b16 %v4253, %v4250
        %v4296 = vpack.c.b16 %v4254, %v4251
        %v4297 = vpack.c.b16 %v4255, %v4252
        %v4298 = vpack.c.b16 %v4259, %v4256
        %v4299 = vpack.c.b16 %v4260, %v4257
        %v4300 = vpack.c.b16 %v4261, %v4258
        %v4301 = vpack.c.b16 %v4265, %v4262
        %v4302 = vpack.c.b16 %v4266, %v4263
        %v4303 = vpack.c.b16 %v4267, %v4264
        %v4304 = vpack.c.b16 %v4271, %v4268
        %v4305 = vpack.c.b16 %v4272, %v4269
        %v4306 = vpack.c.b16 %v4273, %v4270
        %v4307 = vpack.c.b16 %v4277, %v4274
        %v4308 = vpack.c.b16 %v4278, %v4275
        %v4309 = vpack.c.b16 %v4279, %v4276
        %v4310 = vpack.c.b16 %v4283, %v4280
        %v4311 = vpack.c.b16 %v4284, %v4281
        %v4312 = vpack.c.b16 %v4285, %v4282
        %v4313 = vpack.c.b16 %v4289, %v4286
        %v4314 = vpack.c.b16 %v4290, %v4287
        %v4315 = vpack.c.b16 %v4291, %v4288
        %v4388 = vunpack.c.l.b16 %v3617
        %v4389 = vunpack.c.l.b16 %v3618
        %v4390 = vunpack.c.l.b16 %v3619
        %v4391 = vunpack.c.l.b16 %v3620
        %v4392 = vunpack.c.l.b16 %v3621
        %v4393 = vunpack.c.l.b16 %v3622
        %v4394 = vunpack.c.l.b16 %v3623
        %v4395 = vunpack.c.l.b16 %v3624
        %v4396 = vunpack.c.l.b16 %v3625
        %v4397 = vunpack.c.l.b16 %v3626
        %v4398 = vunpack.c.l.b16 %v3627
        %v4399 = vunpack.c.l.b16 %v3628
        %v4400 = vunpack.c.l.b16 %v3629
        %v4401 = vunpack.c.l.b16 %v3630
        %v4402 = vunpack.c.l.b16 %v3631
        %v4403 = vunpack.c.l.b16 %v3632
        %v4404 = vunpack.c.l.b16 %v3633
        %v4405 = vunpack.c.l.b16 %v3634
        %v4406 = vunpack.c.l.b16 %v3635
        %v4407 = vunpack.c.l.b16 %v3636
        %v4408 = vunpack.c.l.b16 %v3637
        %v4409 = vunpack.c.l.b16 %v3638
        %v4410 = vunpack.c.l.b16 %v3639
        %v4411 = vunpack.c.l.b16 %v3640
        %v4412 = vunpack.c.l.b16 %v3641
        %v4413 = vunpack.c.l.b16 %v3642
        %v4414 = vunpack.c.l.b16 %v3643
        %v4415 = vunpack.c.l.b16 %v3644
        %v4416 = vunpack.c.l.b16 %v3645
        %v4417 = vunpack.c.l.b16 %v3646
        %v4418 = vunpack.c.l.b16 %v3647
        %v4419 = vunpack.c.l.b16 %v3648
        %v4420 = vunpack.c.l.b16 %v3649
        %v4421 = vunpack.c.l.b16 %v3650
        %v4422 = vunpack.c.l.b16 %v3651
        %v4423 = vunpack.c.l.b16 %v3652
        %v4424 = vunpack.c.l.b16 %v3653
        %v4425 = vunpack.c.l.b16 %v3654
        %v4426 = vunpack.c.l.b16 %v3655
        %v4427 = vunpack.c.l.b16 %v3656
        %v4428 = vunpack.c.l.b16 %v3657
        %v4429 = vunpack.c.l.b16 %v3658
        %v4430 = vunpack.c.l.b16 %v3659
        %v4431 = vunpack.c.l.b16 %v3660
        %v4432 = vunpack.c.l.b16 %v3661
        %v4433 = vunpack.c.l.b16 %v3662
        %v4434 = vunpack.c.l.b16 %v3663
        %v4435 = vunpack.c.l.b16 %v3664
        %v4436 = vpack.c.b16 %v4389, %v4388
        %v4437 = vpack.c.b16 %v4391, %v4390
        %v4438 = vpack.c.b16 %v4393, %v4392
        %v4439 = vpack.c.b16 %v4395, %v4394
        %v4440 = vpack.c.b16 %v4397, %v4396
        %v4441 = vpack.c.b16 %v4399, %v4398
        %v4442 = vpack.c.b16 %v4401, %v4400
        %v4443 = vpack.c.b16 %v4403, %v4402
        %v4444 = vpack.c.b16 %v4405, %v4404
        %v4445 = vpack.c.b16 %v4407, %v4406
        %v4446 = vpack.c.b16 %v4409, %v4408
        %v4447 = vpack.c.b16 %v4411, %v4410
        %v4448 = vpack.c.b16 %v4413, %v4412
        %v4449 = vpack.c.b16 %v4415, %v4414
        %v4450 = vpack.c.b16 %v4417, %v4416
        %v4451 = vpack.c.b16 %v4419, %v4418
        %v4452 = vpack.c.b16 %v4421, %v4420
        %v4453 = vpack.c.b16 %v4423, %v4422
        %v4454 = vpack.c.b16 %v4425, %v4424
        %v4455 = vpack.c.b16 %v4427, %v4426
        %v4456 = vpack.c.b16 %v4429, %v4428
        %v4457 = vpack.c.b16 %v4431, %v4430
        %v4458 = vpack.c.b16 %v4433, %v4432
        %v4459 = vpack.c.b16 %v4435, %v4434
        %4484 = vmatprep.subr.bf16.mxu0 0
        %4485 = vmatpush1.bf16.msra.mxu0 %v4443
        %4486 = vmatprep.subr.bf16.mxu0 0
        %4487 = vmatpush1.bf16.msra.mxu0 %v4442
        %4488 = vmatprep.subr.bf16.mxu0 0
        %4489 = vmatpush1.bf16.msra.mxu0 %v4441
        %4490 = vmatprep.subr.bf16.mxu0 0
        %4491 = vmatpush1.bf16.msra.mxu0 %v4440
        %4492 = vmatprep.subr.bf16.mxu0 0
        %4493 = vmatpush1.bf16.msra.mxu0 %v4439
        %4494 = vmatprep.subr.bf16.mxu0 0
        %4495 = vmatpush1.bf16.msra.mxu0 %v4438
        %4496 = vmatprep.subr.bf16.mxu0 0
        %4497 = vmatpush1.bf16.msra.mxu0 %v4437
        %4498 = vmatprep.subr.bf16.mxu0 0
        %4499 = vmatpush1.bf16.msra.mxu0 %v4436
        %4500 = vmatprep.subr.bf16.mxu0 0
        %4501 = vmatpush2.bf16.msra.mxu0 %v4451
        %4502 = vmatprep.subr.bf16.mxu0 0
        %4503 = vmatpush2.bf16.msra.mxu0 %v4450
        %4504 = vmatprep.subr.bf16.mxu0 0
        %4505 = vmatpush2.bf16.msra.mxu0 %v4449
        %4506 = vmatprep.subr.bf16.mxu0 0
        %4507 = vmatpush2.bf16.msra.mxu0 %v4448
        %4508 = vmatprep.subr.bf16.mxu0 0
        %4509 = vmatpush2.bf16.msra.mxu0 %v4447
        %4510 = vmatprep.subr.bf16.mxu0 0
        %4511 = vmatpush2.bf16.msra.mxu0 %v4446
        %4512 = vmatprep.subr.bf16.mxu0 0
        %4513 = vmatpush2.bf16.msra.mxu0 %v4445
        %4514 = vmatprep.subr.bf16.mxu0 0
        %4515 = vmatpush2.bf16.msra.mxu0 %v4444
        %4516 = vmatprep.mubr.bf16.mxu0 %v4293
        %4517 = vmatmul.mubr.bf16.gmra.mxu0 %v4292
        %v4518 = vpop.f32.mrf.mxu0
        %v4519 = vadd.f32 %v4150, %v4518
        %v4520 = vpop.f32.mrf.mxu0
        %v4521 = vpop.f32.mrf.mxu0
        %v4522 = vadd.f32 %v4153, %v4521
        %v4523 = vpop.f32.mrf.mxu0
        %4524 = vmatprep.mubr.bf16.mxu0 %v4296
        %4525 = vmatmul.mubr.bf16.gmra.mxu0 %v4295
        %v4526 = vpop.f32.mrf.mxu0
        %v4527 = vadd.f32 %v4158, %v4526
        %v4528 = vpop.f32.mrf.mxu0
        %v4529 = vpop.f32.mrf.mxu0
        %v4530 = vadd.f32 %v4161, %v4529
        %v4531 = vpop.f32.mrf.mxu0
        %4532 = vmatprep.mubr.bf16.mxu0 %v4299
        %4533 = vmatmul.mubr.bf16.gmra.mxu0 %v4298
        %v4534 = vpop.f32.mrf.mxu0
        %v4535 = vadd.f32 %v4166, %v4534
        %v4536 = vpop.f32.mrf.mxu0
        %v4537 = vpop.f32.mrf.mxu0
        %v4538 = vadd.f32 %v4169, %v4537
        %v4539 = vpop.f32.mrf.mxu0
        %4540 = vmatprep.mubr.bf16.mxu0 %v4302
        %4541 = vmatmul.mubr.bf16.gmra.mxu0 %v4301
        %v4542 = vpop.f32.mrf.mxu0
        %v4543 = vadd.f32 %v4174, %v4542
        %v4544 = vpop.f32.mrf.mxu0
        %v4545 = vpop.f32.mrf.mxu0
        %v4546 = vadd.f32 %v4177, %v4545
        %v4547 = vpop.f32.mrf.mxu0
        %4548 = vmatprep.mubr.bf16.mxu0 %v4305
        %4549 = vmatmul.mubr.bf16.gmra.mxu0 %v4304
        %v4550 = vpop.f32.mrf.mxu0
        %v4551 = vadd.f32 %v4182, %v4550
        %v4552 = vpop.f32.mrf.mxu0
        %v4553 = vpop.f32.mrf.mxu0
        %v4554 = vadd.f32 %v4185, %v4553
        %v4555 = vpop.f32.mrf.mxu0
        %4556 = vmatprep.mubr.bf16.mxu0 %v4308
        %4557 = vmatmul.mubr.bf16.gmra.mxu0 %v4307
        %v4558 = vpop.f32.mrf.mxu0
        %v4559 = vadd.f32 %v4190, %v4558
        %v4560 = vpop.f32.mrf.mxu0
        %v4561 = vpop.f32.mrf.mxu0
        %v4562 = vadd.f32 %v4193, %v4561
        %v4563 = vpop.f32.mrf.mxu0
        %4564 = vmatprep.mubr.bf16.mxu0 %v4311
        %4565 = vmatmul.mubr.bf16.gmra.mxu0 %v4310
        %v4566 = vpop.f32.mrf.mxu0
        %v4567 = vadd.f32 %v4198, %v4566
        %v4568 = vpop.f32.mrf.mxu0
        %v4569 = vpop.f32.mrf.mxu0
        %v4570 = vadd.f32 %v4201, %v4569
        %v4571 = vpop.f32.mrf.mxu0
        %4572 = vmatprep.mubr.bf16.mxu0 %v4314
        %4573 = vmatmul.mubr.bf16.gmra.mxu0 %v4313
        %v4574 = vpop.f32.mrf.mxu0
        %v4575 = vadd.f32 %v4206, %v4574
        %v4576 = vpop.f32.mrf.mxu0
        %v4577 = vpop.f32.mrf.mxu0
        %v4578 = vadd.f32 %v4209, %v4577
        %v4579 = vpop.f32.mrf.mxu0
        %4580 = vdwg.mxu0
        %4581 = vmatprep.subr.bf16.mxu0 0
        %4582 = vmatpush1.bf16.msra.mxu0 %v4459
        %4583 = vmatprep.subr.bf16.mxu0 0
        %4584 = vmatpush1.bf16.msra.mxu0 %v4458
        %4585 = vmatprep.subr.bf16.mxu0 0
        %4586 = vmatpush1.bf16.msra.mxu0 %v4457
        %4587 = vmatprep.subr.bf16.mxu0 0
        %4588 = vmatpush1.bf16.msra.mxu0 %v4456
        %4589 = vmatprep.subr.bf16.mxu0 0
        %4590 = vmatpush1.bf16.msra.mxu0 %v4455
        %4591 = vmatprep.subr.bf16.mxu0 0
        %4592 = vmatpush1.bf16.msra.mxu0 %v4454
        %4593 = vmatprep.subr.bf16.mxu0 0
        %4594 = vmatpush1.bf16.msra.mxu0 %v4453
        %4595 = vmatprep.subr.bf16.mxu0 0
        %4596 = vmatpush1.bf16.msra.mxu0 %v4452
        %4597 = vmatprep.subr.bf16.mxu0 0
        %4598 = vmatpush2.bf16.msra.mxu0 0
        %4599 = vmatprep.subr.bf16.mxu0 0
        %4600 = vmatpush2.bf16.msra.mxu0 0
        %4601 = vmatprep.subr.bf16.mxu0 0
        %4602 = vmatpush2.bf16.msra.mxu0 0
        %4603 = vmatprep.subr.bf16.mxu0 0
        %4604 = vmatpush2.bf16.msra.mxu0 0
        %4605 = vmatprep.subr.bf16.mxu0 0
        %4606 = vmatpush2.bf16.msra.mxu0 0
        %4607 = vmatprep.subr.bf16.mxu0 0
        %4608 = vmatpush2.bf16.msra.mxu0 0
        %4609 = vmatprep.subr.bf16.mxu0 0
        %4610 = vmatpush2.bf16.msra.mxu0 0
        %4611 = vmatprep.subr.bf16.mxu0 0
        %4612 = vmatpush2.bf16.msra.mxu0 0
        %4613 = vmatprep.mubr.bf16.mxu0 0
        %4614 = vmatmul.mubr.bf16.gmra.mxu0 %v4294
        %v4615 = vpop.f32.mrf.mxu0
        %v4616 = vadd.f32 %v4519, %v4615
        %v4617 = vpop.f32.mrf.mxu0
        %v4618 = vpop.f32.mrf.mxu0
        %v4619 = vadd.f32 %v4522, %v4618
        %v4620 = vpop.f32.mrf.mxu0
        %4621 = vmatprep.mubr.bf16.mxu0 0
        %4622 = vmatmul.mubr.bf16.gmra.mxu0 %v4297
        %v4623 = vpop.f32.mrf.mxu0
        %v4624 = vadd.f32 %v4527, %v4623
        %v4625 = vpop.f32.mrf.mxu0
        %v4626 = vpop.f32.mrf.mxu0
        %v4627 = vadd.f32 %v4530, %v4626
        %v4628 = vpop.f32.mrf.mxu0
        %4629 = vmatprep.mubr.bf16.mxu0 0
        %4630 = vmatmul.mubr.bf16.gmra.mxu0 %v4300
        %v4631 = vpop.f32.mrf.mxu0
        %v4632 = vadd.f32 %v4535, %v4631
        %v4633 = vpop.f32.mrf.mxu0
        %v4634 = vpop.f32.mrf.mxu0
        %v4635 = vadd.f32 %v4538, %v4634
        %v4636 = vpop.f32.mrf.mxu0
        %4637 = vmatprep.mubr.bf16.mxu0 0
        %4638 = vmatmul.mubr.bf16.gmra.mxu0 %v4303
        %v4639 = vpop.f32.mrf.mxu0
        %v4640 = vadd.f32 %v4543, %v4639
        %v4641 = vpop.f32.mrf.mxu0
        %v4642 = vpop.f32.mrf.mxu0
        %v4643 = vadd.f32 %v4546, %v4642
        %v4644 = vpop.f32.mrf.mxu0
        %4645 = vmatprep.mubr.bf16.mxu0 0
        %4646 = vmatmul.mubr.bf16.gmra.mxu0 %v4306
        %v4647 = vpop.f32.mrf.mxu0
        %v4648 = vadd.f32 %v4551, %v4647
        %v4649 = vpop.f32.mrf.mxu0
        %v4650 = vpop.f32.mrf.mxu0
        %v4651 = vadd.f32 %v4554, %v4650
        %v4652 = vpop.f32.mrf.mxu0
        %4653 = vmatprep.mubr.bf16.mxu0 0
        %4654 = vmatmul.mubr.bf16.gmra.mxu0 %v4309
        %v4655 = vpop.f32.mrf.mxu0
        %v4656 = vadd.f32 %v4559, %v4655
        %v4657 = vpop.f32.mrf.mxu0
        %v4658 = vpop.f32.mrf.mxu0
        %v4659 = vadd.f32 %v4562, %v4658
        %v4660 = vpop.f32.mrf.mxu0
        %4661 = vmatprep.mubr.bf16.mxu0 0
        %4662 = vmatmul.mubr.bf16.gmra.mxu0 %v4312
        %v4663 = vpop.f32.mrf.mxu0
        %v4664 = vadd.f32 %v4567, %v4663
        %v4665 = vpop.f32.mrf.mxu0
        %v4666 = vpop.f32.mrf.mxu0
        %v4667 = vadd.f32 %v4570, %v4666
        %v4668 = vpop.f32.mrf.mxu0
        %4669 = vmatprep.mubr.bf16.mxu0 0
        %4670 = vmatmul.mubr.bf16.gmra.mxu0 %v4315
        %v4671 = vpop.f32.mrf.mxu0
        %v4672 = vadd.f32 %v4575, %v4671
        %v4673 = vpop.f32.mrf.mxu0
        %v4674 = vpop.f32.mrf.mxu0
        %v4675 = vadd.f32 %v4578, %v4674
        %v4676 = vpop.f32.mrf.mxu0
        %4677 = vdwg.mxu0
        %v4678 = vld [vmem:[%s2290] sm:$0xff]
        %v4679 = vld [vmem:[%s2290 + $0x8] sm:$0xf]
        %v4680 = vld [vmem:[%s2290 + $0xc] sm:$0xff]
        %v4681 = vld [vmem:[%s2290 + $0x14] sm:$0xf]
        %v4682 = vld [vmem:[%s2290 + $0x18] sm:$0xff]
        %v4683 = vld [vmem:[%s2290 + $0x20] sm:$0xf]
        %v4684 = vld [vmem:[%s2290 + $0x24] sm:$0xff]
        %v4685 = vld [vmem:[%s2290 + $0x2c] sm:$0xf]
        %v4686 = vld [vmem:[%s2290 + $0x30] sm:$0xff]
        %v4687 = vld [vmem:[%s2290 + $0x38] sm:$0xf]
        %v4688 = vld [vmem:[%s2290 + $0x3c] sm:$0xff]
        %v4689 = vld [vmem:[%s2290 + $0x44] sm:$0xf]
        %v4690 = vld [vmem:[%s2290 + $0x48] sm:$0xff]
        %v4691 = vld [vmem:[%s2290 + $0x50] sm:$0xf]
        %v4692 = vld [vmem:[%s2290 + $0x54] sm:$0xff]
        %v4693 = vld [vmem:[%s2290 + $0x5c] sm:$0xf]
        %v4694 = vld [vmem:[%s2290 + $0x60] sm:$0xff]
        %v4695 = vld [vmem:[%s2290 + $0x68] sm:$0xf]
        %v4696 = vld [vmem:[%s2290 + $0x6c] sm:$0xff]
        %v4697 = vld [vmem:[%s2290 + $0x74] sm:$0xf]
        %v4698 = vld [vmem:[%s2290 + $0x78] sm:$0xff]
        %v4699 = vld [vmem:[%s2290 + $0x80] sm:$0xf]
        %v4700 = vld [vmem:[%s2290 + $0x84] sm:$0xff]
        %v4701 = vld [vmem:[%s2290 + $0x8c] sm:$0xf]
        %v4702 = vld [vmem:[%s2290 + $0x90] sm:$0xff]
        %v4703 = vld [vmem:[%s2290 + $0x98] sm:$0xf]
        %v4704 = vld [vmem:[%s2290 + $0x9c] sm:$0xff]
        %v4705 = vld [vmem:[%s2290 + $0xa4] sm:$0xf]
        %v4706 = vld [vmem:[%s2290 + $0xa8] sm:$0xff]
        %v4707 = vld [vmem:[%s2290 + $0xb0] sm:$0xf]
        %v4708 = vld [vmem:[%s2290 + $0xb4] sm:$0xff]
        %v4709 = vld [vmem:[%s2290 + $0xbc] sm:$0xf]
        %s4710 = scalar_lea.vmem %s2, 384
        %v4711 = vld [vmem:[%s4710] sm:$0xf]
        %v4712 = vld [vmem:[%s4710 + $0x4] sm:$0xf]
        %v4713 = vld [vmem:[%s4710 + $0x8] sm:$0xf]
        %v4714 = vld [vmem:[%s4710 + $0xc] sm:$0xf]
        %v4715 = vld [vmem:[%s4710 + $0x10] sm:$0xf]
        %v4716 = vld [vmem:[%s4710 + $0x14] sm:$0xf]
        %v4717 = vld [vmem:[%s4710 + $0x18] sm:$0xf]
        %v4718 = vld [vmem:[%s4710 + $0x1c] sm:$0xf]
        %v4719 = vld [vmem:[%s4710 + $0x20] sm:$0xf]
        %v4720 = vld [vmem:[%s4710 + $0x24] sm:$0xf]
        %v4721 = vld [vmem:[%s4710 + $0x28] sm:$0xf]
        %v4722 = vld [vmem:[%s4710 + $0x2c] sm:$0xf]
        %v4723 = vld [vmem:[%s4710 + $0x30] sm:$0xf]
        %v4724 = vld [vmem:[%s4710 + $0x34] sm:$0xf]
        %v4725 = vld [vmem:[%s4710 + $0x38] sm:$0xf]
        %v4726 = vld [vmem:[%s4710 + $0x3c] sm:$0xf]
        %v4727 = vld [vmem:[%s4710 + $0x40] sm:$0xf]
        %v4728 = vld [vmem:[%s4710 + $0x44] sm:$0xf]
        %v4729 = vld [vmem:[%s4710 + $0x48] sm:$0xf]
        %v4730 = vld [vmem:[%s4710 + $0x4c] sm:$0xf]
        %v4731 = vld [vmem:[%s4710 + $0x50] sm:$0xf]
        %v4732 = vld [vmem:[%s4710 + $0x54] sm:$0xf]
        %v4733 = vld [vmem:[%s4710 + $0x58] sm:$0xf]
        %v4734 = vld [vmem:[%s4710 + $0x5c] sm:$0xf]
        %v4735 = vld [vmem:[%s4710 + $0x60] sm:$0xf]
        %v4736 = vld [vmem:[%s4710 + $0x64] sm:$0xf]
        %v4737 = vld [vmem:[%s4710 + $0x68] sm:$0xf]
        %v4738 = vld [vmem:[%s4710 + $0x6c] sm:$0xf]
        %v4739 = vld [vmem:[%s4710 + $0x70] sm:$0xf]
        %v4740 = vld [vmem:[%s4710 + $0x74] sm:$0xf]
        %v4741 = vld [vmem:[%s4710 + $0x78] sm:$0xf]
        %v4742 = vld [vmem:[%s4710 + $0x7c] sm:$0xf]
        %v4743 = vld [vmem:[%s4710 + $0x80] sm:$0xf]
        %v4744 = vld [vmem:[%s4710 + $0x84] sm:$0xf]
        %v4745 = vld [vmem:[%s4710 + $0x88] sm:$0xf]
        %v4746 = vld [vmem:[%s4710 + $0x8c] sm:$0xf]
        %v4747 = vld [vmem:[%s4710 + $0x90] sm:$0xf]
        %v4748 = vld [vmem:[%s4710 + $0x94] sm:$0xf]
        %v4749 = vld [vmem:[%s4710 + $0x98] sm:$0xf]
        %v4750 = vld [vmem:[%s4710 + $0x9c] sm:$0xf]
        %v4751 = vld [vmem:[%s4710 + $0xa0] sm:$0xf]
        %v4752 = vld [vmem:[%s4710 + $0xa4] sm:$0xf]
        %v4753 = vld [vmem:[%s4710 + $0xa8] sm:$0xf]
        %v4754 = vld [vmem:[%s4710 + $0xac] sm:$0xf]
        %v4755 = vld [vmem:[%s4710 + $0xb0] sm:$0xf]
        %v4756 = vld [vmem:[%s4710 + $0xb4] sm:$0xf]
        %v4757 = vld [vmem:[%s4710 + $0xb8] sm:$0xf]
        %v4758 = vld [vmem:[%s4710 + $0xbc] sm:$0xf]
        %v4791 = vunpack.c.l.b16 %v4678
        %v4792 = vunpack.c.h.b16 %v4678
        %v4793 = vunpack.c.l.b16 %v4679
        %v4794 = vunpack.c.l.b16 %v4680
        %v4795 = vunpack.c.h.b16 %v4680
        %v4796 = vunpack.c.l.b16 %v4681
        %v4797 = vunpack.c.l.b16 %v4682
        %v4798 = vunpack.c.h.b16 %v4682
        %v4799 = vunpack.c.l.b16 %v4683
        %v4800 = vunpack.c.l.b16 %v4684
        %v4801 = vunpack.c.h.b16 %v4684
        %v4802 = vunpack.c.l.b16 %v4685
        %v4803 = vunpack.c.l.b16 %v4686
        %v4804 = vunpack.c.h.b16 %v4686
        %v4805 = vunpack.c.l.b16 %v4687
        %v4806 = vunpack.c.l.b16 %v4688
        %v4807 = vunpack.c.h.b16 %v4688
        %v4808 = vunpack.c.l.b16 %v4689
        %v4809 = vunpack.c.l.b16 %v4690
        %v4810 = vunpack.c.h.b16 %v4690
        %v4811 = vunpack.c.l.b16 %v4691
        %v4812 = vunpack.c.l.b16 %v4692
        %v4813 = vunpack.c.h.b16 %v4692
        %v4814 = vunpack.c.l.b16 %v4693
        %v4815 = vunpack.c.l.b16 %v4694
        %v4816 = vunpack.c.h.b16 %v4694
        %v4817 = vunpack.c.l.b16 %v4695
        %v4818 = vunpack.c.l.b16 %v4696
        %v4819 = vunpack.c.h.b16 %v4696
        %v4820 = vunpack.c.l.b16 %v4697
        %v4821 = vunpack.c.l.b16 %v4698
        %v4822 = vunpack.c.h.b16 %v4698
        %v4823 = vunpack.c.l.b16 %v4699
        %v4824 = vunpack.c.l.b16 %v4700
        %v4825 = vunpack.c.h.b16 %v4700
        %v4826 = vunpack.c.l.b16 %v4701
        %v4827 = vunpack.c.l.b16 %v4702
        %v4828 = vunpack.c.h.b16 %v4702
        %v4829 = vunpack.c.l.b16 %v4703
        %v4830 = vunpack.c.l.b16 %v4704
        %v4831 = vunpack.c.h.b16 %v4704
        %v4832 = vunpack.c.l.b16 %v4705
        %v4833 = vunpack.c.l.b16 %v4706
        %v4834 = vunpack.c.h.b16 %v4706
        %v4835 = vunpack.c.l.b16 %v4707
        %v4836 = vunpack.c.l.b16 %v4708
        %v4837 = vunpack.c.h.b16 %v4708
        %v4838 = vunpack.c.l.b16 %v4709
        %v4839 = vpack.c.b16 %v4794, %v4791
        %v4840 = vpack.c.b16 %v4795, %v4792
        %v4841 = vpack.c.b16 %v4796, %v4793
        %v4842 = vpack.c.b16 %v4800, %v4797
        %v4843 = vpack.c.b16 %v4801, %v4798
        %v4844 = vpack.c.b16 %v4802, %v4799
        %v4845 = vpack.c.b16 %v4806, %v4803
        %v4846 = vpack.c.b16 %v4807, %v4804
        %v4847 = vpack.c.b16 %v4808, %v4805
        %v4848 = vpack.c.b16 %v4812, %v4809
        %v4849 = vpack.c.b16 %v4813, %v4810
        %v4850 = vpack.c.b16 %v4814, %v4811
        %v4851 = vpack.c.b16 %v4818, %v4815
        %v4852 = vpack.c.b16 %v4819, %v4816
        %v4853 = vpack.c.b16 %v4820, %v4817
        %v4854 = vpack.c.b16 %v4824, %v4821
        %v4855 = vpack.c.b16 %v4825, %v4822
        %v4856 = vpack.c.b16 %v4826, %v4823
        %v4857 = vpack.c.b16 %v4830, %v4827
        %v4858 = vpack.c.b16 %v4831, %v4828
        %v4859 = vpack.c.b16 %v4832, %v4829
        %v4860 = vpack.c.b16 %v4836, %v4833
        %v4861 = vpack.c.b16 %v4837, %v4834
        %v4862 = vpack.c.b16 %v4838, %v4835
        %v4935 = vunpack.c.l.b16 %v4711
        %v4936 = vunpack.c.l.b16 %v4712
        %v4937 = vunpack.c.l.b16 %v4713
        %v4938 = vunpack.c.l.b16 %v4714
        %v4939 = vunpack.c.l.b16 %v4715
        %v4940 = vunpack.c.l.b16 %v4716
        %v4941 = vunpack.c.l.b16 %v4717
        %v4942 = vunpack.c.l.b16 %v4718
        %v4943 = vunpack.c.l.b16 %v4719
        %v4944 = vunpack.c.l.b16 %v4720
        %v4945 = vunpack.c.l.b16 %v4721
        %v4946 = vunpack.c.l.b16 %v4722
        %v4947 = vunpack.c.l.b16 %v4723
        %v4948 = vunpack.c.l.b16 %v4724
        %v4949 = vunpack.c.l.b16 %v4725
        %v4950 = vunpack.c.l.b16 %v4726
        %v4951 = vunpack.c.l.b16 %v4727
        %v4952 = vunpack.c.l.b16 %v4728
        %v4953 = vunpack.c.l.b16 %v4729
        %v4954 = vunpack.c.l.b16 %v4730
        %v4955 = vunpack.c.l.b16 %v4731
        %v4956 = vunpack.c.l.b16 %v4732
        %v4957 = vunpack.c.l.b16 %v4733
        %v4958 = vunpack.c.l.b16 %v4734
        %v4959 = vunpack.c.l.b16 %v4735
        %v4960 = vunpack.c.l.b16 %v4736
        %v4961 = vunpack.c.l.b16 %v4737
        %v4962 = vunpack.c.l.b16 %v4738
        %v4963 = vunpack.c.l.b16 %v4739
        %v4964 = vunpack.c.l.b16 %v4740
        %v4965 = vunpack.c.l.b16 %v4741
        %v4966 = vunpack.c.l.b16 %v4742
        %v4967 = vunpack.c.l.b16 %v4743
        %v4968 = vunpack.c.l.b16 %v4744
        %v4969 = vunpack.c.l.b16 %v4745
        %v4970 = vunpack.c.l.b16 %v4746
        %v4971 = vunpack.c.l.b16 %v4747
        %v4972 = vunpack.c.l.b16 %v4748
        %v4973 = vunpack.c.l.b16 %v4749
        %v4974 = vunpack.c.l.b16 %v4750
        %v4975 = vunpack.c.l.b16 %v4751
        %v4976 = vunpack.c.l.b16 %v4752
        %v4977 = vunpack.c.l.b16 %v4753
        %v4978 = vunpack.c.l.b16 %v4754
        %v4979 = vunpack.c.l.b16 %v4755
        %v4980 = vunpack.c.l.b16 %v4756
        %v4981 = vunpack.c.l.b16 %v4757
        %v4982 = vunpack.c.l.b16 %v4758
        %v4983 = vpack.c.b16 %v4936, %v4935
        %v4984 = vpack.c.b16 %v4938, %v4937
        %v4985 = vpack.c.b16 %v4940, %v4939
        %v4986 = vpack.c.b16 %v4942, %v4941
        %v4987 = vpack.c.b16 %v4944, %v4943
        %v4988 = vpack.c.b16 %v4946, %v4945
        %v4989 = vpack.c.b16 %v4948, %v4947
        %v4990 = vpack.c.b16 %v4950, %v4949
        %v4991 = vpack.c.b16 %v4952, %v4951
        %v4992 = vpack.c.b16 %v4954, %v4953
        %v4993 = vpack.c.b16 %v4956, %v4955
        %v4994 = vpack.c.b16 %v4958, %v4957
        %v4995 = vpack.c.b16 %v4960, %v4959
        %v4996 = vpack.c.b16 %v4962, %v4961
        %v4997 = vpack.c.b16 %v4964, %v4963
        %v4998 = vpack.c.b16 %v4966, %v4965
        %v4999 = vpack.c.b16 %v4968, %v4967
        %v5000 = vpack.c.b16 %v4970, %v4969
        %v5001 = vpack.c.b16 %v4972, %v4971
        %v5002 = vpack.c.b16 %v4974, %v4973
        %v5003 = vpack.c.b16 %v4976, %v4975
        %v5004 = vpack.c.b16 %v4978, %v4977
        %v5005 = vpack.c.b16 %v4980, %v4979
        %v5006 = vpack.c.b16 %v4982, %v4981
        %5031 = vmatprep.subr.bf16.mxu0 0
        %5032 = vmatpush1.bf16.msra.mxu0 %v4990
        %5033 = vmatprep.subr.bf16.mxu0 0
        %5034 = vmatpush1.bf16.msra.mxu0 %v4989
        %5035 = vmatprep.subr.bf16.mxu0 0
        %5036 = vmatpush1.bf16.msra.mxu0 %v4988
        %5037 = vmatprep.subr.bf16.mxu0 0
        %5038 = vmatpush1.bf16.msra.mxu0 %v4987
        %5039 = vmatprep.subr.bf16.mxu0 0
        %5040 = vmatpush1.bf16.msra.mxu0 %v4986
        %5041 = vmatprep.subr.bf16.mxu0 0
        %5042 = vmatpush1.bf16.msra.mxu0 %v4985
        %5043 = vmatprep.subr.bf16.mxu0 0
        %5044 = vmatpush1.bf16.msra.mxu0 %v4984
        %5045 = vmatprep.subr.bf16.mxu0 0
        %5046 = vmatpush1.bf16.msra.mxu0 %v4983
        %5047 = vmatprep.subr.bf16.mxu0 0
        %5048 = vmatpush2.bf16.msra.mxu0 %v4998
        %5049 = vmatprep.subr.bf16.mxu0 0
        %5050 = vmatpush2.bf16.msra.mxu0 %v4997
        %5051 = vmatprep.subr.bf16.mxu0 0
        %5052 = vmatpush2.bf16.msra.mxu0 %v4996
        %5053 = vmatprep.subr.bf16.mxu0 0
        %5054 = vmatpush2.bf16.msra.mxu0 %v4995
        %5055 = vmatprep.subr.bf16.mxu0 0
        %5056 = vmatpush2.bf16.msra.mxu0 %v4994
        %5057 = vmatprep.subr.bf16.mxu0 0
        %5058 = vmatpush2.bf16.msra.mxu0 %v4993
        %5059 = vmatprep.subr.bf16.mxu0 0
        %5060 = vmatpush2.bf16.msra.mxu0 %v4992
        %5061 = vmatprep.subr.bf16.mxu0 0
        %5062 = vmatpush2.bf16.msra.mxu0 %v4991
        %5063 = vmatprep.mubr.bf16.mxu0 %v4840
        %5064 = vmatmul.mubr.bf16.gmra.mxu0 %v4839
        %v5065 = vpop.f32.mrf.mxu0
        %v5066 = vadd.f32 0.0, %v5065
        %v5067 = vpop.f32.mrf.mxu0
        %v5068 = vpop.f32.mrf.mxu0
        %v5069 = vadd.f32 0.0, %v5068
        %v5070 = vpop.f32.mrf.mxu0
        %5071 = vmatprep.mubr.bf16.mxu0 %v4843
        %5072 = vmatmul.mubr.bf16.gmra.mxu0 %v4842
        %v5073 = vpop.f32.mrf.mxu0
        %v5074 = vadd.f32 0.0, %v5073
        %v5075 = vpop.f32.mrf.mxu0
        %v5076 = vpop.f32.mrf.mxu0
        %v5077 = vadd.f32 0.0, %v5076
        %v5078 = vpop.f32.mrf.mxu0
        %5079 = vmatprep.mubr.bf16.mxu0 %v4846
        %5080 = vmatmul.mubr.bf16.gmra.mxu0 %v4845
        %v5081 = vpop.f32.mrf.mxu0
        %v5082 = vadd.f32 0.0, %v5081
        %v5083 = vpop.f32.mrf.mxu0
        %v5084 = vpop.f32.mrf.mxu0
        %v5085 = vadd.f32 0.0, %v5084
        %v5086 = vpop.f32.mrf.mxu0
        %5087 = vmatprep.mubr.bf16.mxu0 %v4849
        %5088 = vmatmul.mubr.bf16.gmra.mxu0 %v4848
        %v5089 = vpop.f32.mrf.mxu0
        %v5090 = vadd.f32 0.0, %v5089
        %v5091 = vpop.f32.mrf.mxu0
        %v5092 = vpop.f32.mrf.mxu0
        %v5093 = vadd.f32 0.0, %v5092
        %v5094 = vpop.f32.mrf.mxu0
        %5095 = vmatprep.mubr.bf16.mxu0 %v4852
        %5096 = vmatmul.mubr.bf16.gmra.mxu0 %v4851
        %v5097 = vpop.f32.mrf.mxu0
        %v5098 = vadd.f32 0.0, %v5097
        %v5099 = vpop.f32.mrf.mxu0
        %v5100 = vpop.f32.mrf.mxu0
        %v5101 = vadd.f32 0.0, %v5100
        %v5102 = vpop.f32.mrf.mxu0
        %5103 = vmatprep.mubr.bf16.mxu0 %v4855
        %5104 = vmatmul.mubr.bf16.gmra.mxu0 %v4854
        %v5105 = vpop.f32.mrf.mxu0
        %v5106 = vadd.f32 0.0, %v5105
        %v5107 = vpop.f32.mrf.mxu0
        %v5108 = vpop.f32.mrf.mxu0
        %v5109 = vadd.f32 0.0, %v5108
        %v5110 = vpop.f32.mrf.mxu0
        %5111 = vmatprep.mubr.bf16.mxu0 %v4858
        %5112 = vmatmul.mubr.bf16.gmra.mxu0 %v4857
        %v5113 = vpop.f32.mrf.mxu0
        %v5114 = vadd.f32 0.0, %v5113
        %v5115 = vpop.f32.mrf.mxu0
        %v5116 = vpop.f32.mrf.mxu0
        %v5117 = vadd.f32 0.0, %v5116
        %v5118 = vpop.f32.mrf.mxu0
        %5119 = vmatprep.mubr.bf16.mxu0 %v4861
        %5120 = vmatmul.mubr.bf16.gmra.mxu0 %v4860
        %v5121 = vpop.f32.mrf.mxu0
        %v5122 = vadd.f32 0.0, %v5121
        %v5123 = vpop.f32.mrf.mxu0
        %v5124 = vpop.f32.mrf.mxu0
        %v5125 = vadd.f32 0.0, %v5124
        %v5126 = vpop.f32.mrf.mxu0
        %5127 = vdwg.mxu0
        %5128 = vmatprep.subr.bf16.mxu0 0
        %5129 = vmatpush1.bf16.msra.mxu0 %v5006
        %5130 = vmatprep.subr.bf16.mxu0 0
        %5131 = vmatpush1.bf16.msra.mxu0 %v5005
        %5132 = vmatprep.subr.bf16.mxu0 0
        %5133 = vmatpush1.bf16.msra.mxu0 %v5004
        %5134 = vmatprep.subr.bf16.mxu0 0
        %5135 = vmatpush1.bf16.msra.mxu0 %v5003
        %5136 = vmatprep.subr.bf16.mxu0 0
        %5137 = vmatpush1.bf16.msra.mxu0 %v5002
        %5138 = vmatprep.subr.bf16.mxu0 0
        %5139 = vmatpush1.bf16.msra.mxu0 %v5001
        %5140 = vmatprep.subr.bf16.mxu0 0
        %5141 = vmatpush1.bf16.msra.mxu0 %v5000
        %5142 = vmatprep.subr.bf16.mxu0 0
        %5143 = vmatpush1.bf16.msra.mxu0 %v4999
        %5144 = vmatprep.subr.bf16.mxu0 0
        %5145 = vmatpush2.bf16.msra.mxu0 0
        %5146 = vmatprep.subr.bf16.mxu0 0
        %5147 = vmatpush2.bf16.msra.mxu0 0
        %5148 = vmatprep.subr.bf16.mxu0 0
        %5149 = vmatpush2.bf16.msra.mxu0 0
        %5150 = vmatprep.subr.bf16.mxu0 0
        %5151 = vmatpush2.bf16.msra.mxu0 0
        %5152 = vmatprep.subr.bf16.mxu0 0
        %5153 = vmatpush2.bf16.msra.mxu0 0
        %5154 = vmatprep.subr.bf16.mxu0 0
        %5155 = vmatpush2.bf16.msra.mxu0 0
        %5156 = vmatprep.subr.bf16.mxu0 0
        %5157 = vmatpush2.bf16.msra.mxu0 0
        %5158 = vmatprep.subr.bf16.mxu0 0
        %5159 = vmatpush2.bf16.msra.mxu0 0
        %5160 = vmatprep.mubr.bf16.mxu0 0
        %5161 = vmatmul.mubr.bf16.gmra.mxu0 %v4841
        %v5162 = vpop.f32.mrf.mxu0
        %v5163 = vadd.f32 %v5066, %v5162
        %v5164 = vpop.f32.mrf.mxu0
        %v5165 = vpop.f32.mrf.mxu0
        %v5166 = vadd.f32 %v5069, %v5165
        %v5167 = vpop.f32.mrf.mxu0
        %5168 = vmatprep.mubr.bf16.mxu0 0
        %5169 = vmatmul.mubr.bf16.gmra.mxu0 %v4844
        %v5170 = vpop.f32.mrf.mxu0
        %v5171 = vadd.f32 %v5074, %v5170
        %v5172 = vpop.f32.mrf.mxu0
        %v5173 = vpop.f32.mrf.mxu0
        %v5174 = vadd.f32 %v5077, %v5173
        %v5175 = vpop.f32.mrf.mxu0
        %5176 = vmatprep.mubr.bf16.mxu0 0
        %5177 = vmatmul.mubr.bf16.gmra.mxu0 %v4847
        %v5178 = vpop.f32.mrf.mxu0
        %v5179 = vadd.f32 %v5082, %v5178
        %v5180 = vpop.f32.mrf.mxu0
        %v5181 = vpop.f32.mrf.mxu0
        %v5182 = vadd.f32 %v5085, %v5181
        %v5183 = vpop.f32.mrf.mxu0
        %5184 = vmatprep.mubr.bf16.mxu0 0
        %5185 = vmatmul.mubr.bf16.gmra.mxu0 %v4850
        %v5186 = vpop.f32.mrf.mxu0
        %v5187 = vadd.f32 %v5090, %v5186
        %v5188 = vpop.f32.mrf.mxu0
        %v5189 = vpop.f32.mrf.mxu0
        %v5190 = vadd.f32 %v5093, %v5189
        %v5191 = vpop.f32.mrf.mxu0
        %5192 = vmatprep.mubr.bf16.mxu0 0
        %5193 = vmatmul.mubr.bf16.gmra.mxu0 %v4853
        %v5194 = vpop.f32.mrf.mxu0
        %v5195 = vadd.f32 %v5098, %v5194
        %v5196 = vpop.f32.mrf.mxu0
        %v5197 = vpop.f32.mrf.mxu0
        %v5198 = vadd.f32 %v5101, %v5197
        %v5199 = vpop.f32.mrf.mxu0
        %5200 = vmatprep.mubr.bf16.mxu0 0
        %5201 = vmatmul.mubr.bf16.gmra.mxu0 %v4856
        %v5202 = vpop.f32.mrf.mxu0
        %v5203 = vadd.f32 %v5106, %v5202
        %v5204 = vpop.f32.mrf.mxu0
        %v5205 = vpop.f32.mrf.mxu0
        %v5206 = vadd.f32 %v5109, %v5205
        %v5207 = vpop.f32.mrf.mxu0
        %5208 = vmatprep.mubr.bf16.mxu0 0
        %5209 = vmatmul.mubr.bf16.gmra.mxu0 %v4859
        %v5210 = vpop.f32.mrf.mxu0
        %v5211 = vadd.f32 %v5114, %v5210
        %v5212 = vpop.f32.mrf.mxu0
        %v5213 = vpop.f32.mrf.mxu0
        %v5214 = vadd.f32 %v5117, %v5213
        %v5215 = vpop.f32.mrf.mxu0
        %5216 = vmatprep.mubr.bf16.mxu0 0
        %5217 = vmatmul.mubr.bf16.gmra.mxu0 %v4862
        %v5218 = vpop.f32.mrf.mxu0
        %v5219 = vadd.f32 %v5122, %v5218
        %v5220 = vpop.f32.mrf.mxu0
        %v5221 = vpop.f32.mrf.mxu0
        %v5222 = vadd.f32 %v5125, %v5221
        %v5223 = vpop.f32.mrf.mxu0
        %5224 = vdwg.mxu0
        %v5225 = vadd.f32 %v4616, %v5163
        %v5226 = vadd.f32 %v4619, %v5166
        %v5227 = vadd.f32 %v4624, %v5171
        %v5228 = vadd.f32 %v4627, %v5174
        %v5229 = vadd.f32 %v4632, %v5179
        %v5230 = vadd.f32 %v4635, %v5182
        %v5231 = vadd.f32 %v4640, %v5187
        %v5232 = vadd.f32 %v4643, %v5190
        %v5233 = vadd.f32 %v4648, %v5195
        %v5234 = vadd.f32 %v4651, %v5198
        %v5235 = vadd.f32 %v4656, %v5203
        %v5236 = vadd.f32 %v4659, %v5206
        %v5237 = vadd.f32 %v4664, %v5211
        %v5238 = vadd.f32 %v4667, %v5214
        %v5239 = vadd.f32 %v4672, %v5219
        %v5240 = vadd.f32 %v4675, %v5222
        %v5241 = vld [vmem:[%s295] sm:$0xff]
        %v5242 = vld [vmem:[%s295 + $0x8] sm:$0xff]
        %v5243 = vld [vmem:[%s295 + $0x10] sm:$0xff]
        %v5244 = vld [vmem:[%s295 + $0x18] sm:$0xff]
        %v5245 = vld [vmem:[%s295 + $0x20] sm:$0xff]
        %v5246 = vld [vmem:[%s295 + $0x28] sm:$0xff]
        %v5247 = vld [vmem:[%s295 + $0x30] sm:$0xff]
        %v5248 = vld [vmem:[%s295 + $0x38] sm:$0xff]
        %v5249 = vld [vmem:[%s295 + $0x40] sm:$0xff]
        %v5250 = vld [vmem:[%s295 + $0x48] sm:$0xff]
        %v5251 = vld [vmem:[%s295 + $0x50] sm:$0xff]
        %v5252 = vld [vmem:[%s295 + $0x58] sm:$0xff]
        %v5253 = vld [vmem:[%s295 + $0x60] sm:$0xff]
        %v5254 = vld [vmem:[%s295 + $0x68] sm:$0xff]
        %v5255 = vld [vmem:[%s295 + $0x70] sm:$0xff]
        %v5256 = vld [vmem:[%s295 + $0x78] sm:$0xff]
        %v5257 = vld [vmem:[%s5] sm:$0x1]
        %v5259 = vlaneseq
        %v5260 = vshrl.u32 %v5259, 7
        %v5261 = vsub.s32 0, %v5260
        %v5262 = vrot.slane %v5257, %v5261
        %v5264 = vmul.f32 %v5225, %v5262
        %v5265 = vmul.f32 %v5226, %v5262
        %v5266 = vmul.f32 %v5227, %v5262
        %v5267 = vmul.f32 %v5228, %v5262
        %v5268 = vmul.f32 %v5229, %v5262
        %v5269 = vmul.f32 %v5230, %v5262
        %v5270 = vmul.f32 %v5231, %v5262
        %v5271 = vmul.f32 %v5232, %v5262
        %v5272 = vmul.f32 %v5233, %v5262
        %v5273 = vmul.f32 %v5234, %v5262
        %v5274 = vmul.f32 %v5235, %v5262
        %v5275 = vmul.f32 %v5236, %v5262
        %v5276 = vmul.f32 %v5237, %v5262
        %v5277 = vmul.f32 %v5238, %v5262
        %v5278 = vmul.f32 %v5239, %v5262
        %v5279 = vmul.f32 %v5240, %v5262
        %v5280 = vld [vmem:[%s6] sm:$0x1]
        %v5282 = vlaneseq
        %v5283 = vshrl.u32 %v5282, 7
        %v5284 = vsub.s32 0, %v5283
        %v5285 = vrot.slane %v5280, %v5284
        %v5287 = vadd.f32 %v5264, %v5285
        %v5288 = vadd.f32 %v5265, %v5285
        %v5289 = vadd.f32 %v5266, %v5285
        %v5290 = vadd.f32 %v5267, %v5285
        %v5291 = vadd.f32 %v5268, %v5285
        %v5292 = vadd.f32 %v5269, %v5285
        %v5293 = vadd.f32 %v5270, %v5285
        %v5294 = vadd.f32 %v5271, %v5285
        %v5295 = vadd.f32 %v5272, %v5285
        %v5296 = vadd.f32 %v5273, %v5285
        %v5297 = vadd.f32 %v5274, %v5285
        %v5298 = vadd.f32 %v5275, %v5285
        %v5299 = vadd.f32 %v5276, %v5285
        %v5300 = vadd.f32 %v5277, %v5285
        %v5301 = vadd.f32 %v5278, %v5285
        %v5302 = vadd.f32 %v5279, %v5285
        %v5303 = vadd.f32 %v5287, %v5241
        %v5304 = vadd.f32 %v5288, %v5242
        %v5305 = vadd.f32 %v5289, %v5243
        %v5306 = vadd.f32 %v5290, %v5244
        %v5307 = vadd.f32 %v5291, %v5245
        %v5308 = vadd.f32 %v5292, %v5246
        %v5309 = vadd.f32 %v5293, %v5247
        %v5310 = vadd.f32 %v5294, %v5248
        %v5311 = vadd.f32 %v5295, %v5249
        %v5312 = vadd.f32 %v5296, %v5250
        %v5313 = vadd.f32 %v5297, %v5251
        %v5314 = vadd.f32 %v5298, %v5252
        %v5315 = vadd.f32 %v5299, %v5253
        %v5316 = vadd.f32 %v5300, %v5254
        %v5317 = vadd.f32 %v5301, %v5255
        %v5318 = vadd.f32 %v5302, %v5256
        %v5319 = vmax.f32 %v5303, 0.0
        %v5320 = vmax.f32 %v5304, 0.0
        %v5321 = vmax.f32 %v5305, 0.0
        %v5322 = vmax.f32 %v5306, 0.0
        %v5323 = vmax.f32 %v5307, 0.0
        %v5324 = vmax.f32 %v5308, 0.0
        %v5325 = vmax.f32 %v5309, 0.0
        %v5326 = vmax.f32 %v5310, 0.0
        %v5327 = vmax.f32 %v5311, 0.0
        %v5328 = vmax.f32 %v5312, 0.0
        %v5329 = vmax.f32 %v5313, 0.0
        %v5330 = vmax.f32 %v5314, 0.0
        %v5331 = vmax.f32 %v5315, 0.0
        %v5332 = vmax.f32 %v5316, 0.0
        %v5333 = vmax.f32 %v5317, 0.0
        %v5334 = vmax.f32 %v5318, 0.0
        %5335 = vst [vmem:[%s285] sm:$0xff] %v5319
        %5336 = vst [vmem:[%s285 + $0x8] sm:$0xff] %v5320
        %5337 = vst [vmem:[%s285 + $0x10] sm:$0xff] %v5321
        %5338 = vst [vmem:[%s285 + $0x18] sm:$0xff] %v5322
        %5339 = vst [vmem:[%s285 + $0x20] sm:$0xff] %v5323
        %5340 = vst [vmem:[%s285 + $0x28] sm:$0xff] %v5324
        %5341 = vst [vmem:[%s285 + $0x30] sm:$0xff] %v5325
        %5342 = vst [vmem:[%s285 + $0x38] sm:$0xff] %v5326
        %5343 = vst [vmem:[%s285 + $0x40] sm:$0xff] %v5327
        %5344 = vst [vmem:[%s285 + $0x48] sm:$0xff] %v5328
        %5345 = vst [vmem:[%s285 + $0x50] sm:$0xff] %v5329
        %5346 = vst [vmem:[%s285 + $0x58] sm:$0xff] %v5330
        %5347 = vst [vmem:[%s285 + $0x60] sm:$0xff] %v5331
        %5348 = vst [vmem:[%s285 + $0x68] sm:$0xff] %v5332
        %5349 = vst [vmem:[%s285 + $0x70] sm:$0xff] %v5333
        %5350 = vst [vmem:[%s285 + $0x78] sm:$0xff] %v5334
        %s5351 = sand.u32 %s195, 1
        %s5352 = scalar_lea.sflag [#allocation6], %s5351
        %s5353 = sand.u32 %s195, 1
        %s5354 = smul.addr %s5353, 128
        %s5355 = scalar_lea.vmem [#allocation5], %s5354
        // Predicated region
        $region73: #{basic_block_forward.1} parent=47 // pred_check
          %p5356 = pneg %p205
        $region74: #{basic_block_forward.1} parent=47 // pred_check_branch
          %5358 = sbr.rel (%p5356) target = $region76
        $region75: #{basic_block_forward.1} parent=47 // pred_region
          %s5359 = smul.u32 8, %s26
          %s5361 = ssub.s32 2048, 2048
          %5362 = vsyncadd %s5352, %s5361
          %s5363 = smul.addr %s5359, 2
          %s5364 = smul.addr %s25, 32
          %s5365 = sadd.s32 %s5363, %s5364
          %s5366 = smul.addr %s5365, 128
          %s5367 = scalar_lea.hbm %s7, %s5366
          %s5368 = sshll.u32 %s5355, 4
          %s5369 = int_to_ptr.vmem [resolvable:$true] %s5368
          %5374 = dma.vmem_to_hbm [thread:$0]  %s5369, 2048, %s5367, %s5352, 128, 128, 8
        $region76: #{basic_block_forward.1} parent=47 // pred_fallthru
          _
      $region48: #{basic_block_forward.1} parent=5 // pred_fallthru
        _
      %p5375 = scmp.le.s32.totalorder 2, %s16
      // Predicated region
      $region77: #{basic_block_forward.1} parent=5 // pred_check
        %p5376 = pneg %p5375
      $region78: #{basic_block_forward.1} parent=5 // pred_check_branch
        %5378 = sbr.rel (%p5376) target = $region80
      $region79: #{basic_block_forward.1} parent=5 // pred_region
        %s5379 = ssub.s32 %s16, 2
        // Predicated region
        $region81: #{basic_block_forward.1} parent=79 // pred_check
          %p5380 = pneg %p211
        $region82: #{basic_block_forward.1} parent=79 // pred_check_branch
          %5382 = sbr.rel (%p5380) target = $region84
        $region83: #{basic_block_forward.1} parent=79 // pred_region
          %s5383 = sand.u32 %s196, 1
          %s5384 = scalar_lea.sflag [#allocation6], %s5383
          %s5385 = sand.u32 %s196, 1
          %s5386 = smul.addr %s5385, 128
          %s5387 = scalar_lea.vmem [#allocation5], %s5386
          %5388 = dma.done %s5384, 2048
        $region84: #{basic_block_forward.1} parent=79 // pred_fallthru
          _
      $region80: #{basic_block_forward.1} parent=5 // pred_fallthru
        _
    $region6: #{basic_block_forward.1} parent=1 // loop_footer
      %s20 = sadd.s32 1, %s16
    $region7: #{basic_block_forward.1} parent=1 // loop_footer_branch
      %15 = sbr.rel target = $region3
    $region8: #{basic_block_forward.1} parent=1 // loop_exit
      _
    %5389 = vsyncpa [#allocation6], 1
    %s5390 = scalar_lea.sflag [#allocation6], 1
    %5391 = vsyncpa %s5390, 1

</llo_original>
